<compile_context>
chip_gen: v7x
topology: tpu7x:2x2x1
jax: 0.10.0
libtpu: 0.0.40
codegen_flags: <defaults>
</compile_context>

<pallas_src>
import functools

import jax
import jax.numpy as jnp
from jax.experimental import pallas as pl
from jax.experimental.pallas import tpu as pltpu

# ---- model hyper-params (small, consistent with the module's forward) ----
BATCH = 2
SEQ = 8
D_MODEL = 32
N_HEAD = 4
D_FF = 64
NUM_LAYERS = 3
EPS = 1e-5
NEG_INF = -1e9

# ---- packed parameter-slab row layout: one lane-aligned (rows, 128) buffer ----
_SLAB_LANES = 128
_R_WQKV = 0                      # (D, 3D)   rows   0:32 , lanes 0:96
_R_WO = _R_WQKV + D_MODEL        # (D, D)    rows  32:64 , lanes 0:32
_R_W1 = _R_WO + D_MODEL          # (D, Dff)  rows  64:96 , lanes 0:64
_R_W2 = _R_W1 + D_MODEL          # (Dff, D)  rows 96:160 , lanes 0:32
_R_VEC = _R_W2 + D_FF            # 9 single-row vectors start here (row 160):
#   +0 bqkv, +1 bo, +2 b1, +3 b2, +4 ln1g, +5 ln1b, +6 ln2g, +7 ln2b, +8 pad_add
_N_VEC_ROWS = 9
_SLAB_ROWS = ((_R_VEC + _N_VEC_ROWS + 7) // 8) * 8   # 176 (sublane aligned)


def _layer_norm(x, g, b):
    mu = jnp.mean(x, axis=-1, keepdims=True)
    var = jnp.mean((x - mu) ** 2, axis=-1, keepdims=True)
    return (x - mu) * jax.lax.rsqrt(var + EPS) * g + b


def encoder_stack_kernel(x_ref, p_ref, o_ref, *, num_layers, n_head, seq):
    """Full encoder stack; batch flattened into the row (sublane) axis."""
    x = x_ref[...]                         # (N, D)
    N, D = x.shape
    dh = D // n_head
    dff = D_FF

    # ---- carve parameters out of the packed slab (static slices; one DMA) ----
    wqkv = p_ref[_R_WQKV:_R_WQKV + D, 0:3 * D]   # (D, 3D); 1/sqrt(dh) folded into Q cols
    wo = p_ref[_R_WO:_R_WO + D, 0:D]
    w1 = p_ref[_R_W1:_R_W1 + D, 0:dff]
    w2 = p_ref[_R_W2:_R_W2 + dff, 0:D]
    bqkv = p_ref[_R_VEC + 0:_R_VEC + 1, 0:3 * D]
    bo = p_ref[_R_VEC + 1:_R_VEC + 2, 0:D]
    b1 = p_ref[_R_VEC + 2:_R_VEC + 3, 0:dff]
    b2 = p_ref[_R_VEC + 3:_R_VEC + 4, 0:D]
    ln1g = p_ref[_R_VEC + 4:_R_VEC + 5, 0:D]
    ln1b = p_ref[_R_VEC + 5:_R_VEC + 6, 0:D]
    ln2g = p_ref[_R_VEC + 6:_R_VEC + 7, 0:D]
    ln2b = p_ref[_R_VEC + 7:_R_VEC + 8, 0:D]
    pad_add = p_ref[_R_VEC + 8:_R_VEC + 9, 0:N]  # (1, N) additive key-padding row

    # ---- hoist row broadcasts out of the unrolled layer loop (no CSE of b.i.d.) ----
    bqkv_b = jnp.broadcast_to(bqkv, (N, 3 * D))
    bo_b = jnp.broadcast_to(bo, (N, D))
    b1_b = jnp.broadcast_to(b1, (N, dff))
    b2_b = jnp.broadcast_to(b2, (N, D))
    ln1g_b = jnp.broadcast_to(ln1g, (N, D))
    ln1b_b = jnp.broadcast_to(ln1b, (N, D))
    ln2g_b = jnp.broadcast_to(ln2g, (N, D))
    ln2b_b = jnp.broadcast_to(ln2b, (N, D))

    # ---- block-diagonal (per-batch) + key-padding additive mask, built in-kernel ----
    row_idx = jax.lax.broadcasted_iota(jnp.int32, (N, N), 0)
    col_idx = jax.lax.broadcasted_iota(jnp.int32, (N, N), 1)
    if (seq & (seq - 1)) == 0:            # power-of-two seq: shift, no int vector divide
        sh = int(seq).bit_length() - 1
        same_batch = (row_idx >> sh) == (col_idx >> sh)
    else:
        same_batch = (row_idx // seq) == (col_idx // seq)
    mask = jnp.where(same_batch, 0.0, NEG_INF).astype(jnp.float32) + pad_add   # (N, N)

    def to_heads(mat2d):                  # (N, H*dh) -> (H, N, dh); cheap lane slices + stack
        return jnp.stack([mat2d[:, h * dh:(h + 1) * dh] for h in range(n_head)], axis=0)

    # copy.deepcopy semantics: all layers share the same parameters.
    # (static unroll is fine at 3 layers; use lax.fori_loop for deep stacks)
    for _ in range(num_layers):
        # fused Q|K|V projection: one MXU push with 3D output lanes
        qkv = jnp.dot(x, wqkv, preferred_element_type=jnp.float32) + bqkv_b    # (N, 3D)
        q3 = to_heads(qkv[:, 0:D])              # (H, N, dh), scale pre-folded
        k3 = to_heads(qkv[:, D:2 * D])
        v3 = to_heads(qkv[:, 2 * D:3 * D])

        # head-batched attention: 2 MXU contractions + 1 batched softmax per layer
        s = jnp.einsum('hqd,hkd->hqk', q3, k3, preferred_element_type=jnp.float32)
        s = s + mask[None, :, :]
        s = s - jnp.max(s, axis=-1, keepdims=True)
        p = jnp.exp(s)
        denom = jnp.sum(p, axis=-1, keepdims=True)
        p = p * pl.reciprocal(denom, approx=False)   # exact reciprocal (keeps 1e-4 tolerance)
        ctx3 = jnp.einsum('hqk,hkd->hqd', p, v3, preferred_element_type=jnp.float32)
        ctx = jnp.concatenate([ctx3[h] for h in range(n_head)], axis=-1)       # (N, D)

        attn_out = jnp.dot(ctx, wo, preferred_element_type=jnp.float32) + bo_b
        # post-norm residual (PyTorch nn.TransformerEncoderLayer default)
        h1 = _layer_norm(x + attn_out, ln1g_b, ln1b_b)

        # feed-forward
        ff = jnp.dot(h1, w1, preferred_element_type=jnp.float32) + b1_b
        ff = jnp.maximum(ff, 0.0)
        ff = jnp.dot(ff, w2, preferred_element_type=jnp.float32) + b2_b
        x = _layer_norm(h1 + ff, ln2g_b, ln2b_b)

    o_ref[...] = x


def _pack_param_slab(fused_params, pad_add_row):
    """Pack the 12 fused params + key-padding row into one (176,128) f32 slab."""
    (wqkv, bqkv, wo, bo, ln1g, ln1b, w1, b1, w2, b2, ln2g, ln2b) = fused_params
    D, dff = D_MODEL, D_FF
    slab = jnp.zeros((_SLAB_ROWS, _SLAB_LANES), jnp.float32)
    slab = slab.at[_R_WQKV:_R_WQKV + D, 0:3 * D].set(wqkv)
    slab = slab.at[_R_WO:_R_WO + D, 0:D].set(wo)
    slab = slab.at[_R_W1:_R_W1 + D, 0:dff].set(w1)
    slab = slab.at[_R_W2:_R_W2 + dff, 0:D].set(w2)
    slab = slab.at[_R_VEC + 0:_R_VEC + 1, 0:3 * D].set(bqkv)
    slab = slab.at[_R_VEC + 1:_R_VEC + 2, 0:D].set(bo)
    slab = slab.at[_R_VEC + 2:_R_VEC + 3, 0:dff].set(b1)
    slab = slab.at[_R_VEC + 3:_R_VEC + 4, 0:D].set(b2)
    slab = slab.at[_R_VEC + 4:_R_VEC + 5, 0:D].set(ln1g)
    slab = slab.at[_R_VEC + 5:_R_VEC + 6, 0:D].set(ln1b)
    slab = slab.at[_R_VEC + 6:_R_VEC + 7, 0:D].set(ln2g)
    slab = slab.at[_R_VEC + 7:_R_VEC + 8, 0:D].set(ln2b)
    slab = slab.at[_R_VEC + 8:_R_VEC + 9, 0:pad_add_row.shape[-1]].set(pad_add_row)
    return slab


def transformer_encoder(src, key_padding_mask, layer_params, num_layers):
    """Equivalent of TransformerEncoder.forward.

    src: (B, S, D) float32
    key_padding_mask: (B, S) bool, True = padded key position (or None)
    layer_params: single param list shared by all layers (copy.deepcopy semantics)
    """
    B, S, D = src.shape
    (wq, bq, wk, bk, wv, bv, wo, bo,
     ln1g, ln1b, w1, b1, w2, b2, ln2g, ln2b) = layer_params

    dh = D // N_HEAD
    scale = 1.0 / (dh ** 0.5)
    # Fuse QKV projection; fold the attention scale into the Q columns + bias.
    wqkv = jnp.concatenate([wq * scale, wk, wv], axis=1)    # (D, 3D)
    bqkv = jnp.concatenate([bq * scale, bk, bv], axis=1)    # (1, 3D)
    fused = (wqkv, bqkv, wo, bo, ln1g, ln1b, w1, b1, w2, b2, ln2g, ln2b)

    N = B * S
    if key_padding_mask is None:
        pad_add = jnp.zeros((1, N), jnp.float32)
    else:
        pad_add = jnp.where(key_padding_mask.reshape(1, N),
                            NEG_INF, 0.0).astype(jnp.float32)

    slab = _pack_param_slab(fused, pad_add)
    x_flat = src.reshape(N, D)

    kernel = functools.partial(encoder_stack_kernel,
                               num_layers=num_layers, n_head=N_HEAD, seq=S)

    out = pl.pallas_call(
        kernel,
        out_shape=jax.ShapeDtypeStruct((N, D), jnp.float32),
        grid=(1,),
        in_specs=[pl.BlockSpec((N, D), lambda i: (0, 0)),
                  pl.BlockSpec((_SLAB_ROWS, _SLAB_LANES), lambda i: (0, 0))],
        out_specs=pl.BlockSpec((N, D), lambda i: (0, 0)),
        compiler_params=pltpu.CompilerParams(
            dimension_semantics=("arbitrary",)),
    )(x_flat, slab)

    return out.reshape(B, S, D)


# ---------------- pure-JAX reference (same math, unfused params) ----------------
def _ref_layer(x, add_mask, params):
    (wq, bq, wk, bk, wv, bv, wo, bo,
     ln1g, ln1b, w1, b1, w2, b2, ln2g, ln2b) = params
    B, S, D = x.shape
    H, dh = N_HEAD, D // N_HEAD
    q = (x @ wq + bq).reshape(B, S, H, dh).transpose(0, 2, 1, 3)
    k = (x @ wk + bk).reshape(B, S, H, dh).transpose(0, 2, 1, 3)
    v = (x @ wv + bv).reshape(B, S, H, dh).transpose(0, 2, 1, 3)
    s = jnp.einsum('bhqd,bhkd->bhqk', q, k) / (dh ** 0.5)
    s = s + add_mask[:, None, :, :]
    p = jax.nn.softmax(s, axis=-1)
    ctx = jnp.einsum('bhqk,bhkd->bhqd', p, v).transpose(0, 2, 1, 3).reshape(B, S, D)
    attn_out = ctx @ wo + bo
    h1 = _layer_norm(x + attn_out, ln1g, ln1b)
    ff = jnp.maximum(h1 @ w1 + b1, 0.0) @ w2 + b2
    return _layer_norm(h1 + ff, ln2g, ln2b)


def _ref_encoder(src, key_padding_mask, params, num_layers):
    B, S, _ = src.shape
    add_mask = jnp.where(key_padding_mask, NEG_INF, 0.0).astype(jnp.float32).reshape(B, 1, S)
    out = src
    for _ in range(num_layers):
        out = _ref_layer(out, add_mask, params)
    return out


def init_layer_params(key):
    ks = jax.random.split(key, 6)
    std = 0.02
    wq = jax.random.normal(ks[0], (D_MODEL, D_MODEL), jnp.float32) * std
    wk = jax.random.normal(ks[1], (D_MODEL, D_MODEL), jnp.float32) * std
    wv = jax.random.normal(ks[2], (D_MODEL, D_MODEL), jnp.float32) * std
    wo = jax.random.normal(ks[3], (D_MODEL, D_MODEL), jnp.float32) * std
    w1 = jax.random.normal(ks[4], (D_MODEL, D_FF), jnp.float32) * std
    w2 = jax.random.normal(ks[5], (D_FF, D_MODEL), jnp.float32) * std
    bq = jnp.zeros((1, D_MODEL), jnp.float32)
    bk = jnp.zeros((1, D_MODEL), jnp.float32)
    bv = jnp.zeros((1, D_MODEL), jnp.float32)
    bo = jnp.zeros((1, D_MODEL), jnp.float32)
    b1 = jnp.zeros((1, D_FF), jnp.float32)
    b2 = jnp.zeros((1, D_MODEL), jnp.float32)
    ln1g = jnp.ones((1, D_MODEL), jnp.float32)
    ln1b = jnp.zeros((1, D_MODEL), jnp.float32)
    ln2g = jnp.ones((1, D_MODEL), jnp.float32)
    ln2b = jnp.zeros((1, D_MODEL), jnp.float32)
    return [wq, bq, wk, bk, wv, bv, wo, bo,
            ln1g, ln1b, w1, b1, w2, b2, ln2g, ln2b]


if __name__ == "__main__":
    key = jax.random.PRNGKey(0)
    k_src, k_par = jax.random.split(key)

    src = jax.random.normal(k_src, (BATCH, SEQ, D_MODEL), jnp.float32)
    # pad the last two key positions of batch element 1
    key_padding_mask = jnp.zeros((BATCH, SEQ), bool).at[1, -2:].set(True)

    # One param set shared by all layers (copy.deepcopy of the same module).
    layer_params = init_layer_params(k_par)

    fwd = jax.jit(functools.partial(transformer_encoder, num_layers=NUM_LAYERS))
    out = fwd(src, key_padding_mask, layer_params)
    out = jax.block_until_ready(out)

    ref = _ref_encoder(src, key_padding_mask, layer_params, NUM_LAYERS)
    assert out.shape == (BATCH, SEQ, D_MODEL)
    assert jnp.allclose(out, ref, atol=1e-4, rtol=1e-4), float(jnp.max(jnp.abs(out - ref)))

    print("KERNEL_OK")
</pallas_src>

<mosaic_0001>
module attributes {stable_mosaic.version = 11 : i64} {
  func.func @encoder_stack_kernel(%arg0: i32, %arg1: memref<16x32xf32, #tpu.memory_space<vmem>>, %arg2: memref<176x128xf32, #tpu.memory_space<vmem>>, %arg3: memref<16x32xf32, #tpu.memory_space<vmem>>) attributes {dimension_semantics = [#tpu.dimension_semantics<arbitrary>], iteration_bounds = array<i64: 1>, scalar_prefetch = 0 : i64, scratch_operands = 0 : i64, tpu.core_type = #tpu.core_type<tc>, window_params = [{pipeline_mode = #tpu.pipeline_mode<synchronous>, transform_indices = @transform_0, window_bounds = array<i64: 16, 32>}, {pipeline_mode = #tpu.pipeline_mode<synchronous>, transform_indices = @transform_1, window_bounds = array<i64: 176, 128>}, {pipeline_mode = #tpu.pipeline_mode<synchronous>, transform_indices = @transform_2, window_bounds = array<i64: 16, 32>}]} {
    %c0 = arith.constant 0 : index
    %c0_0 = arith.constant 0 : index
    %0 = vector.load %arg1[%c0, %c0_0] : memref<16x32xf32, #tpu.memory_space<vmem>>, vector<16x32xf32>
    %c0_1 = arith.constant 0 : index
    %c0_2 = arith.constant 0 : index
    %1 = vector.load %arg2[%c0_1, %c0_2] : memref<176x128xf32, #tpu.memory_space<vmem>>, vector<32x96xf32>
    %c32 = arith.constant 32 : index
    %c0_3 = arith.constant 0 : index
    %2 = vector.load %arg2[%c32, %c0_3] : memref<176x128xf32, #tpu.memory_space<vmem>>, vector<32x32xf32>
    %c64 = arith.constant 64 : index
    %c0_4 = arith.constant 0 : index
    %3 = vector.load %arg2[%c64, %c0_4] : memref<176x128xf32, #tpu.memory_space<vmem>>, vector<32x64xf32>
    %c96 = arith.constant 96 : index
    %c0_5 = arith.constant 0 : index
    %4 = vector.load %arg2[%c96, %c0_5] : memref<176x128xf32, #tpu.memory_space<vmem>>, vector<64x32xf32>
    %c160 = arith.constant 160 : index
    %c0_6 = arith.constant 0 : index
    %5 = vector.load %arg2[%c160, %c0_6] : memref<176x128xf32, #tpu.memory_space<vmem>>, vector<1x96xf32>
    %c161 = arith.constant 161 : index
    %c0_7 = arith.constant 0 : index
    %6 = vector.load %arg2[%c161, %c0_7] : memref<176x128xf32, #tpu.memory_space<vmem>>, vector<1x32xf32>
    %c162 = arith.constant 162 : index
    %c0_8 = arith.constant 0 : index
    %7 = vector.load %arg2[%c162, %c0_8] : memref<176x128xf32, #tpu.memory_space<vmem>>, vector<1x64xf32>
    %c163 = arith.constant 163 : index
    %c0_9 = arith.constant 0 : index
    %8 = vector.load %arg2[%c163, %c0_9] : memref<176x128xf32, #tpu.memory_space<vmem>>, vector<1x32xf32>
    %c164 = arith.constant 164 : index
    %c0_10 = arith.constant 0 : index
    %9 = vector.load %arg2[%c164, %c0_10] : memref<176x128xf32, #tpu.memory_space<vmem>>, vector<1x32xf32>
    %c165 = arith.constant 165 : index
    %c0_11 = arith.constant 0 : index
    %10 = vector.load %arg2[%c165, %c0_11] : memref<176x128xf32, #tpu.memory_space<vmem>>, vector<1x32xf32>
    %c166 = arith.constant 166 : index
    %c0_12 = arith.constant 0 : index
    %11 = vector.load %arg2[%c166, %c0_12] : memref<176x128xf32, #tpu.memory_space<vmem>>, vector<1x32xf32>
    %c167 = arith.constant 167 : index
    %c0_13 = arith.constant 0 : index
    %12 = vector.load %arg2[%c167, %c0_13] : memref<176x128xf32, #tpu.memory_space<vmem>>, vector<1x32xf32>
    %c168 = arith.constant 168 : index
    %c0_14 = arith.constant 0 : index
    %13 = vector.load %arg2[%c168, %c0_14] : memref<176x128xf32, #tpu.memory_space<vmem>>, vector<1x16xf32>
    %14 = vector.shape_cast %5 : vector<1x96xf32> to vector<1x96xf32>
    %15 = vector.broadcast %14 : vector<1x96xf32> to vector<16x96xf32>
    %16 = vector.shape_cast %6 : vector<1x32xf32> to vector<1x32xf32>
    %17 = vector.broadcast %16 : vector<1x32xf32> to vector<16x32xf32>
    %18 = vector.shape_cast %7 : vector<1x64xf32> to vector<1x64xf32>
    %19 = vector.broadcast %18 : vector<1x64xf32> to vector<16x64xf32>
    %20 = vector.shape_cast %8 : vector<1x32xf32> to vector<1x32xf32>
    %21 = vector.broadcast %20 : vector<1x32xf32> to vector<16x32xf32>
    %22 = vector.shape_cast %9 : vector<1x32xf32> to vector<1x32xf32>
    %23 = vector.broadcast %22 : vector<1x32xf32> to vector<16x32xf32>
    %24 = vector.shape_cast %10 : vector<1x32xf32> to vector<1x32xf32>
    %25 = vector.broadcast %24 : vector<1x32xf32> to vector<16x32xf32>
    %26 = vector.shape_cast %11 : vector<1x32xf32> to vector<1x32xf32>
    %27 = vector.broadcast %26 : vector<1x32xf32> to vector<16x32xf32>
    %28 = vector.shape_cast %12 : vector<1x32xf32> to vector<1x32xf32>
    %29 = vector.broadcast %28 : vector<1x32xf32> to vector<16x32xf32>
    %30 = tpu.iota {dimensions = array<i32: 0>} : vector<16x16xi32>
    %31 = tpu.iota {dimensions = array<i32: 1>} : vector<16x16xi32>
    %c3_i32 = arith.constant 3 : i32
    %32 = vector.broadcast %c3_i32 : i32 to vector<16x16xi32>
    %33 = arith.shrsi %30, %32 : vector<16x16xi32>
    %c3_i32_15 = arith.constant 3 : i32
    %34 = vector.broadcast %c3_i32_15 : i32 to vector<16x16xi32>
    %35 = arith.shrsi %31, %34 : vector<16x16xi32>
    %36 = arith.cmpi eq, %33, %35 : vector<16x16xi32>
    %cst = arith.constant 0.000000e+00 : f32
    %cst_16 = arith.constant -1.000000e+09 : f32
    %37 = vector.broadcast %cst : f32 to vector<16x16xf32>
    %38 = vector.broadcast %cst_16 : f32 to vector<16x16xf32>
    %39 = arith.select %36, %37, %38 : vector<16x16xi1>, vector<16x16xf32>
    %40 = vector.broadcast %13 : vector<1x16xf32> to vector<16x16xf32>
    %41 = arith.addf %39, %40 : vector<16x16xf32>
    %cst_17 = arith.constant dense<0.000000e+00> : vector<16x96xf32>
    %42 = tpu.matmul %0, %1, %cst_17 {dimension_numbers = #tpu.dot_dimension_numbers<[1], [0], [0], [1], [0, 0, 1, 1], [], []>} : vector<16x32xf32>, vector<32x96xf32>, vector<16x96xf32> -> vector<16x96xf32>
    %43 = arith.addf %42, %15 : vector<16x96xf32>
    %44 = vector.extract_strided_slice %43 {offsets = [0, 0], sizes = [16, 32], strides = [1, 1]} : vector<16x96xf32> to vector<16x32xf32>
    %45 = vector.extract_strided_slice %44 {offsets = [0, 0], sizes = [16, 8], strides = [1, 1]} : vector<16x32xf32> to vector<16x8xf32>
    %46 = vector.extract_strided_slice %44 {offsets = [0, 8], sizes = [16, 8], strides = [1, 1]} : vector<16x32xf32> to vector<16x8xf32>
    %47 = vector.extract_strided_slice %44 {offsets = [0, 16], sizes = [16, 8], strides = [1, 1]} : vector<16x32xf32> to vector<16x8xf32>
    %48 = vector.extract_strided_slice %44 {offsets = [0, 24], sizes = [16, 8], strides = [1, 1]} : vector<16x32xf32> to vector<16x8xf32>
    %49 = vector.shape_cast %45 : vector<16x8xf32> to vector<1x16x8xf32>
    %50 = vector.shape_cast %46 : vector<16x8xf32> to vector<1x16x8xf32>
    %51 = vector.shape_cast %47 : vector<16x8xf32> to vector<1x16x8xf32>
    %52 = vector.shape_cast %48 : vector<16x8xf32> to vector<1x16x8xf32>
    %53 = tpu.concatenate %49, %50, %51, %52 in 0 : vector<1x16x8xf32>, vector<1x16x8xf32>, vector<1x16x8xf32>, vector<1x16x8xf32> -> vector<4x16x8xf32>
    %54 = vector.extract_strided_slice %43 {offsets = [0, 32], sizes = [16, 32], strides = [1, 1]} : vector<16x96xf32> to vector<16x32xf32>
    %55 = vector.extract_strided_slice %54 {offsets = [0, 0], sizes = [16, 8], strides = [1, 1]} : vector<16x32xf32> to vector<16x8xf32>
    %56 = vector.extract_strided_slice %54 {offsets = [0, 8], sizes = [16, 8], strides = [1, 1]} : vector<16x32xf32> to vector<16x8xf32>
    %57 = vector.extract_strided_slice %54 {offsets = [0, 16], sizes = [16, 8], strides = [1, 1]} : vector<16x32xf32> to vector<16x8xf32>
    %58 = vector.extract_strided_slice %54 {offsets = [0, 24], sizes = [16, 8], strides = [1, 1]} : vector<16x32xf32> to vector<16x8xf32>
    %59 = vector.shape_cast %55 : vector<16x8xf32> to vector<1x16x8xf32>
    %60 = vector.shape_cast %56 : vector<16x8xf32> to vector<1x16x8xf32>
    %61 = vector.shape_cast %57 : vector<16x8xf32> to vector<1x16x8xf32>
    %62 = vector.shape_cast %58 : vector<16x8xf32> to vector<1x16x8xf32>
    %63 = tpu.concatenate %59, %60, %61, %62 in 0 : vector<1x16x8xf32>, vector<1x16x8xf32>, vector<1x16x8xf32>, vector<1x16x8xf32> -> vector<4x16x8xf32>
    %64 = vector.extract_strided_slice %43 {offsets = [0, 64], sizes = [16, 32], strides = [1, 1]} : vector<16x96xf32> to vector<16x32xf32>
    %65 = vector.extract_strided_slice %64 {offsets = [0, 0], sizes = [16, 8], strides = [1, 1]} : vector<16x32xf32> to vector<16x8xf32>
    %66 = vector.extract_strided_slice %64 {offsets = [0, 8], sizes = [16, 8], strides = [1, 1]} : vector<16x32xf32> to vector<16x8xf32>
    %67 = vector.extract_strided_slice %64 {offsets = [0, 16], sizes = [16, 8], strides = [1, 1]} : vector<16x32xf32> to vector<16x8xf32>
    %68 = vector.extract_strided_slice %64 {offsets = [0, 24], sizes = [16, 8], strides = [1, 1]} : vector<16x32xf32> to vector<16x8xf32>
    %69 = vector.shape_cast %65 : vector<16x8xf32> to vector<1x16x8xf32>
    %70 = vector.shape_cast %66 : vector<16x8xf32> to vector<1x16x8xf32>
    %71 = vector.shape_cast %67 : vector<16x8xf32> to vector<1x16x8xf32>
    %72 = vector.shape_cast %68 : vector<16x8xf32> to vector<1x16x8xf32>
    %73 = tpu.concatenate %69, %70, %71, %72 in 0 : vector<1x16x8xf32>, vector<1x16x8xf32>, vector<1x16x8xf32>, vector<1x16x8xf32> -> vector<4x16x8xf32>
    "tpu.trace_start"() <{level = 10 : i32, message = "hqd,hkd->hqk"}> : () -> ()
    %cst_18 = arith.constant dense<0.000000e+00> : vector<4x16x16xf32>
    %74 = tpu.matmul %53, %63, %cst_18 {dimension_numbers = #tpu.dot_dimension_numbers<[2], [2], [1], [1], [0, 0, 0, 1, 1, 1], [0], [0]>} : vector<4x16x8xf32>, vector<4x16x8xf32>, vector<4x16x16xf32> -> vector<4x16x16xf32>
    "tpu.trace_stop"() : () -> ()
    %75 = vector.shape_cast %41 : vector<16x16xf32> to vector<1x16x16xf32>
    %76 = vector.broadcast %75 : vector<1x16x16xf32> to vector<4x16x16xf32>
    %77 = arith.addf %74, %76 : vector<4x16x16xf32>
    %cst_19 = arith.constant dense<0xFF800000> : vector<4x16xf32>
    %78 = vector.multi_reduction <maximumf>, %77, %cst_19 [2] : vector<4x16x16xf32> to vector<4x16xf32>
    %79 = vector.shape_cast %78 : vector<4x16xf32> to vector<4x16x1xf32>
    %80 = vector.broadcast %79 : vector<4x16x1xf32> to vector<4x16x16xf32>
    %81 = arith.subf %77, %80 : vector<4x16x16xf32>
    %82 = math.exp %81 : vector<4x16x16xf32>
    %cst_20 = arith.constant dense<0.000000e+00> : vector<4x16xf32>
    %83 = vector.multi_reduction <add>, %82, %cst_20 [2] : vector<4x16x16xf32> to vector<4x16xf32>
    %84 = vector.shape_cast %83 : vector<4x16xf32> to vector<4x16x1xf32>
    %85 = tpu.reciprocal %84 : vector<4x16x1xf32> -> vector<4x16x1xf32>
    %86 = vector.broadcast %85 : vector<4x16x1xf32> to vector<4x16x16xf32>
    %87 = arith.mulf %82, %86 : vector<4x16x16xf32>
    "tpu.trace_start"() <{level = 10 : i32, message = "hqk,hkd->hqd"}> : () -> ()
    %cst_21 = arith.constant dense<0.000000e+00> : vector<4x16x8xf32>
    %88 = tpu.matmul %87, %73, %cst_21 {dimension_numbers = #tpu.dot_dimension_numbers<[2], [1], [1], [2], [0, 0, 0, 1, 1, 2], [0], [0]>} : vector<4x16x16xf32>, vector<4x16x8xf32>, vector<4x16x8xf32> -> vector<4x16x8xf32>
    "tpu.trace_stop"() : () -> ()
    %89 = vector.extract_strided_slice %88 {offsets = [0, 0, 0], sizes = [1, 16, 8], strides = [1, 1, 1]} : vector<4x16x8xf32> to vector<1x16x8xf32>
    %90 = vector.shape_cast %89 : vector<1x16x8xf32> to vector<16x8xf32>
    %91 = vector.extract_strided_slice %88 {offsets = [1, 0, 0], sizes = [1, 16, 8], strides = [1, 1, 1]} : vector<4x16x8xf32> to vector<1x16x8xf32>
    %92 = vector.shape_cast %91 : vector<1x16x8xf32> to vector<16x8xf32>
    %93 = vector.extract_strided_slice %88 {offsets = [2, 0, 0], sizes = [1, 16, 8], strides = [1, 1, 1]} : vector<4x16x8xf32> to vector<1x16x8xf32>
    %94 = vector.shape_cast %93 : vector<1x16x8xf32> to vector<16x8xf32>
    %95 = vector.extract_strided_slice %88 {offsets = [3, 0, 0], sizes = [1, 16, 8], strides = [1, 1, 1]} : vector<4x16x8xf32> to vector<1x16x8xf32>
    %96 = vector.shape_cast %95 : vector<1x16x8xf32> to vector<16x8xf32>
    %97 = tpu.concatenate %90, %92, %94, %96 in 1 : vector<16x8xf32>, vector<16x8xf32>, vector<16x8xf32>, vector<16x8xf32> -> vector<16x32xf32>
    %cst_22 = arith.constant dense<0.000000e+00> : vector<16x32xf32>
    %98 = tpu.matmul %97, %2, %cst_22 {dimension_numbers = #tpu.dot_dimension_numbers<[1], [0], [0], [1], [0, 0, 1, 1], [], []>} : vector<16x32xf32>, vector<32x32xf32>, vector<16x32xf32> -> vector<16x32xf32>
    %99 = arith.addf %98, %17 : vector<16x32xf32>
    %100 = arith.addf %0, %99 : vector<16x32xf32>
    %cst_23 = arith.constant dense<0.000000e+00> : vector<16xf32>
    %101 = vector.multi_reduction <add>, %100, %cst_23 [1] : vector<16x32xf32> to vector<16xf32>
    %102 = vector.shape_cast %101 : vector<16xf32> to vector<16x1xf32>
    %cst_24 = arith.constant 3.200000e+01 : f32
    %103 = vector.broadcast %cst_24 : f32 to vector<16x1xf32>
    %104 = arith.divf %102, %103 : vector<16x1xf32>
    %105 = vector.broadcast %104 : vector<16x1xf32> to vector<16x32xf32>
    %106 = arith.subf %100, %105 : vector<16x32xf32>
    %107 = arith.mulf %106, %106 : vector<16x32xf32>
    %cst_25 = arith.constant dense<0.000000e+00> : vector<16xf32>
    %108 = vector.multi_reduction <add>, %107, %cst_25 [1] : vector<16x32xf32> to vector<16xf32>
    %109 = vector.shape_cast %108 : vector<16xf32> to vector<16x1xf32>
    %cst_26 = arith.constant 3.200000e+01 : f32
    %110 = vector.broadcast %cst_26 : f32 to vector<16x1xf32>
    %111 = arith.divf %109, %110 : vector<16x1xf32>
    %112 = vector.broadcast %104 : vector<16x1xf32> to vector<16x32xf32>
    %113 = arith.subf %100, %112 : vector<16x32xf32>
    %cst_27 = arith.constant 9.99999974E-6 : f32
    %114 = vector.broadcast %cst_27 : f32 to vector<16x1xf32>
    %115 = arith.addf %111, %114 : vector<16x1xf32>
    %116 = math.rsqrt %115 : vector<16x1xf32>
    %117 = vector.broadcast %116 : vector<16x1xf32> to vector<16x32xf32>
    %118 = arith.mulf %113, %117 : vector<16x32xf32>
    %119 = arith.mulf %118, %23 : vector<16x32xf32>
    %120 = arith.addf %119, %25 : vector<16x32xf32>
    %cst_28 = arith.constant dense<0.000000e+00> : vector<16x64xf32>
    %121 = tpu.matmul %120, %3, %cst_28 {dimension_numbers = #tpu.dot_dimension_numbers<[1], [0], [0], [1], [0, 0, 1, 1], [], []>} : vector<16x32xf32>, vector<32x64xf32>, vector<16x64xf32> -> vector<16x64xf32>
    %122 = arith.addf %121, %19 : vector<16x64xf32>
    %cst_29 = arith.constant 0.000000e+00 : f32
    %123 = vector.broadcast %cst_29 : f32 to vector<16x64xf32>
    %124 = arith.maximumf %122, %123 : vector<16x64xf32>
    %cst_30 = arith.constant dense<0.000000e+00> : vector<16x32xf32>
    %125 = tpu.matmul %124, %4, %cst_30 {dimension_numbers = #tpu.dot_dimension_numbers<[1], [0], [0], [1], [0, 0, 1, 1], [], []>} : vector<16x64xf32>, vector<64x32xf32>, vector<16x32xf32> -> vector<16x32xf32>
    %126 = arith.addf %125, %21 : vector<16x32xf32>
    %127 = arith.addf %120, %126 : vector<16x32xf32>
    %cst_31 = arith.constant dense<0.000000e+00> : vector<16xf32>
    %128 = vector.multi_reduction <add>, %127, %cst_31 [1] : vector<16x32xf32> to vector<16xf32>
    %129 = vector.shape_cast %128 : vector<16xf32> to vector<16x1xf32>
    %cst_32 = arith.constant 3.200000e+01 : f32
    %130 = vector.broadcast %cst_32 : f32 to vector<16x1xf32>
    %131 = arith.divf %129, %130 : vector<16x1xf32>
    %132 = vector.broadcast %131 : vector<16x1xf32> to vector<16x32xf32>
    %133 = arith.subf %127, %132 : vector<16x32xf32>
    %134 = arith.mulf %133, %133 : vector<16x32xf32>
    %cst_33 = arith.constant dense<0.000000e+00> : vector<16xf32>
    %135 = vector.multi_reduction <add>, %134, %cst_33 [1] : vector<16x32xf32> to vector<16xf32>
    %136 = vector.shape_cast %135 : vector<16xf32> to vector<16x1xf32>
    %cst_34 = arith.constant 3.200000e+01 : f32
    %137 = vector.broadcast %cst_34 : f32 to vector<16x1xf32>
    %138 = arith.divf %136, %137 : vector<16x1xf32>
    %139 = vector.broadcast %131 : vector<16x1xf32> to vector<16x32xf32>
    %140 = arith.subf %127, %139 : vector<16x32xf32>
    %cst_35 = arith.constant 9.99999974E-6 : f32
    %141 = vector.broadcast %cst_35 : f32 to vector<16x1xf32>
    %142 = arith.addf %138, %141 : vector<16x1xf32>
    %143 = math.rsqrt %142 : vector<16x1xf32>
    %144 = vector.broadcast %143 : vector<16x1xf32> to vector<16x32xf32>
    %145 = arith.mulf %140, %144 : vector<16x32xf32>
    %146 = arith.mulf %145, %27 : vector<16x32xf32>
    %147 = arith.addf %146, %29 : vector<16x32xf32>
    %cst_36 = arith.constant dense<0.000000e+00> : vector<16x96xf32>
    %148 = tpu.matmul %147, %1, %cst_36 {dimension_numbers = #tpu.dot_dimension_numbers<[1], [0], [0], [1], [0, 0, 1, 1], [], []>} : vector<16x32xf32>, vector<32x96xf32>, vector<16x96xf32> -> vector<16x96xf32>
    %149 = arith.addf %148, %15 : vector<16x96xf32>
    %150 = vector.extract_strided_slice %149 {offsets = [0, 0], sizes = [16, 32], strides = [1, 1]} : vector<16x96xf32> to vector<16x32xf32>
    %151 = vector.extract_strided_slice %150 {offsets = [0, 0], sizes = [16, 8], strides = [1, 1]} : vector<16x32xf32> to vector<16x8xf32>
    %152 = vector.extract_strided_slice %150 {offsets = [0, 8], sizes = [16, 8], strides = [1, 1]} : vector<16x32xf32> to vector<16x8xf32>
    %153 = vector.extract_strided_slice %150 {offsets = [0, 16], sizes = [16, 8], strides = [1, 1]} : vector<16x32xf32> to vector<16x8xf32>
    %154 = vector.extract_strided_slice %150 {offsets = [0, 24], sizes = [16, 8], strides = [1, 1]} : vector<16x32xf32> to vector<16x8xf32>
    %155 = vector.shape_cast %151 : vector<16x8xf32> to vector<1x16x8xf32>
    %156 = vector.shape_cast %152 : vector<16x8xf32> to vector<1x16x8xf32>
    %157 = vector.shape_cast %153 : vector<16x8xf32> to vector<1x16x8xf32>
    %158 = vector.shape_cast %154 : vector<16x8xf32> to vector<1x16x8xf32>
    %159 = tpu.concatenate %155, %156, %157, %158 in 0 : vector<1x16x8xf32>, vector<1x16x8xf32>, vector<1x16x8xf32>, vector<1x16x8xf32> -> vector<4x16x8xf32>
    %160 = vector.extract_strided_slice %149 {offsets = [0, 32], sizes = [16, 32], strides = [1, 1]} : vector<16x96xf32> to vector<16x32xf32>
    %161 = vector.extract_strided_slice %160 {offsets = [0, 0], sizes = [16, 8], strides = [1, 1]} : vector<16x32xf32> to vector<16x8xf32>
    %162 = vector.extract_strided_slice %160 {offsets = [0, 8], sizes = [16, 8], strides = [1, 1]} : vector<16x32xf32> to vector<16x8xf32>
    %163 = vector.extract_strided_slice %160 {offsets = [0, 16], sizes = [16, 8], strides = [1, 1]} : vector<16x32xf32> to vector<16x8xf32>
    %164 = vector.extract_strided_slice %160 {offsets = [0, 24], sizes = [16, 8], strides = [1, 1]} : vector<16x32xf32> to vector<16x8xf32>
    %165 = vector.shape_cast %161 : vector<16x8xf32> to vector<1x16x8xf32>
    %166 = vector.shape_cast %162 : vector<16x8xf32> to vector<1x16x8xf32>
    %167 = vector.shape_cast %163 : vector<16x8xf32> to vector<1x16x8xf32>
    %168 = vector.shape_cast %164 : vector<16x8xf32> to vector<1x16x8xf32>
    %169 = tpu.concatenate %165, %166, %167, %168 in 0 : vector<1x16x8xf32>, vector<1x16x8xf32>, vector<1x16x8xf32>, vector<1x16x8xf32> -> vector<4x16x8xf32>
    %170 = vector.extract_strided_slice %149 {offsets = [0, 64], sizes = [16, 32], strides = [1, 1]} : vector<16x96xf32> to vector<16x32xf32>
    %171 = vector.extract_strided_slice %170 {offsets = [0, 0], sizes = [16, 8], strides = [1, 1]} : vector<16x32xf32> to vector<16x8xf32>
    %172 = vector.extract_strided_slice %170 {offsets = [0, 8], sizes = [16, 8], strides = [1, 1]} : vector<16x32xf32> to vector<16x8xf32>
    %173 = vector.extract_strided_slice %170 {offsets = [0, 16], sizes = [16, 8], strides = [1, 1]} : vector<16x32xf32> to vector<16x8xf32>
    %174 = vector.extract_strided_slice %170 {offsets = [0, 24], sizes = [16, 8], strides = [1, 1]} : vector<16x32xf32> to vector<16x8xf32>
    %175 = vector.shape_cast %171 : vector<16x8xf32> to vector<1x16x8xf32>
    %176 = vector.shape_cast %172 : vector<16x8xf32> to vector<1x16x8xf32>
    %177 = vector.shape_cast %173 : vector<16x8xf32> to vector<1x16x8xf32>
    %178 = vector.shape_cast %174 : vector<16x8xf32> to vector<1x16x8xf32>
    %179 = tpu.concatenate %175, %176, %177, %178 in 0 : vector<1x16x8xf32>, vector<1x16x8xf32>, vector<1x16x8xf32>, vector<1x16x8xf32> -> vector<4x16x8xf32>
    "tpu.trace_start"() <{level = 10 : i32, message = "hqd,hkd->hqk"}> : () -> ()
    %cst_37 = arith.constant dense<0.000000e+00> : vector<4x16x16xf32>
    %180 = tpu.matmul %159, %169, %cst_37 {dimension_numbers = #tpu.dot_dimension_numbers<[2], [2], [1], [1], [0, 0, 0, 1, 1, 1], [0], [0]>} : vector<4x16x8xf32>, vector<4x16x8xf32>, vector<4x16x16xf32> -> vector<4x16x16xf32>
    "tpu.trace_stop"() : () -> ()
    %181 = vector.shape_cast %41 : vector<16x16xf32> to vector<1x16x16xf32>
    %182 = vector.broadcast %181 : vector<1x16x16xf32> to vector<4x16x16xf32>
    %183 = arith.addf %180, %182 : vector<4x16x16xf32>
    %cst_38 = arith.constant dense<0xFF800000> : vector<4x16xf32>
    %184 = vector.multi_reduction <maximumf>, %183, %cst_38 [2] : vector<4x16x16xf32> to vector<4x16xf32>
    %185 = vector.shape_cast %184 : vector<4x16xf32> to vector<4x16x1xf32>
    %186 = vector.broadcast %185 : vector<4x16x1xf32> to vector<4x16x16xf32>
    %187 = arith.subf %183, %186 : vector<4x16x16xf32>
    %188 = math.exp %187 : vector<4x16x16xf32>
    %cst_39 = arith.constant dense<0.000000e+00> : vector<4x16xf32>
    %189 = vector.multi_reduction <add>, %188, %cst_39 [2] : vector<4x16x16xf32> to vector<4x16xf32>
    %190 = vector.shape_cast %189 : vector<4x16xf32> to vector<4x16x1xf32>
    %191 = tpu.reciprocal %190 : vector<4x16x1xf32> -> vector<4x16x1xf32>
    %192 = vector.broadcast %191 : vector<4x16x1xf32> to vector<4x16x16xf32>
    %193 = arith.mulf %188, %192 : vector<4x16x16xf32>
    "tpu.trace_start"() <{level = 10 : i32, message = "hqk,hkd->hqd"}> : () -> ()
    %cst_40 = arith.constant dense<0.000000e+00> : vector<4x16x8xf32>
    %194 = tpu.matmul %193, %179, %cst_40 {dimension_numbers = #tpu.dot_dimension_numbers<[2], [1], [1], [2], [0, 0, 0, 1, 1, 2], [0], [0]>} : vector<4x16x16xf32>, vector<4x16x8xf32>, vector<4x16x8xf32> -> vector<4x16x8xf32>
    "tpu.trace_stop"() : () -> ()
    %195 = vector.extract_strided_slice %194 {offsets = [0, 0, 0], sizes = [1, 16, 8], strides = [1, 1, 1]} : vector<4x16x8xf32> to vector<1x16x8xf32>
    %196 = vector.shape_cast %195 : vector<1x16x8xf32> to vector<16x8xf32>
    %197 = vector.extract_strided_slice %194 {offsets = [1, 0, 0], sizes = [1, 16, 8], strides = [1, 1, 1]} : vector<4x16x8xf32> to vector<1x16x8xf32>
    %198 = vector.shape_cast %197 : vector<1x16x8xf32> to vector<16x8xf32>
    %199 = vector.extract_strided_slice %194 {offsets = [2, 0, 0], sizes = [1, 16, 8], strides = [1, 1, 1]} : vector<4x16x8xf32> to vector<1x16x8xf32>
    %200 = vector.shape_cast %199 : vector<1x16x8xf32> to vector<16x8xf32>
    %201 = vector.extract_strided_slice %194 {offsets = [3, 0, 0], sizes = [1, 16, 8], strides = [1, 1, 1]} : vector<4x16x8xf32> to vector<1x16x8xf32>
    %202 = vector.shape_cast %201 : vector<1x16x8xf32> to vector<16x8xf32>
    %203 = tpu.concatenate %196, %198, %200, %202 in 1 : vector<16x8xf32>, vector<16x8xf32>, vector<16x8xf32>, vector<16x8xf32> -> vector<16x32xf32>
    %cst_41 = arith.constant dense<0.000000e+00> : vector<16x32xf32>
    %204 = tpu.matmul %203, %2, %cst_41 {dimension_numbers = #tpu.dot_dimension_numbers<[1], [0], [0], [1], [0, 0, 1, 1], [], []>} : vector<16x32xf32>, vector<32x32xf32>, vector<16x32xf32> -> vector<16x32xf32>
    %205 = arith.addf %204, %17 : vector<16x32xf32>
    %206 = arith.addf %147, %205 : vector<16x32xf32>
    %cst_42 = arith.constant dense<0.000000e+00> : vector<16xf32>
    %207 = vector.multi_reduction <add>, %206, %cst_42 [1] : vector<16x32xf32> to vector<16xf32>
    %208 = vector.shape_cast %207 : vector<16xf32> to vector<16x1xf32>
    %cst_43 = arith.constant 3.200000e+01 : f32
    %209 = vector.broadcast %cst_43 : f32 to vector<16x1xf32>
    %210 = arith.divf %208, %209 : vector<16x1xf32>
    %211 = vector.broadcast %210 : vector<16x1xf32> to vector<16x32xf32>
    %212 = arith.subf %206, %211 : vector<16x32xf32>
    %213 = arith.mulf %212, %212 : vector<16x32xf32>
    %cst_44 = arith.constant dense<0.000000e+00> : vector<16xf32>
    %214 = vector.multi_reduction <add>, %213, %cst_44 [1] : vector<16x32xf32> to vector<16xf32>
    %215 = vector.shape_cast %214 : vector<16xf32> to vector<16x1xf32>
    %cst_45 = arith.constant 3.200000e+01 : f32
    %216 = vector.broadcast %cst_45 : f32 to vector<16x1xf32>
    %217 = arith.divf %215, %216 : vector<16x1xf32>
    %218 = vector.broadcast %210 : vector<16x1xf32> to vector<16x32xf32>
    %219 = arith.subf %206, %218 : vector<16x32xf32>
    %cst_46 = arith.constant 9.99999974E-6 : f32
    %220 = vector.broadcast %cst_46 : f32 to vector<16x1xf32>
    %221 = arith.addf %217, %220 : vector<16x1xf32>
    %222 = math.rsqrt %221 : vector<16x1xf32>
    %223 = vector.broadcast %222 : vector<16x1xf32> to vector<16x32xf32>
    %224 = arith.mulf %219, %223 : vector<16x32xf32>
    %225 = arith.mulf %224, %23 : vector<16x32xf32>
    %226 = arith.addf %225, %25 : vector<16x32xf32>
    %cst_47 = arith.constant dense<0.000000e+00> : vector<16x64xf32>
    %227 = tpu.matmul %226, %3, %cst_47 {dimension_numbers = #tpu.dot_dimension_numbers<[1], [0], [0], [1], [0, 0, 1, 1], [], []>} : vector<16x32xf32>, vector<32x64xf32>, vector<16x64xf32> -> vector<16x64xf32>
    %228 = arith.addf %227, %19 : vector<16x64xf32>
    %cst_48 = arith.constant 0.000000e+00 : f32
    %229 = vector.broadcast %cst_48 : f32 to vector<16x64xf32>
    %230 = arith.maximumf %228, %229 : vector<16x64xf32>
    %cst_49 = arith.constant dense<0.000000e+00> : vector<16x32xf32>
    %231 = tpu.matmul %230, %4, %cst_49 {dimension_numbers = #tpu.dot_dimension_numbers<[1], [0], [0], [1], [0, 0, 1, 1], [], []>} : vector<16x64xf32>, vector<64x32xf32>, vector<16x32xf32> -> vector<16x32xf32>
    %232 = arith.addf %231, %21 : vector<16x32xf32>
    %233 = arith.addf %226, %232 : vector<16x32xf32>
    %cst_50 = arith.constant dense<0.000000e+00> : vector<16xf32>
    %234 = vector.multi_reduction <add>, %233, %cst_50 [1] : vector<16x32xf32> to vector<16xf32>
    %235 = vector.shape_cast %234 : vector<16xf32> to vector<16x1xf32>
    %cst_51 = arith.constant 3.200000e+01 : f32
    %236 = vector.broadcast %cst_51 : f32 to vector<16x1xf32>
    %237 = arith.divf %235, %236 : vector<16x1xf32>
    %238 = vector.broadcast %237 : vector<16x1xf32> to vector<16x32xf32>
    %239 = arith.subf %233, %238 : vector<16x32xf32>
    %240 = arith.mulf %239, %239 : vector<16x32xf32>
    %cst_52 = arith.constant dense<0.000000e+00> : vector<16xf32>
    %241 = vector.multi_reduction <add>, %240, %cst_52 [1] : vector<16x32xf32> to vector<16xf32>
    %242 = vector.shape_cast %241 : vector<16xf32> to vector<16x1xf32>
    %cst_53 = arith.constant 3.200000e+01 : f32
    %243 = vector.broadcast %cst_53 : f32 to vector<16x1xf32>
    %244 = arith.divf %242, %243 : vector<16x1xf32>
    %245 = vector.broadcast %237 : vector<16x1xf32> to vector<16x32xf32>
    %246 = arith.subf %233, %245 : vector<16x32xf32>
    %cst_54 = arith.constant 9.99999974E-6 : f32
    %247 = vector.broadcast %cst_54 : f32 to vector<16x1xf32>
    %248 = arith.addf %244, %247 : vector<16x1xf32>
    %249 = math.rsqrt %248 : vector<16x1xf32>
    %250 = vector.broadcast %249 : vector<16x1xf32> to vector<16x32xf32>
    %251 = arith.mulf %246, %250 : vector<16x32xf32>
    %252 = arith.mulf %251, %27 : vector<16x32xf32>
    %253 = arith.addf %252, %29 : vector<16x32xf32>
    %cst_55 = arith.constant dense<0.000000e+00> : vector<16x96xf32>
    %254 = tpu.matmul %253, %1, %cst_55 {dimension_numbers = #tpu.dot_dimension_numbers<[1], [0], [0], [1], [0, 0, 1, 1], [], []>} : vector<16x32xf32>, vector<32x96xf32>, vector<16x96xf32> -> vector<16x96xf32>
    %255 = arith.addf %254, %15 : vector<16x96xf32>
    %256 = vector.extract_strided_slice %255 {offsets = [0, 0], sizes = [16, 32], strides = [1, 1]} : vector<16x96xf32> to vector<16x32xf32>
    %257 = vector.extract_strided_slice %256 {offsets = [0, 0], sizes = [16, 8], strides = [1, 1]} : vector<16x32xf32> to vector<16x8xf32>
    %258 = vector.extract_strided_slice %256 {offsets = [0, 8], sizes = [16, 8], strides = [1, 1]} : vector<16x32xf32> to vector<16x8xf32>
    %259 = vector.extract_strided_slice %256 {offsets = [0, 16], sizes = [16, 8], strides = [1, 1]} : vector<16x32xf32> to vector<16x8xf32>
    %260 = vector.extract_strided_slice %256 {offsets = [0, 24], sizes = [16, 8], strides = [1, 1]} : vector<16x32xf32> to vector<16x8xf32>
    %261 = vector.shape_cast %257 : vector<16x8xf32> to vector<1x16x8xf32>
    %262 = vector.shape_cast %258 : vector<16x8xf32> to vector<1x16x8xf32>
    %263 = vector.shape_cast %259 : vector<16x8xf32> to vector<1x16x8xf32>
    %264 = vector.shape_cast %260 : vector<16x8xf32> to vector<1x16x8xf32>
    %265 = tpu.concatenate %261, %262, %263, %264 in 0 : vector<1x16x8xf32>, vector<1x16x8xf32>, vector<1x16x8xf32>, vector<1x16x8xf32> -> vector<4x16x8xf32>
    %266 = vector.extract_strided_slice %255 {offsets = [0, 32], sizes = [16, 32], strides = [1, 1]} : vector<16x96xf32> to vector<16x32xf32>
    %267 = vector.extract_strided_slice %266 {offsets = [0, 0], sizes = [16, 8], strides = [1, 1]} : vector<16x32xf32> to vector<16x8xf32>
    %268 = vector.extract_strided_slice %266 {offsets = [0, 8], sizes = [16, 8], strides = [1, 1]} : vector<16x32xf32> to vector<16x8xf32>
    %269 = vector.extract_strided_slice %266 {offsets = [0, 16], sizes = [16, 8], strides = [1, 1]} : vector<16x32xf32> to vector<16x8xf32>
    %270 = vector.extract_strided_slice %266 {offsets = [0, 24], sizes = [16, 8], strides = [1, 1]} : vector<16x32xf32> to vector<16x8xf32>
    %271 = vector.shape_cast %267 : vector<16x8xf32> to vector<1x16x8xf32>
    %272 = vector.shape_cast %268 : vector<16x8xf32> to vector<1x16x8xf32>
    %273 = vector.shape_cast %269 : vector<16x8xf32> to vector<1x16x8xf32>
    %274 = vector.shape_cast %270 : vector<16x8xf32> to vector<1x16x8xf32>
    %275 = tpu.concatenate %271, %272, %273, %274 in 0 : vector<1x16x8xf32>, vector<1x16x8xf32>, vector<1x16x8xf32>, vector<1x16x8xf32> -> vector<4x16x8xf32>
    %276 = vector.extract_strided_slice %255 {offsets = [0, 64], sizes = [16, 32], strides = [1, 1]} : vector<16x96xf32> to vector<16x32xf32>
    %277 = vector.extract_strided_slice %276 {offsets = [0, 0], sizes = [16, 8], strides = [1, 1]} : vector<16x32xf32> to vector<16x8xf32>
    %278 = vector.extract_strided_slice %276 {offsets = [0, 8], sizes = [16, 8], strides = [1, 1]} : vector<16x32xf32> to vector<16x8xf32>
    %279 = vector.extract_strided_slice %276 {offsets = [0, 16], sizes = [16, 8], strides = [1, 1]} : vector<16x32xf32> to vector<16x8xf32>
    %280 = vector.extract_strided_slice %276 {offsets = [0, 24], sizes = [16, 8], strides = [1, 1]} : vector<16x32xf32> to vector<16x8xf32>
    %281 = vector.shape_cast %277 : vector<16x8xf32> to vector<1x16x8xf32>
    %282 = vector.shape_cast %278 : vector<16x8xf32> to vector<1x16x8xf32>
    %283 = vector.shape_cast %279 : vector<16x8xf32> to vector<1x16x8xf32>
    %284 = vector.shape_cast %280 : vector<16x8xf32> to vector<1x16x8xf32>
    %285 = tpu.concatenate %281, %282, %283, %284 in 0 : vector<1x16x8xf32>, vector<1x16x8xf32>, vector<1x16x8xf32>, vector<1x16x8xf32> -> vector<4x16x8xf32>
    "tpu.trace_start"() <{level = 10 : i32, message = "hqd,hkd->hqk"}> : () -> ()
    %cst_56 = arith.constant dense<0.000000e+00> : vector<4x16x16xf32>
    %286 = tpu.matmul %265, %275, %cst_56 {dimension_numbers = #tpu.dot_dimension_numbers<[2], [2], [1], [1], [0, 0, 0, 1, 1, 1], [0], [0]>} : vector<4x16x8xf32>, vector<4x16x8xf32>, vector<4x16x16xf32> -> vector<4x16x16xf32>
    "tpu.trace_stop"() : () -> ()
    %287 = vector.shape_cast %41 : vector<16x16xf32> to vector<1x16x16xf32>
    %288 = vector.broadcast %287 : vector<1x16x16xf32> to vector<4x16x16xf32>
    %289 = arith.addf %286, %288 : vector<4x16x16xf32>
    %cst_57 = arith.constant dense<0xFF800000> : vector<4x16xf32>
    %290 = vector.multi_reduction <maximumf>, %289, %cst_57 [2] : vector<4x16x16xf32> to vector<4x16xf32>
    %291 = vector.shape_cast %290 : vector<4x16xf32> to vector<4x16x1xf32>
    %292 = vector.broadcast %291 : vector<4x16x1xf32> to vector<4x16x16xf32>
    %293 = arith.subf %289, %292 : vector<4x16x16xf32>
    %294 = math.exp %293 : vector<4x16x16xf32>
    %cst_58 = arith.constant dense<0.000000e+00> : vector<4x16xf32>
    %295 = vector.multi_reduction <add>, %294, %cst_58 [2] : vector<4x16x16xf32> to vector<4x16xf32>
    %296 = vector.shape_cast %295 : vector<4x16xf32> to vector<4x16x1xf32>
    %297 = tpu.reciprocal %296 : vector<4x16x1xf32> -> vector<4x16x1xf32>
    %298 = vector.broadcast %297 : vector<4x16x1xf32> to vector<4x16x16xf32>
    %299 = arith.mulf %294, %298 : vector<4x16x16xf32>
    "tpu.trace_start"() <{level = 10 : i32, message = "hqk,hkd->hqd"}> : () -> ()
    %cst_59 = arith.constant dense<0.000000e+00> : vector<4x16x8xf32>
    %300 = tpu.matmul %299, %285, %cst_59 {dimension_numbers = #tpu.dot_dimension_numbers<[2], [1], [1], [2], [0, 0, 0, 1, 1, 2], [0], [0]>} : vector<4x16x16xf32>, vector<4x16x8xf32>, vector<4x16x8xf32> -> vector<4x16x8xf32>
    "tpu.trace_stop"() : () -> ()
    %301 = vector.extract_strided_slice %300 {offsets = [0, 0, 0], sizes = [1, 16, 8], strides = [1, 1, 1]} : vector<4x16x8xf32> to vector<1x16x8xf32>
    %302 = vector.shape_cast %301 : vector<1x16x8xf32> to vector<16x8xf32>
    %303 = vector.extract_strided_slice %300 {offsets = [1, 0, 0], sizes = [1, 16, 8], strides = [1, 1, 1]} : vector<4x16x8xf32> to vector<1x16x8xf32>
    %304 = vector.shape_cast %303 : vector<1x16x8xf32> to vector<16x8xf32>
    %305 = vector.extract_strided_slice %300 {offsets = [2, 0, 0], sizes = [1, 16, 8], strides = [1, 1, 1]} : vector<4x16x8xf32> to vector<1x16x8xf32>
    %306 = vector.shape_cast %305 : vector<1x16x8xf32> to vector<16x8xf32>
    %307 = vector.extract_strided_slice %300 {offsets = [3, 0, 0], sizes = [1, 16, 8], strides = [1, 1, 1]} : vector<4x16x8xf32> to vector<1x16x8xf32>
    %308 = vector.shape_cast %307 : vector<1x16x8xf32> to vector<16x8xf32>
    %309 = tpu.concatenate %302, %304, %306, %308 in 1 : vector<16x8xf32>, vector<16x8xf32>, vector<16x8xf32>, vector<16x8xf32> -> vector<16x32xf32>
    %cst_60 = arith.constant dense<0.000000e+00> : vector<16x32xf32>
    %310 = tpu.matmul %309, %2, %cst_60 {dimension_numbers = #tpu.dot_dimension_numbers<[1], [0], [0], [1], [0, 0, 1, 1], [], []>} : vector<16x32xf32>, vector<32x32xf32>, vector<16x32xf32> -> vector<16x32xf32>
    %311 = arith.addf %310, %17 : vector<16x32xf32>
    %312 = arith.addf %253, %311 : vector<16x32xf32>
    %cst_61 = arith.constant dense<0.000000e+00> : vector<16xf32>
    %313 = vector.multi_reduction <add>, %312, %cst_61 [1] : vector<16x32xf32> to vector<16xf32>
    %314 = vector.shape_cast %313 : vector<16xf32> to vector<16x1xf32>
    %cst_62 = arith.constant 3.200000e+01 : f32
    %315 = vector.broadcast %cst_62 : f32 to vector<16x1xf32>
    %316 = arith.divf %314, %315 : vector<16x1xf32>
    %317 = vector.broadcast %316 : vector<16x1xf32> to vector<16x32xf32>
    %318 = arith.subf %312, %317 : vector<16x32xf32>
    %319 = arith.mulf %318, %318 : vector<16x32xf32>
    %cst_63 = arith.constant dense<0.000000e+00> : vector<16xf32>
    %320 = vector.multi_reduction <add>, %319, %cst_63 [1] : vector<16x32xf32> to vector<16xf32>
    %321 = vector.shape_cast %320 : vector<16xf32> to vector<16x1xf32>
    %cst_64 = arith.constant 3.200000e+01 : f32
    %322 = vector.broadcast %cst_64 : f32 to vector<16x1xf32>
    %323 = arith.divf %321, %322 : vector<16x1xf32>
    %324 = vector.broadcast %316 : vector<16x1xf32> to vector<16x32xf32>
    %325 = arith.subf %312, %324 : vector<16x32xf32>
    %cst_65 = arith.constant 9.99999974E-6 : f32
    %326 = vector.broadcast %cst_65 : f32 to vector<16x1xf32>
    %327 = arith.addf %323, %326 : vector<16x1xf32>
    %328 = math.rsqrt %327 : vector<16x1xf32>
    %329 = vector.broadcast %328 : vector<16x1xf32> to vector<16x32xf32>
    %330 = arith.mulf %325, %329 : vector<16x32xf32>
    %331 = arith.mulf %330, %23 : vector<16x32xf32>
    %332 = arith.addf %331, %25 : vector<16x32xf32>
    %cst_66 = arith.constant dense<0.000000e+00> : vector<16x64xf32>
    %333 = tpu.matmul %332, %3, %cst_66 {dimension_numbers = #tpu.dot_dimension_numbers<[1], [0], [0], [1], [0, 0, 1, 1], [], []>} : vector<16x32xf32>, vector<32x64xf32>, vector<16x64xf32> -> vector<16x64xf32>
    %334 = arith.addf %333, %19 : vector<16x64xf32>
    %cst_67 = arith.constant 0.000000e+00 : f32
    %335 = vector.broadcast %cst_67 : f32 to vector<16x64xf32>
    %336 = arith.maximumf %334, %335 : vector<16x64xf32>
    %cst_68 = arith.constant dense<0.000000e+00> : vector<16x32xf32>
    %337 = tpu.matmul %336, %4, %cst_68 {dimension_numbers = #tpu.dot_dimension_numbers<[1], [0], [0], [1], [0, 0, 1, 1], [], []>} : vector<16x64xf32>, vector<64x32xf32>, vector<16x32xf32> -> vector<16x32xf32>
    %338 = arith.addf %337, %21 : vector<16x32xf32>
    %339 = arith.addf %332, %338 : vector<16x32xf32>
    %cst_69 = arith.constant dense<0.000000e+00> : vector<16xf32>
    %340 = vector.multi_reduction <add>, %339, %cst_69 [1] : vector<16x32xf32> to vector<16xf32>
    %341 = vector.shape_cast %340 : vector<16xf32> to vector<16x1xf32>
    %cst_70 = arith.constant 3.200000e+01 : f32
    %342 = vector.broadcast %cst_70 : f32 to vector<16x1xf32>
    %343 = arith.divf %341, %342 : vector<16x1xf32>
    %344 = vector.broadcast %343 : vector<16x1xf32> to vector<16x32xf32>
    %345 = arith.subf %339, %344 : vector<16x32xf32>
    %346 = arith.mulf %345, %345 : vector<16x32xf32>
    %cst_71 = arith.constant dense<0.000000e+00> : vector<16xf32>
    %347 = vector.multi_reduction <add>, %346, %cst_71 [1] : vector<16x32xf32> to vector<16xf32>
    %348 = vector.shape_cast %347 : vector<16xf32> to vector<16x1xf32>
    %cst_72 = arith.constant 3.200000e+01 : f32
    %349 = vector.broadcast %cst_72 : f32 to vector<16x1xf32>
    %350 = arith.divf %348, %349 : vector<16x1xf32>
    %351 = vector.broadcast %343 : vector<16x1xf32> to vector<16x32xf32>
    %352 = arith.subf %339, %351 : vector<16x32xf32>
    %cst_73 = arith.constant 9.99999974E-6 : f32
    %353 = vector.broadcast %cst_73 : f32 to vector<16x1xf32>
    %354 = arith.addf %350, %353 : vector<16x1xf32>
    %355 = math.rsqrt %354 : vector<16x1xf32>
    %356 = vector.broadcast %355 : vector<16x1xf32> to vector<16x32xf32>
    %357 = arith.mulf %352, %356 : vector<16x32xf32>
    %358 = arith.mulf %357, %27 : vector<16x32xf32>
    %359 = arith.addf %358, %29 : vector<16x32xf32>
    %c0_74 = arith.constant 0 : index
    %c0_75 = arith.constant 0 : index
    %360 = vector.load %arg3[%c0_74, %c0_75] : memref<16x32xf32, #tpu.memory_space<vmem>>, vector<16x32xf32>
    tpu.vector_store %arg3[%c0_74, %c0_75], %359 {strides = array<i32>} : memref<16x32xf32, #tpu.memory_space<vmem>>, vector<16x32xf32>,
    return
  }
  func.func @transform_0(%arg0: i32) -> (i32, i32) {
    %c0_i32 = arith.constant 0 : i32
    %c0_i32_0 = arith.constant 0 : i32
    %c0_i32_1 = arith.constant 0 : i32
    return %c0_i32, %c0_i32_0 : i32, i32
  }
  func.func @transform_1(%arg0: i32) -> (i32, i32) {
    %c0_i32 = arith.constant 0 : i32
    %c0_i32_0 = arith.constant 0 : i32
    %c0_i32_1 = arith.constant 0 : i32
    return %c0_i32, %c0_i32_0 : i32, i32
  }
  func.func @transform_2(%arg0: i32) -> (i32, i32) {
    %c0_i32 = arith.constant 0 : i32
    %c0_i32_0 = arith.constant 0 : i32
    %c0_i32_1 = arith.constant 0 : i32
    return %c0_i32, %c0_i32_0 : i32, i32
  }
}

</mosaic_0001>

<llo_original>
// kernel: transformer_encoder.1
$region0: #{transformer_encoder.1}
  #allocation0 [shape = 'u32[]', space=smem, size = 0x4, offset = 0x4, fixed_abs, tag = 'smem constant byte address 0x4 - core index']
  #allocation1 [shape = 'u32[144,128]{1,0:T(1,128)}', space=vmem, size = 0x12000, scoped, tag = 'internal scratch']
  %s0 = inlined_call_operand.vmem [shape: f32[16,32], index: 0, kind: input, shape index: {}]
  %s1 = inlined_call_operand.vmem [shape: f32[176,128], index: 1, kind: input, shape index: {}]
  %s2 = inlined_call_operand.hbm [shape: f32[16,32], index: 2, kind: output, shape index: {}]
  %s3 = sld [smem:[#allocation0]]
  $region18: #{transformer_encoder.1} parent=0
    _
  %s5 = ssub.s32 1, %s3
  %s6 = scalar_select 0, %s5, %s3
  $region1: #{transformer_encoder.1} parent=0
    #allocation2 [shape = 'u8[8192]{0}', space=vmem, size = 0x2000, scoped, tag = 'output window, operand 0, single buffered']
    #allocation3 [shape = 's32[1]{0}', space=sflag, size = 0x4, scoped, tag = 'scoped memory for transformer_encoder.1']
    %7 = vsyncpa [#allocation3], 0
    // Predicated region
    $region2: #{transformer_encoder.1} parent=1 // pred_check
      _
    $region3: #{transformer_encoder.1} parent=1 // pred_check_branch
      %9 = sbr.rel (0) target = $region5
    $region4: #{transformer_encoder.1} parent=1 // pred_region
      _
    $region5: #{transformer_encoder.1} parent=1 // pred_fallthru
      _
    // Predicated region
    $region6: #{transformer_encoder.1} parent=1 // pred_check
      _
    $region7: #{transformer_encoder.1} parent=1 // pred_check_branch
      %11 = sbr.rel (0) target = $region9
    $region8: #{transformer_encoder.1} parent=1 // pred_region
      _
    $region9: #{transformer_encoder.1} parent=1 // pred_fallthru
      _
    %v12 = vld [vmem:[%s0] sm:$0xff]
    %v13 = vld [vmem:[%s0 + $0x8] sm:$0xff]
    %v14 = vld [vmem:[%s1] sm:$0xff]
    %v15 = vld [vmem:[%s1 + $0x8] sm:$0xff]
    %v16 = vld [vmem:[%s1 + $0x10] sm:$0xff]
    %v17 = vld [vmem:[%s1 + $0x18] sm:$0xff]
    %v18 = vld [vmem:[%s1 + $0x20] sm:$0xff]
    %v19 = vld [vmem:[%s1 + $0x28] sm:$0xff]
    %v20 = vld [vmem:[%s1 + $0x30] sm:$0xff]
    %v21 = vld [vmem:[%s1 + $0x38] sm:$0xff]
    %v22 = vld [vmem:[%s1 + $0x40] sm:$0xff]
    %v23 = vld [vmem:[%s1 + $0x48] sm:$0xff]
    %v24 = vld [vmem:[%s1 + $0x50] sm:$0xff]
    %v25 = vld [vmem:[%s1 + $0x58] sm:$0xff]
    %v26 = vld [vmem:[%s1 + $0x60] sm:$0xff]
    %v27 = vld [vmem:[%s1 + $0x68] sm:$0xff]
    %v28 = vld [vmem:[%s1 + $0x70] sm:$0xff]
    %v29 = vld [vmem:[%s1 + $0x78] sm:$0xff]
    %v30 = vld [vmem:[%s1 + $0x80] sm:$0xff]
    %v31 = vld [vmem:[%s1 + $0x88] sm:$0xff]
    %v32 = vld [vmem:[%s1 + $0x90] sm:$0xff]
    %v33 = vld [vmem:[%s1 + $0x98] sm:$0xff]
    %v34 = vld [vmem:[%s1 + $0xa0] sm:$0x1]
    %v35 = vld [vmem:[%s1 + $0xa1] sm:$0x1]
    %v36 = vld [vmem:[%s1 + $0xa2] sm:$0x1]
    %v37 = vld [vmem:[%s1 + $0xa3] sm:$0x1]
    %v38 = vld [vmem:[%s1 + $0xa4] sm:$0x1]
    %v39 = vld [vmem:[%s1 + $0xa5] sm:$0x1]
    %v40 = vld [vmem:[%s1 + $0xa6] sm:$0x1]
    %v41 = vld [vmem:[%s1 + $0xa7] sm:$0x1]
    %v42 = vld [vmem:[%s1 + $0xa8] sm:$0x1]
    %v43 = vlaneseq
    %v44 = vshrl.u32 %v43, 7
    %v45 = vsub.s32 0, %v44
    %v46 = vrot.slane %v34, %v45
    %v47 = vlaneseq
    %v48 = vshrl.u32 %v47, 7
    %v49 = vsub.s32 0, %v48
    %v50 = vrot.slane %v35, %v49
    %v51 = vlaneseq
    %v52 = vshrl.u32 %v51, 7
    %v53 = vsub.s32 0, %v52
    %v54 = vrot.slane %v36, %v53
    %v55 = vlaneseq
    %v56 = vshrl.u32 %v55, 7
    %v57 = vsub.s32 0, %v56
    %v58 = vrot.slane %v37, %v57
    %v59 = vlaneseq
    %v60 = vshrl.u32 %v59, 7
    %v61 = vsub.s32 0, %v60
    %v62 = vrot.slane %v38, %v61
    %v63 = vlaneseq
    %v64 = vshrl.u32 %v63, 7
    %v65 = vsub.s32 0, %v64
    %v66 = vrot.slane %v39, %v65
    %v67 = vlaneseq
    %v68 = vshrl.u32 %v67, 7
    %v69 = vsub.s32 0, %v68
    %v70 = vrot.slane %v40, %v69
    %v71 = vlaneseq
    %v72 = vshrl.u32 %v71, 7
    %v73 = vsub.s32 0, %v72
    %v74 = vrot.slane %v41, %v73
    %v75 = vlaneseq
    %v76 = vshrl.u32 %v75, 7
    %v77 = vadd.s32 %v76, 8
    %v78 = vlaneseq
    %v79 = vand.u32 %v78, 127
    %v80 = vshra.s32 %v76, 3
    %v81 = vshra.s32 %v77, 3
    %v82 = vshra.s32 %v79, 3
    %vm83 = vcmp.eq.s32.totalorder %v80, %v82
    %vm84 = vcmp.eq.s32.totalorder %v81, %v82
    %v85 = vsel %vm83, 0.0, -1e+09
    %v86 = vsel %vm84, 0.0, -1e+09
    %v87 = vlaneseq
    %v88 = vshrl.u32 %v87, 7
    %v89 = vsub.s32 0, %v88
    %v90 = vrot.slane %v42, %v89
    %v91 = vadd.f32 %v85, %v90
    %v92 = vadd.f32 %v86, %v90
    %vm93 = vcmask 261120
    %v95 = vsel %vm93, %v12, 0
    %v98 = vsel %vm93, %v13, 0
    %100 = vmatprep.subr.mxu0 0.0
    %101 = vmatpush1.msra.mxu0 %v14
    %102 = vmatprep.subr.mxu0 0.0
    %103 = vmatpush1.msra.mxu0 %v15
    %104 = vmatprep.subr.mxu0 0.0
    %105 = vmatpush1.msra.mxu0 %v16
    %106 = vmatprep.subr.mxu0 0.0
    %107 = vmatpush1.msra.mxu0 %v17
    %108 = vmatprep.subr.mxu0 0.0
    %109 = vmatpush1.msra.mxu0 0.0
    %110 = vmatprep.subr.mxu0 0.0
    %111 = vmatpush1.msra.mxu0 0.0
    %112 = vmatprep.subr.mxu0 0.0
    %113 = vmatpush1.msra.mxu0 0.0
    %114 = vmatprep.subr.mxu0 0.0
    %115 = vmatpush1.msra.mxu0 0.0
    %116 = vmatprep.subr.mxu0 0.0
    %117 = vmatpush1.msra.mxu0 0.0
    %118 = vmatprep.subr.mxu0 0.0
    %119 = vmatpush1.msra.mxu0 0.0
    %120 = vmatprep.subr.mxu0 0.0
    %121 = vmatpush1.msra.mxu0 0.0
    %122 = vmatprep.subr.mxu0 0.0
    %123 = vmatpush1.msra.mxu0 0.0
    %124 = vmatprep.subr.mxu0 0.0
    %125 = vmatpush1.msra.mxu0 0.0
    %126 = vmatprep.subr.mxu0 0.0
    %127 = vmatpush1.msra.mxu0 0.0
    %128 = vmatprep.subr.mxu0 0.0
    %129 = vmatpush1.msra.mxu0 0.0
    %130 = vmatprep.subr.mxu0 0.0
    %131 = vmatpush1.msra.mxu0 0.0
    %132 = vmatprep.subr.mxu0 0.0
    %133 = vmatpush1.msra.mxu0 0.0
    %134 = vmatprep.subr.mxu0 0.0
    %135 = vmatpush1.msra.mxu0 0.0
    %136 = vmatprep.subr.mxu0 0.0
    %137 = vmatpush1.msra.mxu0 0.0
    %138 = vmatprep.subr.mxu0 0.0
    %139 = vmatpush1.msra.mxu0 0.0
    %140 = vmatprep.subr.mxu0 0.0
    %141 = vmatpush1.msra.mxu0 0.0
    %142 = vmatprep.subr.mxu0 0.0
    %143 = vmatpush1.msra.mxu0 0.0
    %144 = vmatprep.subr.mxu0 0.0
    %145 = vmatpush1.msra.mxu0 0.0
    %146 = vmatprep.subr.mxu0 0.0
    %147 = vmatpush1.msra.mxu0 0.0
    %148 = vmatprep.subr.mxu0 0.0
    %149 = vmatpush1.msra.mxu0 0.0
    %150 = vmatprep.subr.mxu0 0.0
    %151 = vmatpush1.msra.mxu0 0.0
    %152 = vmatprep.subr.mxu0 0.0
    %153 = vmatpush1.msra.mxu0 0.0
    %154 = vmatprep.subr.mxu0 0.0
    %155 = vmatpush1.msra.mxu0 0.0
    %156 = vmatprep.subr.mxu0 0.0
    %157 = vmatpush1.msra.mxu0 0.0
    %158 = vmatprep.subr.mxu0 0.0
    %159 = vmatpush1.msra.mxu0 0.0
    %160 = vmatprep.subr.mxu0 0.0
    %161 = vmatpush1.msra.mxu0 0.0
    %162 = vmatprep.subr.mxu0 0.0
    %163 = vmatpush1.msra.mxu0 0.0
    %164 = vmatprep.mubr.f32.mxu0 0.0
    %165 = vmatmul.mubr.f32.gmra.mrb[0].mxu0 %v95
    %v166 = vpop.f32.mrb[0].mxu0
    %v167 = vadd.f32 %v46, %v166
    %v168 = vpop.f32.mrb[0].mxu0
    %169 = vmatprep.mubr.f32.mxu0 0.0
    %170 = vmatmul.mubr.f32.gmra.mrb[0].mxu0 %v98
    %v171 = vpop.f32.mrb[0].mxu0
    %v172 = vadd.f32 %v46, %v171
    %v173 = vpop.f32.mrb[0].mxu0
    %174 = vdwg.mxu0
    %177 = vrot.lane.b32.xlu0 %v167, 120
    %v178 = vpop.permute.xlu0 %177
    %179 = vrot.lane.b32.xlu0 %v172, 120
    %v180 = vpop.permute.xlu0 %179
    %181 = vrot.lane.b32.xlu0 %v167, 112
    %v182 = vpop.permute.xlu0 %181
    %183 = vrot.lane.b32.xlu0 %v172, 112
    %v184 = vpop.permute.xlu0 %183
    %185 = vrot.lane.b32.xlu0 %v167, 104
    %v186 = vpop.permute.xlu0 %185
    %187 = vrot.lane.b32.xlu0 %v172, 104
    %v188 = vpop.permute.xlu0 %187
    %189 = vrot.lane.b32.xlu0 %v167, 96
    %v190 = vpop.permute.xlu0 %189
    %191 = vrot.lane.b32.xlu0 %v172, 96
    %v192 = vpop.permute.xlu0 %191
    %vm193 = vcmask 64512
    %v194 = vsel %vm193, %v167, 0
    %v196 = vsel %vm193, %v172, 0
    %v198 = vsel %vm193, %v190, 0
    %v200 = vsel %vm193, %v192, 0
    %202 = vmatprep.subr.mxu0 0.0
    %203 = vmatpush1.xpose.msra.mxu0 %v198
    %204 = vmatprep.subr.mxu0 0.0
    %205 = vmatpush1.xpose.msra.mxu0 %v200
    %206 = vmatprep.subr.mxu0 0.0
    %207 = vmatpush1.xpose.msra.mxu0 0.0
    %208 = vmatprep.subr.mxu0 0.0
    %209 = vmatpush1.xpose.msra.mxu0 0.0
    %210 = vmatprep.subr.mxu0 0.0
    %211 = vmatpush1.xpose.msra.mxu0 0.0
    %212 = vmatprep.subr.mxu0 0.0
    %213 = vmatpush1.xpose.msra.mxu0 0.0
    %214 = vmatprep.subr.mxu0 0.0
    %215 = vmatpush1.xpose.msra.mxu0 0.0
    %216 = vmatprep.subr.mxu0 0.0
    %217 = vmatpush1.xpose.msra.mxu0 0.0
    %218 = vmatprep.subr.mxu0 0.0
    %219 = vmatpush1.xpose.msra.mxu0 0.0
    %220 = vmatprep.subr.mxu0 0.0
    %221 = vmatpush1.xpose.msra.mxu0 0.0
    %222 = vmatprep.subr.mxu0 0.0
    %223 = vmatpush1.xpose.msra.mxu0 0.0
    %224 = vmatprep.subr.mxu0 0.0
    %225 = vmatpush1.xpose.msra.mxu0 0.0
    %226 = vmatprep.subr.mxu0 0.0
    %227 = vmatpush1.xpose.msra.mxu0 0.0
    %228 = vmatprep.subr.mxu0 0.0
    %229 = vmatpush1.xpose.msra.mxu0 0.0
    %230 = vmatprep.subr.mxu0 0.0
    %231 = vmatpush1.xpose.msra.mxu0 0.0
    %232 = vmatprep.subr.mxu0 0.0
    %233 = vmatpush1.xpose.msra.mxu0 0.0
    %234 = vmatprep.subr.mxu0 0.0
    %235 = vmatpush1.xpose.msra.mxu0 0.0
    %236 = vmatprep.subr.mxu0 0.0
    %237 = vmatpush1.xpose.msra.mxu0 0.0
    %238 = vmatprep.subr.mxu0 0.0
    %239 = vmatpush1.xpose.msra.mxu0 0.0
    %240 = vmatprep.subr.mxu0 0.0
    %241 = vmatpush1.xpose.msra.mxu0 0.0
    %242 = vmatprep.subr.mxu0 0.0
    %243 = vmatpush1.xpose.msra.mxu0 0.0
    %244 = vmatprep.subr.mxu0 0.0
    %245 = vmatpush1.xpose.msra.mxu0 0.0
    %246 = vmatprep.subr.mxu0 0.0
    %247 = vmatpush1.xpose.msra.mxu0 0.0
    %248 = vmatprep.subr.mxu0 0.0
    %249 = vmatpush1.xpose.msra.mxu0 0.0
    %250 = vmatprep.subr.mxu0 0.0
    %251 = vmatpush1.xpose.msra.mxu0 0.0
    %252 = vmatprep.subr.mxu0 0.0
    %253 = vmatpush1.xpose.msra.mxu0 0.0
    %254 = vmatprep.subr.mxu0 0.0
    %255 = vmatpush1.xpose.msra.mxu0 0.0
    %256 = vmatprep.subr.mxu0 0.0
    %257 = vmatpush1.xpose.msra.mxu0 0.0
    %258 = vmatprep.subr.mxu0 0.0
    %259 = vmatpush1.xpose.msra.mxu0 0.0
    %260 = vmatprep.subr.mxu0 0.0
    %261 = vmatpush1.xpose.msra.mxu0 0.0
    %262 = vmatprep.subr.mxu0 0.0
    %263 = vmatpush1.xpose.msra.mxu0 0.0
    %264 = vmatprep.subr.mxu0 0.0
    %265 = vmatpush1.xpose.msra.mxu0 0.0
    %266 = vmatprep.mubr.f32.mxu0 0.0
    %267 = vmatmul.mubr.f32.gmra.mrb[0].mxu0 %v194
    %v268 = vpop.f32.mrb[0].mxu0
    %v269 = vadd.f32 %v91, %v268
    %v270 = vpop.f32.mrb[0].mxu0
    %271 = vmatprep.mubr.f32.mxu0 0.0
    %272 = vmatmul.mubr.f32.gmra.mrb[0].mxu0 %v196
    %v273 = vpop.f32.mrb[0].mxu0
    %v274 = vadd.f32 %v92, %v273
    %v275 = vpop.f32.mrb[0].mxu0
    %276 = vdwg.mxu0
    %277 = vrot.lane.b32.xlu0 %v178, 96
    %v278 = vpop.permute.xlu0 %277
    %279 = vrot.lane.b32.xlu0 %v180, 96
    %v280 = vpop.permute.xlu0 %279
    %v281 = vsel %vm193, %v178, 0
    %v283 = vsel %vm193, %v180, 0
    %v285 = vsel %vm193, %v278, 0
    %v287 = vsel %vm193, %v280, 0
    %289 = vmatprep.subr.mxu0 0.0
    %290 = vmatpush1.xpose.msra.mxu0 %v285
    %291 = vmatprep.subr.mxu0 0.0
    %292 = vmatpush1.xpose.msra.mxu0 %v287
    %293 = vmatprep.subr.mxu0 0.0
    %294 = vmatpush1.xpose.msra.mxu0 0.0
    %295 = vmatprep.subr.mxu0 0.0
    %296 = vmatpush1.xpose.msra.mxu0 0.0
    %297 = vmatprep.subr.mxu0 0.0
    %298 = vmatpush1.xpose.msra.mxu0 0.0
    %299 = vmatprep.subr.mxu0 0.0
    %300 = vmatpush1.xpose.msra.mxu0 0.0
    %301 = vmatprep.subr.mxu0 0.0
    %302 = vmatpush1.xpose.msra.mxu0 0.0
    %303 = vmatprep.subr.mxu0 0.0
    %304 = vmatpush1.xpose.msra.mxu0 0.0
    %305 = vmatprep.subr.mxu0 0.0
    %306 = vmatpush1.xpose.msra.mxu0 0.0
    %307 = vmatprep.subr.mxu0 0.0
    %308 = vmatpush1.xpose.msra.mxu0 0.0
    %309 = vmatprep.subr.mxu0 0.0
    %310 = vmatpush1.xpose.msra.mxu0 0.0
    %311 = vmatprep.subr.mxu0 0.0
    %312 = vmatpush1.xpose.msra.mxu0 0.0
    %313 = vmatprep.subr.mxu0 0.0
    %314 = vmatpush1.xpose.msra.mxu0 0.0
    %315 = vmatprep.subr.mxu0 0.0
    %316 = vmatpush1.xpose.msra.mxu0 0.0
    %317 = vmatprep.subr.mxu0 0.0
    %318 = vmatpush1.xpose.msra.mxu0 0.0
    %319 = vmatprep.subr.mxu0 0.0
    %320 = vmatpush1.xpose.msra.mxu0 0.0
    %321 = vmatprep.subr.mxu0 0.0
    %322 = vmatpush1.xpose.msra.mxu0 0.0
    %323 = vmatprep.subr.mxu0 0.0
    %324 = vmatpush1.xpose.msra.mxu0 0.0
    %325 = vmatprep.subr.mxu0 0.0
    %326 = vmatpush1.xpose.msra.mxu0 0.0
    %327 = vmatprep.subr.mxu0 0.0
    %328 = vmatpush1.xpose.msra.mxu0 0.0
    %329 = vmatprep.subr.mxu0 0.0
    %330 = vmatpush1.xpose.msra.mxu0 0.0
    %331 = vmatprep.subr.mxu0 0.0
    %332 = vmatpush1.xpose.msra.mxu0 0.0
    %333 = vmatprep.subr.mxu0 0.0
    %334 = vmatpush1.xpose.msra.mxu0 0.0
    %335 = vmatprep.subr.mxu0 0.0
    %336 = vmatpush1.xpose.msra.mxu0 0.0
    %337 = vmatprep.subr.mxu0 0.0
    %338 = vmatpush1.xpose.msra.mxu0 0.0
    %339 = vmatprep.subr.mxu0 0.0
    %340 = vmatpush1.xpose.msra.mxu0 0.0
    %341 = vmatprep.subr.mxu0 0.0
    %342 = vmatpush1.xpose.msra.mxu0 0.0
    %343 = vmatprep.subr.mxu0 0.0
    %344 = vmatpush1.xpose.msra.mxu0 0.0
    %345 = vmatprep.subr.mxu0 0.0
    %346 = vmatpush1.xpose.msra.mxu0 0.0
    %347 = vmatprep.subr.mxu0 0.0
    %348 = vmatpush1.xpose.msra.mxu0 0.0
    %349 = vmatprep.subr.mxu0 0.0
    %350 = vmatpush1.xpose.msra.mxu0 0.0
    %351 = vmatprep.subr.mxu0 0.0
    %352 = vmatpush1.xpose.msra.mxu0 0.0
    %353 = vmatprep.mubr.f32.mxu0 0.0
    %354 = vmatmul.mubr.f32.gmra.mrb[0].mxu0 %v281
    %v355 = vpop.f32.mrb[0].mxu0
    %v356 = vadd.f32 %v91, %v355
    %v357 = vpop.f32.mrb[0].mxu0
    %358 = vmatprep.mubr.f32.mxu0 0.0
    %359 = vmatmul.mubr.f32.gmra.mrb[0].mxu0 %v283
    %v360 = vpop.f32.mrb[0].mxu0
    %v361 = vadd.f32 %v92, %v360
    %v362 = vpop.f32.mrb[0].mxu0
    %363 = vdwg.mxu0
    %364 = vrot.lane.b32.xlu0 %v182, 96
    %v365 = vpop.permute.xlu0 %364
    %366 = vrot.lane.b32.xlu0 %v184, 96
    %v367 = vpop.permute.xlu0 %366
    %v368 = vsel %vm193, %v182, 0
    %v370 = vsel %vm193, %v184, 0
    %v372 = vsel %vm193, %v365, 0
    %v374 = vsel %vm193, %v367, 0
    %376 = vmatprep.subr.mxu0 0.0
    %377 = vmatpush1.xpose.msra.mxu0 %v372
    %378 = vmatprep.subr.mxu0 0.0
    %379 = vmatpush1.xpose.msra.mxu0 %v374
    %380 = vmatprep.subr.mxu0 0.0
    %381 = vmatpush1.xpose.msra.mxu0 0.0
    %382 = vmatprep.subr.mxu0 0.0
    %383 = vmatpush1.xpose.msra.mxu0 0.0
    %384 = vmatprep.subr.mxu0 0.0
    %385 = vmatpush1.xpose.msra.mxu0 0.0
    %386 = vmatprep.subr.mxu0 0.0
    %387 = vmatpush1.xpose.msra.mxu0 0.0
    %388 = vmatprep.subr.mxu0 0.0
    %389 = vmatpush1.xpose.msra.mxu0 0.0
    %390 = vmatprep.subr.mxu0 0.0
    %391 = vmatpush1.xpose.msra.mxu0 0.0
    %392 = vmatprep.subr.mxu0 0.0
    %393 = vmatpush1.xpose.msra.mxu0 0.0
    %394 = vmatprep.subr.mxu0 0.0
    %395 = vmatpush1.xpose.msra.mxu0 0.0
    %396 = vmatprep.subr.mxu0 0.0
    %397 = vmatpush1.xpose.msra.mxu0 0.0
    %398 = vmatprep.subr.mxu0 0.0
    %399 = vmatpush1.xpose.msra.mxu0 0.0
    %400 = vmatprep.subr.mxu0 0.0
    %401 = vmatpush1.xpose.msra.mxu0 0.0
    %402 = vmatprep.subr.mxu0 0.0
    %403 = vmatpush1.xpose.msra.mxu0 0.0
    %404 = vmatprep.subr.mxu0 0.0
    %405 = vmatpush1.xpose.msra.mxu0 0.0
    %406 = vmatprep.subr.mxu0 0.0
    %407 = vmatpush1.xpose.msra.mxu0 0.0
    %408 = vmatprep.subr.mxu0 0.0
    %409 = vmatpush1.xpose.msra.mxu0 0.0
    %410 = vmatprep.subr.mxu0 0.0
    %411 = vmatpush1.xpose.msra.mxu0 0.0
    %412 = vmatprep.subr.mxu0 0.0
    %413 = vmatpush1.xpose.msra.mxu0 0.0
    %414 = vmatprep.subr.mxu0 0.0
    %415 = vmatpush1.xpose.msra.mxu0 0.0
    %416 = vmatprep.subr.mxu0 0.0
    %417 = vmatpush1.xpose.msra.mxu0 0.0
    %418 = vmatprep.subr.mxu0 0.0
    %419 = vmatpush1.xpose.msra.mxu0 0.0
    %420 = vmatprep.subr.mxu0 0.0
    %421 = vmatpush1.xpose.msra.mxu0 0.0
    %422 = vmatprep.subr.mxu0 0.0
    %423 = vmatpush1.xpose.msra.mxu0 0.0
    %424 = vmatprep.subr.mxu0 0.0
    %425 = vmatpush1.xpose.msra.mxu0 0.0
    %426 = vmatprep.subr.mxu0 0.0
    %427 = vmatpush1.xpose.msra.mxu0 0.0
    %428 = vmatprep.subr.mxu0 0.0
    %429 = vmatpush1.xpose.msra.mxu0 0.0
    %430 = vmatprep.subr.mxu0 0.0
    %431 = vmatpush1.xpose.msra.mxu0 0.0
    %432 = vmatprep.subr.mxu0 0.0
    %433 = vmatpush1.xpose.msra.mxu0 0.0
    %434 = vmatprep.subr.mxu0 0.0
    %435 = vmatpush1.xpose.msra.mxu0 0.0
    %436 = vmatprep.subr.mxu0 0.0
    %437 = vmatpush1.xpose.msra.mxu0 0.0
    %438 = vmatprep.subr.mxu0 0.0
    %439 = vmatpush1.xpose.msra.mxu0 0.0
    %440 = vmatprep.mubr.f32.mxu0 0.0
    %441 = vmatmul.mubr.f32.gmra.mrb[0].mxu0 %v368
    %v442 = vpop.f32.mrb[0].mxu0
    %v443 = vadd.f32 %v91, %v442
    %v444 = vpop.f32.mrb[0].mxu0
    %445 = vmatprep.mubr.f32.mxu0 0.0
    %446 = vmatmul.mubr.f32.gmra.mrb[0].mxu0 %v370
    %v447 = vpop.f32.mrb[0].mxu0
    %v448 = vadd.f32 %v92, %v447
    %v449 = vpop.f32.mrb[0].mxu0
    %450 = vdwg.mxu0
    %451 = vrot.lane.b32.xlu0 %v186, 96
    %v452 = vpop.permute.xlu0 %451
    %453 = vrot.lane.b32.xlu0 %v188, 96
    %v454 = vpop.permute.xlu0 %453
    %v455 = vsel %vm193, %v186, 0
    %v457 = vsel %vm193, %v188, 0
    %v459 = vsel %vm193, %v452, 0
    %v461 = vsel %vm193, %v454, 0
    %463 = vmatprep.subr.mxu0 0.0
    %464 = vmatpush1.xpose.msra.mxu0 %v459
    %465 = vmatprep.subr.mxu0 0.0
    %466 = vmatpush1.xpose.msra.mxu0 %v461
    %467 = vmatprep.subr.mxu0 0.0
    %468 = vmatpush1.xpose.msra.mxu0 0.0
    %469 = vmatprep.subr.mxu0 0.0
    %470 = vmatpush1.xpose.msra.mxu0 0.0
    %471 = vmatprep.subr.mxu0 0.0
    %472 = vmatpush1.xpose.msra.mxu0 0.0
    %473 = vmatprep.subr.mxu0 0.0
    %474 = vmatpush1.xpose.msra.mxu0 0.0
    %475 = vmatprep.subr.mxu0 0.0
    %476 = vmatpush1.xpose.msra.mxu0 0.0
    %477 = vmatprep.subr.mxu0 0.0
    %478 = vmatpush1.xpose.msra.mxu0 0.0
    %479 = vmatprep.subr.mxu0 0.0
    %480 = vmatpush1.xpose.msra.mxu0 0.0
    %481 = vmatprep.subr.mxu0 0.0
    %482 = vmatpush1.xpose.msra.mxu0 0.0
    %483 = vmatprep.subr.mxu0 0.0
    %484 = vmatpush1.xpose.msra.mxu0 0.0
    %485 = vmatprep.subr.mxu0 0.0
    %486 = vmatpush1.xpose.msra.mxu0 0.0
    %487 = vmatprep.subr.mxu0 0.0
    %488 = vmatpush1.xpose.msra.mxu0 0.0
    %489 = vmatprep.subr.mxu0 0.0
    %490 = vmatpush1.xpose.msra.mxu0 0.0
    %491 = vmatprep.subr.mxu0 0.0
    %492 = vmatpush1.xpose.msra.mxu0 0.0
    %493 = vmatprep.subr.mxu0 0.0
    %494 = vmatpush1.xpose.msra.mxu0 0.0
    %495 = vmatprep.subr.mxu0 0.0
    %496 = vmatpush1.xpose.msra.mxu0 0.0
    %497 = vmatprep.subr.mxu0 0.0
    %498 = vmatpush1.xpose.msra.mxu0 0.0
    %499 = vmatprep.subr.mxu0 0.0
    %500 = vmatpush1.xpose.msra.mxu0 0.0
    %501 = vmatprep.subr.mxu0 0.0
    %502 = vmatpush1.xpose.msra.mxu0 0.0
    %503 = vmatprep.subr.mxu0 0.0
    %504 = vmatpush1.xpose.msra.mxu0 0.0
    %505 = vmatprep.subr.mxu0 0.0
    %506 = vmatpush1.xpose.msra.mxu0 0.0
    %507 = vmatprep.subr.mxu0 0.0
    %508 = vmatpush1.xpose.msra.mxu0 0.0
    %509 = vmatprep.subr.mxu0 0.0
    %510 = vmatpush1.xpose.msra.mxu0 0.0
    %511 = vmatprep.subr.mxu0 0.0
    %512 = vmatpush1.xpose.msra.mxu0 0.0
    %513 = vmatprep.subr.mxu0 0.0
    %514 = vmatpush1.xpose.msra.mxu0 0.0
    %515 = vmatprep.subr.mxu0 0.0
    %516 = vmatpush1.xpose.msra.mxu0 0.0
    %517 = vmatprep.subr.mxu0 0.0
    %518 = vmatpush1.xpose.msra.mxu0 0.0
    %519 = vmatprep.subr.mxu0 0.0
    %520 = vmatpush1.xpose.msra.mxu0 0.0
    %521 = vmatprep.subr.mxu0 0.0
    %522 = vmatpush1.xpose.msra.mxu0 0.0
    %523 = vmatprep.subr.mxu0 0.0
    %524 = vmatpush1.xpose.msra.mxu0 0.0
    %525 = vmatprep.subr.mxu0 0.0
    %526 = vmatpush1.xpose.msra.mxu0 0.0
    %527 = vmatprep.mubr.f32.mxu0 0.0
    %528 = vmatmul.mubr.f32.gmra.mrb[0].mxu0 %v455
    %v529 = vpop.f32.mrb[0].mxu0
    %v530 = vadd.f32 %v91, %v529
    %v531 = vpop.f32.mrb[0].mxu0
    %532 = vmatprep.mubr.f32.mxu0 0.0
    %533 = vmatmul.mubr.f32.gmra.mrb[0].mxu0 %v457
    %v534 = vpop.f32.mrb[0].mxu0
    %v535 = vadd.f32 %v92, %v534
    %v536 = vpop.f32.mrb[0].mxu0
    %537 = vdwg.mxu0
    %vm538 = vcmask 130048
    %v539 = vsel %vm538, %v269, -inf
    %540 = vmax.xlane.f32.xlu0 %v539
    %v541 = vpop.xlane.xlu0 %540
    %v542 = vsel %vm538, %v274, -inf
    %543 = vmax.xlane.f32.xlu0 %v542
    %v544 = vpop.xlane.xlu0 %543
    %v545 = vsel %vm538, %v356, -inf
    %546 = vmax.xlane.f32.xlu0 %v545
    %v547 = vpop.xlane.xlu0 %546
    %v548 = vsel %vm538, %v361, -inf
    %549 = vmax.xlane.f32.xlu0 %v548
    %v550 = vpop.xlane.xlu0 %549
    %v551 = vsel %vm538, %v443, -inf
    %552 = vmax.xlane.f32.xlu0 %v551
    %v553 = vpop.xlane.xlu0 %552
    %v554 = vsel %vm538, %v448, -inf
    %555 = vmax.xlane.f32.xlu0 %v554
    %v556 = vpop.xlane.xlu0 %555
    %v557 = vsel %vm538, %v530, -inf
    %558 = vmax.xlane.f32.xlu0 %v557
    %v559 = vpop.xlane.xlu0 %558
    %v560 = vsel %vm538, %v535, -inf
    %561 = vmax.xlane.f32.xlu0 %v560
    %v562 = vpop.xlane.xlu0 %561
    %v563 = vsub.f32 %v269, %v541
    %v564 = vsub.f32 %v274, %v544
    %v565 = vsub.f32 %v356, %v547
    %v566 = vsub.f32 %v361, %v550
    %v567 = vsub.f32 %v443, %v553
    %v568 = vsub.f32 %v448, %v556
    %v569 = vsub.f32 %v530, %v559
    %v570 = vsub.f32 %v535, %v562
    %v571 = vmul.f32 %v563, 1.442695
    %v572 = vpow.pop %v571
    %v573 = vmul.f32 %v564, 1.442695
    %v574 = vpow.pop %v573
    %v575 = vmul.f32 %v565, 1.442695
    %v576 = vpow.pop %v575
    %v577 = vmul.f32 %v566, 1.442695
    %v578 = vpow.pop %v577
    %v579 = vmul.f32 %v567, 1.442695
    %v580 = vpow.pop %v579
    %v581 = vmul.f32 %v568, 1.442695
    %v582 = vpow.pop %v581
    %v583 = vmul.f32 %v569, 1.442695
    %v584 = vpow.pop %v583
    %v585 = vmul.f32 %v570, 1.442695
    %v586 = vpow.pop %v585
    %v587 = vsel %vm538, %v572, 0.0
    %588 = vadd.xlane.f32.xlu0 %v587
    %v589 = vpop.xlane.xlu0 %588
    %v590 = vsel %vm538, %v574, 0.0
    %591 = vadd.xlane.f32.xlu0 %v590
    %v592 = vpop.xlane.xlu0 %591
    %v593 = vsel %vm538, %v576, 0.0
    %594 = vadd.xlane.f32.xlu0 %v593
    %v595 = vpop.xlane.xlu0 %594
    %v596 = vsel %vm538, %v578, 0.0
    %597 = vadd.xlane.f32.xlu0 %v596
    %v598 = vpop.xlane.xlu0 %597
    %v599 = vsel %vm538, %v580, 0.0
    %600 = vadd.xlane.f32.xlu0 %v599
    %v601 = vpop.xlane.xlu0 %600
    %v602 = vsel %vm538, %v582, 0.0
    %603 = vadd.xlane.f32.xlu0 %v602
    %v604 = vpop.xlane.xlu0 %603
    %v605 = vsel %vm538, %v584, 0.0
    %606 = vadd.xlane.f32.xlu0 %v605
    %v607 = vpop.xlane.xlu0 %606
    %v608 = vsel %vm538, %v586, 0.0
    %609 = vadd.xlane.f32.xlu0 %v608
    %v610 = vpop.xlane.xlu0 %609
    %v611 = vrcp.pop %v589
    %v612 = vrcp.pop %v592
    %v613 = vrcp.pop %v595
    %v614 = vrcp.pop %v598
    %v615 = vrcp.pop %v601
    %v616 = vrcp.pop %v604
    %v617 = vrcp.pop %v607
    %v618 = vrcp.pop %v610
    %v619 = vmul.f32 %v572, %v611
    %v620 = vmul.f32 %v574, %v612
    %v621 = vmul.f32 %v576, %v613
    %v622 = vmul.f32 %v578, %v614
    %v623 = vmul.f32 %v580, %v615
    %v624 = vmul.f32 %v582, %v616
    %v625 = vmul.f32 %v584, %v617
    %v626 = vmul.f32 %v586, %v618
    %627 = vrot.lane.b32.xlu0 %v167, 64
    %v628 = vpop.permute.xlu0 %627
    %629 = vrot.lane.b32.xlu0 %v172, 64
    %v630 = vpop.permute.xlu0 %629
    %v634 = vsel %vm538, %v619, 0
    %v637 = vsel %vm538, %v620, 0
    %639 = vmatprep.subr.mxu0 0.0
    %640 = vmatpush1.msra.mxu0 %v628
    %641 = vmatprep.subr.mxu0 0.0
    %642 = vmatpush1.msra.mxu0 %v630
    %643 = vmatprep.subr.mxu0 0.0
    %644 = vmatpush1.msra.mxu0 0.0
    %645 = vmatprep.subr.mxu0 0.0
    %646 = vmatpush1.msra.mxu0 0.0
    %647 = vmatprep.subr.mxu0 0.0
    %648 = vmatpush1.msra.mxu0 0.0
    %649 = vmatprep.subr.mxu0 0.0
    %650 = vmatpush1.msra.mxu0 0.0
    %651 = vmatprep.subr.mxu0 0.0
    %652 = vmatpush1.msra.mxu0 0.0
    %653 = vmatprep.subr.mxu0 0.0
    %654 = vmatpush1.msra.mxu0 0.0
    %655 = vmatprep.subr.mxu0 0.0
    %656 = vmatpush1.msra.mxu0 0.0
    %657 = vmatprep.subr.mxu0 0.0
    %658 = vmatpush1.msra.mxu0 0.0
    %659 = vmatprep.subr.mxu0 0.0
    %660 = vmatpush1.msra.mxu0 0.0
    %661 = vmatprep.subr.mxu0 0.0
    %662 = vmatpush1.msra.mxu0 0.0
    %663 = vmatprep.subr.mxu0 0.0
    %664 = vmatpush1.msra.mxu0 0.0
    %665 = vmatprep.subr.mxu0 0.0
    %666 = vmatpush1.msra.mxu0 0.0
    %667 = vmatprep.subr.mxu0 0.0
    %668 = vmatpush1.msra.mxu0 0.0
    %669 = vmatprep.subr.mxu0 0.0
    %670 = vmatpush1.msra.mxu0 0.0
    %671 = vmatprep.subr.mxu0 0.0
    %672 = vmatpush1.msra.mxu0 0.0
    %673 = vmatprep.subr.mxu0 0.0
    %674 = vmatpush1.msra.mxu0 0.0
    %675 = vmatprep.subr.mxu0 0.0
    %676 = vmatpush1.msra.mxu0 0.0
    %677 = vmatprep.subr.mxu0 0.0
    %678 = vmatpush1.msra.mxu0 0.0
    %679 = vmatprep.subr.mxu0 0.0
    %680 = vmatpush1.msra.mxu0 0.0
    %681 = vmatprep.subr.mxu0 0.0
    %682 = vmatpush1.msra.mxu0 0.0
    %683 = vmatprep.subr.mxu0 0.0
    %684 = vmatpush1.msra.mxu0 0.0
    %685 = vmatprep.subr.mxu0 0.0
    %686 = vmatpush1.msra.mxu0 0.0
    %687 = vmatprep.subr.mxu0 0.0
    %688 = vmatpush1.msra.mxu0 0.0
    %689 = vmatprep.subr.mxu0 0.0
    %690 = vmatpush1.msra.mxu0 0.0
    %691 = vmatprep.subr.mxu0 0.0
    %692 = vmatpush1.msra.mxu0 0.0
    %693 = vmatprep.subr.mxu0 0.0
    %694 = vmatpush1.msra.mxu0 0.0
    %695 = vmatprep.subr.mxu0 0.0
    %696 = vmatpush1.msra.mxu0 0.0
    %697 = vmatprep.subr.mxu0 0.0
    %698 = vmatpush1.msra.mxu0 0.0
    %699 = vmatprep.subr.mxu0 0.0
    %700 = vmatpush1.msra.mxu0 0.0
    %701 = vmatprep.subr.mxu0 0.0
    %702 = vmatpush1.msra.mxu0 0.0
    %703 = vmatprep.mubr.f32.mxu0 0.0
    %704 = vmatmul.mubr.f32.gmra.mrb[0].mxu0 %v634
    %v705 = vpop.f32.mrb[0].mxu0
    %v706 = vadd.f32 0.0, %v705
    %v707 = vpop.f32.mrb[0].mxu0
    %708 = vmatprep.mubr.f32.mxu0 0.0
    %709 = vmatmul.mubr.f32.gmra.mrb[0].mxu0 %v637
    %v710 = vpop.f32.mrb[0].mxu0
    %v711 = vadd.f32 0.0, %v710
    %v712 = vpop.f32.mrb[0].mxu0
    %713 = vdwg.mxu0
    %714 = vrot.lane.b32.xlu0 %v178, 64
    %v715 = vpop.permute.xlu0 %714
    %716 = vrot.lane.b32.xlu0 %v180, 64
    %v717 = vpop.permute.xlu0 %716
    %v721 = vsel %vm538, %v621, 0
    %v724 = vsel %vm538, %v622, 0
    %726 = vmatprep.subr.mxu0 0.0
    %727 = vmatpush1.msra.mxu0 %v715
    %728 = vmatprep.subr.mxu0 0.0
    %729 = vmatpush1.msra.mxu0 %v717
    %730 = vmatprep.subr.mxu0 0.0
    %731 = vmatpush1.msra.mxu0 0.0
    %732 = vmatprep.subr.mxu0 0.0
    %733 = vmatpush1.msra.mxu0 0.0
    %734 = vmatprep.subr.mxu0 0.0
    %735 = vmatpush1.msra.mxu0 0.0
    %736 = vmatprep.subr.mxu0 0.0
    %737 = vmatpush1.msra.mxu0 0.0
    %738 = vmatprep.subr.mxu0 0.0
    %739 = vmatpush1.msra.mxu0 0.0
    %740 = vmatprep.subr.mxu0 0.0
    %741 = vmatpush1.msra.mxu0 0.0
    %742 = vmatprep.subr.mxu0 0.0
    %743 = vmatpush1.msra.mxu0 0.0
    %744 = vmatprep.subr.mxu0 0.0
    %745 = vmatpush1.msra.mxu0 0.0
    %746 = vmatprep.subr.mxu0 0.0
    %747 = vmatpush1.msra.mxu0 0.0
    %748 = vmatprep.subr.mxu0 0.0
    %749 = vmatpush1.msra.mxu0 0.0
    %750 = vmatprep.subr.mxu0 0.0
    %751 = vmatpush1.msra.mxu0 0.0
    %752 = vmatprep.subr.mxu0 0.0
    %753 = vmatpush1.msra.mxu0 0.0
    %754 = vmatprep.subr.mxu0 0.0
    %755 = vmatpush1.msra.mxu0 0.0
    %756 = vmatprep.subr.mxu0 0.0
    %757 = vmatpush1.msra.mxu0 0.0
    %758 = vmatprep.subr.mxu0 0.0
    %759 = vmatpush1.msra.mxu0 0.0
    %760 = vmatprep.subr.mxu0 0.0
    %761 = vmatpush1.msra.mxu0 0.0
    %762 = vmatprep.subr.mxu0 0.0
    %763 = vmatpush1.msra.mxu0 0.0
    %764 = vmatprep.subr.mxu0 0.0
    %765 = vmatpush1.msra.mxu0 0.0
    %766 = vmatprep.subr.mxu0 0.0
    %767 = vmatpush1.msra.mxu0 0.0
    %768 = vmatprep.subr.mxu0 0.0
    %769 = vmatpush1.msra.mxu0 0.0
    %770 = vmatprep.subr.mxu0 0.0
    %771 = vmatpush1.msra.mxu0 0.0
    %772 = vmatprep.subr.mxu0 0.0
    %773 = vmatpush1.msra.mxu0 0.0
    %774 = vmatprep.subr.mxu0 0.0
    %775 = vmatpush1.msra.mxu0 0.0
    %776 = vmatprep.subr.mxu0 0.0
    %777 = vmatpush1.msra.mxu0 0.0
    %778 = vmatprep.subr.mxu0 0.0
    %779 = vmatpush1.msra.mxu0 0.0
    %780 = vmatprep.subr.mxu0 0.0
    %781 = vmatpush1.msra.mxu0 0.0
    %782 = vmatprep.subr.mxu0 0.0
    %783 = vmatpush1.msra.mxu0 0.0
    %784 = vmatprep.subr.mxu0 0.0
    %785 = vmatpush1.msra.mxu0 0.0
    %786 = vmatprep.subr.mxu0 0.0
    %787 = vmatpush1.msra.mxu0 0.0
    %788 = vmatprep.subr.mxu0 0.0
    %789 = vmatpush1.msra.mxu0 0.0
    %790 = vmatprep.mubr.f32.mxu0 0.0
    %791 = vmatmul.mubr.f32.gmra.mrb[0].mxu0 %v721
    %v792 = vpop.f32.mrb[0].mxu0
    %v793 = vadd.f32 0.0, %v792
    %v794 = vpop.f32.mrb[0].mxu0
    %795 = vmatprep.mubr.f32.mxu0 0.0
    %796 = vmatmul.mubr.f32.gmra.mrb[0].mxu0 %v724
    %v797 = vpop.f32.mrb[0].mxu0
    %v798 = vadd.f32 0.0, %v797
    %v799 = vpop.f32.mrb[0].mxu0
    %800 = vdwg.mxu0
    %801 = vrot.lane.b32.xlu0 %v182, 64
    %v802 = vpop.permute.xlu0 %801
    %803 = vrot.lane.b32.xlu0 %v184, 64
    %v804 = vpop.permute.xlu0 %803
    %v808 = vsel %vm538, %v623, 0
    %v811 = vsel %vm538, %v624, 0
    %813 = vmatprep.subr.mxu0 0.0
    %814 = vmatpush1.msra.mxu0 %v802
    %815 = vmatprep.subr.mxu0 0.0
    %816 = vmatpush1.msra.mxu0 %v804
    %817 = vmatprep.subr.mxu0 0.0
    %818 = vmatpush1.msra.mxu0 0.0
    %819 = vmatprep.subr.mxu0 0.0
    %820 = vmatpush1.msra.mxu0 0.0
    %821 = vmatprep.subr.mxu0 0.0
    %822 = vmatpush1.msra.mxu0 0.0
    %823 = vmatprep.subr.mxu0 0.0
    %824 = vmatpush1.msra.mxu0 0.0
    %825 = vmatprep.subr.mxu0 0.0
    %826 = vmatpush1.msra.mxu0 0.0
    %827 = vmatprep.subr.mxu0 0.0
    %828 = vmatpush1.msra.mxu0 0.0
    %829 = vmatprep.subr.mxu0 0.0
    %830 = vmatpush1.msra.mxu0 0.0
    %831 = vmatprep.subr.mxu0 0.0
    %832 = vmatpush1.msra.mxu0 0.0
    %833 = vmatprep.subr.mxu0 0.0
    %834 = vmatpush1.msra.mxu0 0.0
    %835 = vmatprep.subr.mxu0 0.0
    %836 = vmatpush1.msra.mxu0 0.0
    %837 = vmatprep.subr.mxu0 0.0
    %838 = vmatpush1.msra.mxu0 0.0
    %839 = vmatprep.subr.mxu0 0.0
    %840 = vmatpush1.msra.mxu0 0.0
    %841 = vmatprep.subr.mxu0 0.0
    %842 = vmatpush1.msra.mxu0 0.0
    %843 = vmatprep.subr.mxu0 0.0
    %844 = vmatpush1.msra.mxu0 0.0
    %845 = vmatprep.subr.mxu0 0.0
    %846 = vmatpush1.msra.mxu0 0.0
    %847 = vmatprep.subr.mxu0 0.0
    %848 = vmatpush1.msra.mxu0 0.0
    %849 = vmatprep.subr.mxu0 0.0
    %850 = vmatpush1.msra.mxu0 0.0
    %851 = vmatprep.subr.mxu0 0.0
    %852 = vmatpush1.msra.mxu0 0.0
    %853 = vmatprep.subr.mxu0 0.0
    %854 = vmatpush1.msra.mxu0 0.0
    %855 = vmatprep.subr.mxu0 0.0
    %856 = vmatpush1.msra.mxu0 0.0
    %857 = vmatprep.subr.mxu0 0.0
    %858 = vmatpush1.msra.mxu0 0.0
    %859 = vmatprep.subr.mxu0 0.0
    %860 = vmatpush1.msra.mxu0 0.0
    %861 = vmatprep.subr.mxu0 0.0
    %862 = vmatpush1.msra.mxu0 0.0
    %863 = vmatprep.subr.mxu0 0.0
    %864 = vmatpush1.msra.mxu0 0.0
    %865 = vmatprep.subr.mxu0 0.0
    %866 = vmatpush1.msra.mxu0 0.0
    %867 = vmatprep.subr.mxu0 0.0
    %868 = vmatpush1.msra.mxu0 0.0
    %869 = vmatprep.subr.mxu0 0.0
    %870 = vmatpush1.msra.mxu0 0.0
    %871 = vmatprep.subr.mxu0 0.0
    %872 = vmatpush1.msra.mxu0 0.0
    %873 = vmatprep.subr.mxu0 0.0
    %874 = vmatpush1.msra.mxu0 0.0
    %875 = vmatprep.subr.mxu0 0.0
    %876 = vmatpush1.msra.mxu0 0.0
    %877 = vmatprep.mubr.f32.mxu0 0.0
    %878 = vmatmul.mubr.f32.gmra.mrb[0].mxu0 %v808
    %v879 = vpop.f32.mrb[0].mxu0
    %v880 = vadd.f32 0.0, %v879
    %v881 = vpop.f32.mrb[0].mxu0
    %882 = vmatprep.mubr.f32.mxu0 0.0
    %883 = vmatmul.mubr.f32.gmra.mrb[0].mxu0 %v811
    %v884 = vpop.f32.mrb[0].mxu0
    %v885 = vadd.f32 0.0, %v884
    %v886 = vpop.f32.mrb[0].mxu0
    %887 = vdwg.mxu0
    %888 = vrot.lane.b32.xlu0 %v186, 64
    %v889 = vpop.permute.xlu0 %888
    %890 = vrot.lane.b32.xlu0 %v188, 64
    %v891 = vpop.permute.xlu0 %890
    %v895 = vsel %vm538, %v625, 0
    %v898 = vsel %vm538, %v626, 0
    %900 = vmatprep.subr.mxu0 0.0
    %901 = vmatpush1.msra.mxu0 %v889
    %902 = vmatprep.subr.mxu0 0.0
    %903 = vmatpush1.msra.mxu0 %v891
    %904 = vmatprep.subr.mxu0 0.0
    %905 = vmatpush1.msra.mxu0 0.0
    %906 = vmatprep.subr.mxu0 0.0
    %907 = vmatpush1.msra.mxu0 0.0
    %908 = vmatprep.subr.mxu0 0.0
    %909 = vmatpush1.msra.mxu0 0.0
    %910 = vmatprep.subr.mxu0 0.0
    %911 = vmatpush1.msra.mxu0 0.0
    %912 = vmatprep.subr.mxu0 0.0
    %913 = vmatpush1.msra.mxu0 0.0
    %914 = vmatprep.subr.mxu0 0.0
    %915 = vmatpush1.msra.mxu0 0.0
    %916 = vmatprep.subr.mxu0 0.0
    %917 = vmatpush1.msra.mxu0 0.0
    %918 = vmatprep.subr.mxu0 0.0
    %919 = vmatpush1.msra.mxu0 0.0
    %920 = vmatprep.subr.mxu0 0.0
    %921 = vmatpush1.msra.mxu0 0.0
    %922 = vmatprep.subr.mxu0 0.0
    %923 = vmatpush1.msra.mxu0 0.0
    %924 = vmatprep.subr.mxu0 0.0
    %925 = vmatpush1.msra.mxu0 0.0
    %926 = vmatprep.subr.mxu0 0.0
    %927 = vmatpush1.msra.mxu0 0.0
    %928 = vmatprep.subr.mxu0 0.0
    %929 = vmatpush1.msra.mxu0 0.0
    %930 = vmatprep.subr.mxu0 0.0
    %931 = vmatpush1.msra.mxu0 0.0
    %932 = vmatprep.subr.mxu0 0.0
    %933 = vmatpush1.msra.mxu0 0.0
    %934 = vmatprep.subr.mxu0 0.0
    %935 = vmatpush1.msra.mxu0 0.0
    %936 = vmatprep.subr.mxu0 0.0
    %937 = vmatpush1.msra.mxu0 0.0
    %938 = vmatprep.subr.mxu0 0.0
    %939 = vmatpush1.msra.mxu0 0.0
    %940 = vmatprep.subr.mxu0 0.0
    %941 = vmatpush1.msra.mxu0 0.0
    %942 = vmatprep.subr.mxu0 0.0
    %943 = vmatpush1.msra.mxu0 0.0
    %944 = vmatprep.subr.mxu0 0.0
    %945 = vmatpush1.msra.mxu0 0.0
    %946 = vmatprep.subr.mxu0 0.0
    %947 = vmatpush1.msra.mxu0 0.0
    %948 = vmatprep.subr.mxu0 0.0
    %949 = vmatpush1.msra.mxu0 0.0
    %950 = vmatprep.subr.mxu0 0.0
    %951 = vmatpush1.msra.mxu0 0.0
    %952 = vmatprep.subr.mxu0 0.0
    %953 = vmatpush1.msra.mxu0 0.0
    %954 = vmatprep.subr.mxu0 0.0
    %955 = vmatpush1.msra.mxu0 0.0
    %956 = vmatprep.subr.mxu0 0.0
    %957 = vmatpush1.msra.mxu0 0.0
    %958 = vmatprep.subr.mxu0 0.0
    %959 = vmatpush1.msra.mxu0 0.0
    %960 = vmatprep.subr.mxu0 0.0
    %961 = vmatpush1.msra.mxu0 0.0
    %962 = vmatprep.subr.mxu0 0.0
    %963 = vmatpush1.msra.mxu0 0.0
    %964 = vmatprep.mubr.f32.mxu0 0.0
    %965 = vmatmul.mubr.f32.gmra.mrb[0].mxu0 %v895
    %v966 = vpop.f32.mrb[0].mxu0
    %v967 = vadd.f32 0.0, %v966
    %v968 = vpop.f32.mrb[0].mxu0
    %969 = vmatprep.mubr.f32.mxu0 0.0
    %970 = vmatmul.mubr.f32.gmra.mrb[0].mxu0 %v898
    %v971 = vpop.f32.mrb[0].mxu0
    %v972 = vadd.f32 0.0, %v971
    %v973 = vpop.f32.mrb[0].mxu0
    %974 = vdwg.mxu0
    %977 = vrot.lane.b32.xlu0 %v793, 8
    %v978 = vpop.permute.xlu0 %977
    %979 = vrot.lane.b32.xlu0 %v798, 8
    %v980 = vpop.permute.xlu0 %979
    %985 = vrot.lane.b32.xlu0 %v880, 16
    %v986 = vpop.permute.xlu0 %985
    %987 = vrot.lane.b32.xlu0 %v885, 16
    %v988 = vpop.permute.xlu0 %987
    %993 = vrot.lane.b32.xlu0 %v967, 24
    %v994 = vpop.permute.xlu0 %993
    %995 = vrot.lane.b32.xlu0 %v972, 24
    %v996 = vpop.permute.xlu0 %995
    %v999 = vsel %vm193, %v706, %v978
    %v1000 = vsel %vm193, %v711, %v980
    %v1001 = vsel %vm538, %v999, %v986
    %v1002 = vsel %vm538, %v1000, %v988
    %vm1003 = vcmask 195584
    %v1004 = vsel %vm1003, %v1001, %v994
    %v1005 = vsel %vm1003, %v1002, %v996
    %v1007 = vsel %vm93, %v1004, 0
    %v1010 = vsel %vm93, %v1005, 0
    %1012 = vmatprep.subr.mxu0 0.0
    %1013 = vmatpush1.msra.mxu0 %v18
    %1014 = vmatprep.subr.mxu0 0.0
    %1015 = vmatpush1.msra.mxu0 %v19
    %1016 = vmatprep.subr.mxu0 0.0
    %1017 = vmatpush1.msra.mxu0 %v20
    %1018 = vmatprep.subr.mxu0 0.0
    %1019 = vmatpush1.msra.mxu0 %v21
    %1020 = vmatprep.subr.mxu0 0.0
    %1021 = vmatpush1.msra.mxu0 0.0
    %1022 = vmatprep.subr.mxu0 0.0
    %1023 = vmatpush1.msra.mxu0 0.0
    %1024 = vmatprep.subr.mxu0 0.0
    %1025 = vmatpush1.msra.mxu0 0.0
    %1026 = vmatprep.subr.mxu0 0.0
    %1027 = vmatpush1.msra.mxu0 0.0
    %1028 = vmatprep.subr.mxu0 0.0
    %1029 = vmatpush1.msra.mxu0 0.0
    %1030 = vmatprep.subr.mxu0 0.0
    %1031 = vmatpush1.msra.mxu0 0.0
    %1032 = vmatprep.subr.mxu0 0.0
    %1033 = vmatpush1.msra.mxu0 0.0
    %1034 = vmatprep.subr.mxu0 0.0
    %1035 = vmatpush1.msra.mxu0 0.0
    %1036 = vmatprep.subr.mxu0 0.0
    %1037 = vmatpush1.msra.mxu0 0.0
    %1038 = vmatprep.subr.mxu0 0.0
    %1039 = vmatpush1.msra.mxu0 0.0
    %1040 = vmatprep.subr.mxu0 0.0
    %1041 = vmatpush1.msra.mxu0 0.0
    %1042 = vmatprep.subr.mxu0 0.0
    %1043 = vmatpush1.msra.mxu0 0.0
    %1044 = vmatprep.subr.mxu0 0.0
    %1045 = vmatpush1.msra.mxu0 0.0
    %1046 = vmatprep.subr.mxu0 0.0
    %1047 = vmatpush1.msra.mxu0 0.0
    %1048 = vmatprep.subr.mxu0 0.0
    %1049 = vmatpush1.msra.mxu0 0.0
    %1050 = vmatprep.subr.mxu0 0.0
    %1051 = vmatpush1.msra.mxu0 0.0
    %1052 = vmatprep.subr.mxu0 0.0
    %1053 = vmatpush1.msra.mxu0 0.0
    %1054 = vmatprep.subr.mxu0 0.0
    %1055 = vmatpush1.msra.mxu0 0.0
    %1056 = vmatprep.subr.mxu0 0.0
    %1057 = vmatpush1.msra.mxu0 0.0
    %1058 = vmatprep.subr.mxu0 0.0
    %1059 = vmatpush1.msra.mxu0 0.0
    %1060 = vmatprep.subr.mxu0 0.0
    %1061 = vmatpush1.msra.mxu0 0.0
    %1062 = vmatprep.subr.mxu0 0.0
    %1063 = vmatpush1.msra.mxu0 0.0
    %1064 = vmatprep.subr.mxu0 0.0
    %1065 = vmatpush1.msra.mxu0 0.0
    %1066 = vmatprep.subr.mxu0 0.0
    %1067 = vmatpush1.msra.mxu0 0.0
    %1068 = vmatprep.subr.mxu0 0.0
    %1069 = vmatpush1.msra.mxu0 0.0
    %1070 = vmatprep.subr.mxu0 0.0
    %1071 = vmatpush1.msra.mxu0 0.0
    %1072 = vmatprep.subr.mxu0 0.0
    %1073 = vmatpush1.msra.mxu0 0.0
    %1074 = vmatprep.subr.mxu0 0.0
    %1075 = vmatpush1.msra.mxu0 0.0
    %1076 = vmatprep.mubr.f32.mxu0 0.0
    %1077 = vmatmul.mubr.f32.gmra.mrb[0].mxu0 %v1007
    %v1078 = vpop.f32.mrb[0].mxu0
    %v1079 = vadd.f32 %v50, %v1078
    %v1080 = vpop.f32.mrb[0].mxu0
    %1081 = vmatprep.mubr.f32.mxu0 0.0
    %1082 = vmatmul.mubr.f32.gmra.mrb[0].mxu0 %v1010
    %v1083 = vpop.f32.mrb[0].mxu0
    %v1084 = vadd.f32 %v50, %v1083
    %v1085 = vpop.f32.mrb[0].mxu0
    %1086 = vdwg.mxu0
    %v1087 = vadd.f32 %v12, %v1079
    %v1088 = vadd.f32 %v13, %v1084
    %v1089 = vsel %vm93, %v1087, 0.0
    %1090 = vadd.xlane.f32.xlu0 %v1089
    %v1091 = vpop.xlane.xlu0 %1090
    %v1092 = vsel %vm93, %v1088, 0.0
    %1093 = vadd.xlane.f32.xlu0 %v1092
    %v1094 = vpop.xlane.xlu0 %1093
    %v1095 = vrcp.pop 32.0
    %v1096 = vmul.f32 %v1091, %v1095
    %v1097 = vmul.f32 %v1094, %v1095
    %v1098 = vsub.f32 %v1087, %v1096
    %v1099 = vsub.f32 %v1088, %v1097
    %v1100 = vmul.f32 %v1098, %v1098
    %v1101 = vmul.f32 %v1099, %v1099
    %v1102 = vsel %vm93, %v1100, 0.0
    %1103 = vadd.xlane.f32.xlu0 %v1102
    %v1104 = vpop.xlane.xlu0 %1103
    %v1105 = vsel %vm93, %v1101, 0.0
    %1106 = vadd.xlane.f32.xlu0 %v1105
    %v1107 = vpop.xlane.xlu0 %1106
    %v1108 = vmul.f32 %v1104, %v1095
    %v1109 = vmul.f32 %v1107, %v1095
    %v1110 = vadd.f32 %v1108, 1e-05
    %v1111 = vadd.f32 %v1109, 1e-05
    %v1112 = vrsqrt.pop %v1110
    %v1113 = vrsqrt.pop %v1111
    %v1114 = vmul.f32 %v1098, %v1112
    %v1115 = vmul.f32 %v1099, %v1113
    %v1116 = vmul.f32 %v1114, %v62
    %v1117 = vmul.f32 %v1115, %v62
    %v1118 = vadd.f32 %v1116, %v66
    %v1119 = vadd.f32 %v1117, %v66
    %v1121 = vsel %vm93, %v1118, 0
    %v1124 = vsel %vm93, %v1119, 0
    %1126 = vmatprep.subr.mxu0 0.0
    %1127 = vmatpush1.msra.mxu0 %v22
    %1128 = vmatprep.subr.mxu0 0.0
    %1129 = vmatpush1.msra.mxu0 %v23
    %1130 = vmatprep.subr.mxu0 0.0
    %1131 = vmatpush1.msra.mxu0 %v24
    %1132 = vmatprep.subr.mxu0 0.0
    %1133 = vmatpush1.msra.mxu0 %v25
    %1134 = vmatprep.subr.mxu0 0.0
    %1135 = vmatpush1.msra.mxu0 0.0
    %1136 = vmatprep.subr.mxu0 0.0
    %1137 = vmatpush1.msra.mxu0 0.0
    %1138 = vmatprep.subr.mxu0 0.0
    %1139 = vmatpush1.msra.mxu0 0.0
    %1140 = vmatprep.subr.mxu0 0.0
    %1141 = vmatpush1.msra.mxu0 0.0
    %1142 = vmatprep.subr.mxu0 0.0
    %1143 = vmatpush1.msra.mxu0 0.0
    %1144 = vmatprep.subr.mxu0 0.0
    %1145 = vmatpush1.msra.mxu0 0.0
    %1146 = vmatprep.subr.mxu0 0.0
    %1147 = vmatpush1.msra.mxu0 0.0
    %1148 = vmatprep.subr.mxu0 0.0
    %1149 = vmatpush1.msra.mxu0 0.0
    %1150 = vmatprep.subr.mxu0 0.0
    %1151 = vmatpush1.msra.mxu0 0.0
    %1152 = vmatprep.subr.mxu0 0.0
    %1153 = vmatpush1.msra.mxu0 0.0
    %1154 = vmatprep.subr.mxu0 0.0
    %1155 = vmatpush1.msra.mxu0 0.0
    %1156 = vmatprep.subr.mxu0 0.0
    %1157 = vmatpush1.msra.mxu0 0.0
    %1158 = vmatprep.subr.mxu0 0.0
    %1159 = vmatpush1.msra.mxu0 0.0
    %1160 = vmatprep.subr.mxu0 0.0
    %1161 = vmatpush1.msra.mxu0 0.0
    %1162 = vmatprep.subr.mxu0 0.0
    %1163 = vmatpush1.msra.mxu0 0.0
    %1164 = vmatprep.subr.mxu0 0.0
    %1165 = vmatpush1.msra.mxu0 0.0
    %1166 = vmatprep.subr.mxu0 0.0
    %1167 = vmatpush1.msra.mxu0 0.0
    %1168 = vmatprep.subr.mxu0 0.0
    %1169 = vmatpush1.msra.mxu0 0.0
    %1170 = vmatprep.subr.mxu0 0.0
    %1171 = vmatpush1.msra.mxu0 0.0
    %1172 = vmatprep.subr.mxu0 0.0
    %1173 = vmatpush1.msra.mxu0 0.0
    %1174 = vmatprep.subr.mxu0 0.0
    %1175 = vmatpush1.msra.mxu0 0.0
    %1176 = vmatprep.subr.mxu0 0.0
    %1177 = vmatpush1.msra.mxu0 0.0
    %1178 = vmatprep.subr.mxu0 0.0
    %1179 = vmatpush1.msra.mxu0 0.0
    %1180 = vmatprep.subr.mxu0 0.0
    %1181 = vmatpush1.msra.mxu0 0.0
    %1182 = vmatprep.subr.mxu0 0.0
    %1183 = vmatpush1.msra.mxu0 0.0
    %1184 = vmatprep.subr.mxu0 0.0
    %1185 = vmatpush1.msra.mxu0 0.0
    %1186 = vmatprep.subr.mxu0 0.0
    %1187 = vmatpush1.msra.mxu0 0.0
    %1188 = vmatprep.subr.mxu0 0.0
    %1189 = vmatpush1.msra.mxu0 0.0
    %1190 = vmatprep.mubr.f32.mxu0 0.0
    %1191 = vmatmul.mubr.f32.gmra.mrb[0].mxu0 %v1121
    %v1192 = vpop.f32.mrb[0].mxu0
    %v1193 = vadd.f32 %v54, %v1192
    %v1194 = vpop.f32.mrb[0].mxu0
    %1195 = vmatprep.mubr.f32.mxu0 0.0
    %1196 = vmatmul.mubr.f32.gmra.mrb[0].mxu0 %v1124
    %v1197 = vpop.f32.mrb[0].mxu0
    %v1198 = vadd.f32 %v54, %v1197
    %v1199 = vpop.f32.mrb[0].mxu0
    %1200 = vdwg.mxu0
    %v1201 = vmax.f32 %v1193, 0.0
    %v1202 = vmax.f32 %v1198, 0.0
    %vm1203 = vcmask 523264
    %v1205 = vsel %vm1203, %v1201, 0
    %v1208 = vsel %vm1203, %v1202, 0
    %1210 = vmatprep.subr.mxu0 0.0
    %1211 = vmatpush1.msra.mxu0 %v26
    %1212 = vmatprep.subr.mxu0 0.0
    %1213 = vmatpush1.msra.mxu0 %v27
    %1214 = vmatprep.subr.mxu0 0.0
    %1215 = vmatpush1.msra.mxu0 %v28
    %1216 = vmatprep.subr.mxu0 0.0
    %1217 = vmatpush1.msra.mxu0 %v29
    %1218 = vmatprep.subr.mxu0 0.0
    %1219 = vmatpush1.msra.mxu0 %v30
    %1220 = vmatprep.subr.mxu0 0.0
    %1221 = vmatpush1.msra.mxu0 %v31
    %1222 = vmatprep.subr.mxu0 0.0
    %1223 = vmatpush1.msra.mxu0 %v32
    %1224 = vmatprep.subr.mxu0 0.0
    %1225 = vmatpush1.msra.mxu0 %v33
    %1226 = vmatprep.subr.mxu0 0.0
    %1227 = vmatpush1.msra.mxu0 0.0
    %1228 = vmatprep.subr.mxu0 0.0
    %1229 = vmatpush1.msra.mxu0 0.0
    %1230 = vmatprep.subr.mxu0 0.0
    %1231 = vmatpush1.msra.mxu0 0.0
    %1232 = vmatprep.subr.mxu0 0.0
    %1233 = vmatpush1.msra.mxu0 0.0
    %1234 = vmatprep.subr.mxu0 0.0
    %1235 = vmatpush1.msra.mxu0 0.0
    %1236 = vmatprep.subr.mxu0 0.0
    %1237 = vmatpush1.msra.mxu0 0.0
    %1238 = vmatprep.subr.mxu0 0.0
    %1239 = vmatpush1.msra.mxu0 0.0
    %1240 = vmatprep.subr.mxu0 0.0
    %1241 = vmatpush1.msra.mxu0 0.0
    %1242 = vmatprep.subr.mxu0 0.0
    %1243 = vmatpush1.msra.mxu0 0.0
    %1244 = vmatprep.subr.mxu0 0.0
    %1245 = vmatpush1.msra.mxu0 0.0
    %1246 = vmatprep.subr.mxu0 0.0
    %1247 = vmatpush1.msra.mxu0 0.0
    %1248 = vmatprep.subr.mxu0 0.0
    %1249 = vmatpush1.msra.mxu0 0.0
    %1250 = vmatprep.subr.mxu0 0.0
    %1251 = vmatpush1.msra.mxu0 0.0
    %1252 = vmatprep.subr.mxu0 0.0
    %1253 = vmatpush1.msra.mxu0 0.0
    %1254 = vmatprep.subr.mxu0 0.0
    %1255 = vmatpush1.msra.mxu0 0.0
    %1256 = vmatprep.subr.mxu0 0.0
    %1257 = vmatpush1.msra.mxu0 0.0
    %1258 = vmatprep.subr.mxu0 0.0
    %1259 = vmatpush1.msra.mxu0 0.0
    %1260 = vmatprep.subr.mxu0 0.0
    %1261 = vmatpush1.msra.mxu0 0.0
    %1262 = vmatprep.subr.mxu0 0.0
    %1263 = vmatpush1.msra.mxu0 0.0
    %1264 = vmatprep.subr.mxu0 0.0
    %1265 = vmatpush1.msra.mxu0 0.0
    %1266 = vmatprep.subr.mxu0 0.0
    %1267 = vmatpush1.msra.mxu0 0.0
    %1268 = vmatprep.subr.mxu0 0.0
    %1269 = vmatpush1.msra.mxu0 0.0
    %1270 = vmatprep.subr.mxu0 0.0
    %1271 = vmatpush1.msra.mxu0 0.0
    %1272 = vmatprep.subr.mxu0 0.0
    %1273 = vmatpush1.msra.mxu0 0.0
    %1274 = vmatprep.mubr.f32.mxu0 0.0
    %1275 = vmatmul.mubr.f32.gmra.mrb[0].mxu0 %v1205
    %v1276 = vpop.f32.mrb[0].mxu0
    %v1277 = vadd.f32 %v58, %v1276
    %v1278 = vpop.f32.mrb[0].mxu0
    %1279 = vmatprep.mubr.f32.mxu0 0.0
    %1280 = vmatmul.mubr.f32.gmra.mrb[0].mxu0 %v1208
    %v1281 = vpop.f32.mrb[0].mxu0
    %v1282 = vadd.f32 %v58, %v1281
    %v1283 = vpop.f32.mrb[0].mxu0
    %1284 = vdwg.mxu0
    %v1285 = vadd.f32 %v1118, %v1277
    %v1286 = vadd.f32 %v1119, %v1282
    %v1287 = vsel %vm93, %v1285, 0.0
    %1288 = vadd.xlane.f32.xlu0 %v1287
    %v1289 = vpop.xlane.xlu0 %1288
    %v1290 = vsel %vm93, %v1286, 0.0
    %1291 = vadd.xlane.f32.xlu0 %v1290
    %v1292 = vpop.xlane.xlu0 %1291
    %v1293 = vmul.f32 %v1289, %v1095
    %v1294 = vmul.f32 %v1292, %v1095
    %v1295 = vsub.f32 %v1285, %v1293
    %v1296 = vsub.f32 %v1286, %v1294
    %v1297 = vmul.f32 %v1295, %v1295
    %v1298 = vmul.f32 %v1296, %v1296
    %v1299 = vsel %vm93, %v1297, 0.0
    %1300 = vadd.xlane.f32.xlu0 %v1299
    %v1301 = vpop.xlane.xlu0 %1300
    %v1302 = vsel %vm93, %v1298, 0.0
    %1303 = vadd.xlane.f32.xlu0 %v1302
    %v1304 = vpop.xlane.xlu0 %1303
    %v1305 = vmul.f32 %v1301, %v1095
    %v1306 = vmul.f32 %v1304, %v1095
    %v1307 = vadd.f32 %v1305, 1e-05
    %v1308 = vadd.f32 %v1306, 1e-05
    %v1309 = vrsqrt.pop %v1307
    %v1310 = vrsqrt.pop %v1308
    %v1311 = vmul.f32 %v1295, %v1309
    %v1312 = vmul.f32 %v1296, %v1310
    %v1313 = vmul.f32 %v1311, %v70
    %v1314 = vmul.f32 %v1312, %v70
    %v1315 = vadd.f32 %v1313, %v74
    %v1316 = vadd.f32 %v1314, %v74
    %v1318 = vsel %vm93, %v1315, 0
    %v1321 = vsel %vm93, %v1316, 0
    %1323 = vmatprep.subr.mxu0 0.0
    %1324 = vmatpush1.msra.mxu0 %v14
    %1325 = vmatprep.subr.mxu0 0.0
    %1326 = vmatpush1.msra.mxu0 %v15
    %1327 = vmatprep.subr.mxu0 0.0
    %1328 = vmatpush1.msra.mxu0 %v16
    %1329 = vmatprep.subr.mxu0 0.0
    %1330 = vmatpush1.msra.mxu0 %v17
    %1331 = vmatprep.subr.mxu0 0.0
    %1332 = vmatpush1.msra.mxu0 0.0
    %1333 = vmatprep.subr.mxu0 0.0
    %1334 = vmatpush1.msra.mxu0 0.0
    %1335 = vmatprep.subr.mxu0 0.0
    %1336 = vmatpush1.msra.mxu0 0.0
    %1337 = vmatprep.subr.mxu0 0.0
    %1338 = vmatpush1.msra.mxu0 0.0
    %1339 = vmatprep.subr.mxu0 0.0
    %1340 = vmatpush1.msra.mxu0 0.0
    %1341 = vmatprep.subr.mxu0 0.0
    %1342 = vmatpush1.msra.mxu0 0.0
    %1343 = vmatprep.subr.mxu0 0.0
    %1344 = vmatpush1.msra.mxu0 0.0
    %1345 = vmatprep.subr.mxu0 0.0
    %1346 = vmatpush1.msra.mxu0 0.0
    %1347 = vmatprep.subr.mxu0 0.0
    %1348 = vmatpush1.msra.mxu0 0.0
    %1349 = vmatprep.subr.mxu0 0.0
    %1350 = vmatpush1.msra.mxu0 0.0
    %1351 = vmatprep.subr.mxu0 0.0
    %1352 = vmatpush1.msra.mxu0 0.0
    %1353 = vmatprep.subr.mxu0 0.0
    %1354 = vmatpush1.msra.mxu0 0.0
    %1355 = vmatprep.subr.mxu0 0.0
    %1356 = vmatpush1.msra.mxu0 0.0
    %1357 = vmatprep.subr.mxu0 0.0
    %1358 = vmatpush1.msra.mxu0 0.0
    %1359 = vmatprep.subr.mxu0 0.0
    %1360 = vmatpush1.msra.mxu0 0.0
    %1361 = vmatprep.subr.mxu0 0.0
    %1362 = vmatpush1.msra.mxu0 0.0
    %1363 = vmatprep.subr.mxu0 0.0
    %1364 = vmatpush1.msra.mxu0 0.0
    %1365 = vmatprep.subr.mxu0 0.0
    %1366 = vmatpush1.msra.mxu0 0.0
    %1367 = vmatprep.subr.mxu0 0.0
    %1368 = vmatpush1.msra.mxu0 0.0
    %1369 = vmatprep.subr.mxu0 0.0
    %1370 = vmatpush1.msra.mxu0 0.0
    %1371 = vmatprep.subr.mxu0 0.0
    %1372 = vmatpush1.msra.mxu0 0.0
    %1373 = vmatprep.subr.mxu0 0.0
    %1374 = vmatpush1.msra.mxu0 0.0
    %1375 = vmatprep.subr.mxu0 0.0
    %1376 = vmatpush1.msra.mxu0 0.0
    %1377 = vmatprep.subr.mxu0 0.0
    %1378 = vmatpush1.msra.mxu0 0.0
    %1379 = vmatprep.subr.mxu0 0.0
    %1380 = vmatpush1.msra.mxu0 0.0
    %1381 = vmatprep.subr.mxu0 0.0
    %1382 = vmatpush1.msra.mxu0 0.0
    %1383 = vmatprep.subr.mxu0 0.0
    %1384 = vmatpush1.msra.mxu0 0.0
    %1385 = vmatprep.subr.mxu0 0.0
    %1386 = vmatpush1.msra.mxu0 0.0
    %1387 = vmatprep.mubr.f32.mxu0 0.0
    %1388 = vmatmul.mubr.f32.gmra.mrb[0].mxu0 %v1318
    %v1389 = vpop.f32.mrb[0].mxu0
    %v1390 = vadd.f32 %v46, %v1389
    %v1391 = vpop.f32.mrb[0].mxu0
    %1392 = vmatprep.mubr.f32.mxu0 0.0
    %1393 = vmatmul.mubr.f32.gmra.mrb[0].mxu0 %v1321
    %v1394 = vpop.f32.mrb[0].mxu0
    %v1395 = vadd.f32 %v46, %v1394
    %v1396 = vpop.f32.mrb[0].mxu0
    %1397 = vdwg.mxu0
    %1400 = vrot.lane.b32.xlu0 %v1390, 120
    %v1401 = vpop.permute.xlu0 %1400
    %1402 = vrot.lane.b32.xlu0 %v1395, 120
    %v1403 = vpop.permute.xlu0 %1402
    %1404 = vrot.lane.b32.xlu0 %v1390, 112
    %v1405 = vpop.permute.xlu0 %1404
    %1406 = vrot.lane.b32.xlu0 %v1395, 112
    %v1407 = vpop.permute.xlu0 %1406
    %1408 = vrot.lane.b32.xlu0 %v1390, 104
    %v1409 = vpop.permute.xlu0 %1408
    %1410 = vrot.lane.b32.xlu0 %v1395, 104
    %v1411 = vpop.permute.xlu0 %1410
    %1412 = vrot.lane.b32.xlu0 %v1390, 96
    %v1413 = vpop.permute.xlu0 %1412
    %1414 = vrot.lane.b32.xlu0 %v1395, 96
    %v1415 = vpop.permute.xlu0 %1414
    %v1416 = vsel %vm193, %v1390, 0
    %v1418 = vsel %vm193, %v1395, 0
    %v1420 = vsel %vm193, %v1413, 0
    %v1422 = vsel %vm193, %v1415, 0
    %1424 = vmatprep.subr.mxu0 0.0
    %1425 = vmatpush1.xpose.msra.mxu0 %v1420
    %1426 = vmatprep.subr.mxu0 0.0
    %1427 = vmatpush1.xpose.msra.mxu0 %v1422
    %1428 = vmatprep.subr.mxu0 0.0
    %1429 = vmatpush1.xpose.msra.mxu0 0.0
    %1430 = vmatprep.subr.mxu0 0.0
    %1431 = vmatpush1.xpose.msra.mxu0 0.0
    %1432 = vmatprep.subr.mxu0 0.0
    %1433 = vmatpush1.xpose.msra.mxu0 0.0
    %1434 = vmatprep.subr.mxu0 0.0
    %1435 = vmatpush1.xpose.msra.mxu0 0.0
    %1436 = vmatprep.subr.mxu0 0.0
    %1437 = vmatpush1.xpose.msra.mxu0 0.0
    %1438 = vmatprep.subr.mxu0 0.0
    %1439 = vmatpush1.xpose.msra.mxu0 0.0
    %1440 = vmatprep.subr.mxu0 0.0
    %1441 = vmatpush1.xpose.msra.mxu0 0.0
    %1442 = vmatprep.subr.mxu0 0.0
    %1443 = vmatpush1.xpose.msra.mxu0 0.0
    %1444 = vmatprep.subr.mxu0 0.0
    %1445 = vmatpush1.xpose.msra.mxu0 0.0
    %1446 = vmatprep.subr.mxu0 0.0
    %1447 = vmatpush1.xpose.msra.mxu0 0.0
    %1448 = vmatprep.subr.mxu0 0.0
    %1449 = vmatpush1.xpose.msra.mxu0 0.0
    %1450 = vmatprep.subr.mxu0 0.0
    %1451 = vmatpush1.xpose.msra.mxu0 0.0
    %1452 = vmatprep.subr.mxu0 0.0
    %1453 = vmatpush1.xpose.msra.mxu0 0.0
    %1454 = vmatprep.subr.mxu0 0.0
    %1455 = vmatpush1.xpose.msra.mxu0 0.0
    %1456 = vmatprep.subr.mxu0 0.0
    %1457 = vmatpush1.xpose.msra.mxu0 0.0
    %1458 = vmatprep.subr.mxu0 0.0
    %1459 = vmatpush1.xpose.msra.mxu0 0.0
    %1460 = vmatprep.subr.mxu0 0.0
    %1461 = vmatpush1.xpose.msra.mxu0 0.0
    %1462 = vmatprep.subr.mxu0 0.0
    %1463 = vmatpush1.xpose.msra.mxu0 0.0
    %1464 = vmatprep.subr.mxu0 0.0
    %1465 = vmatpush1.xpose.msra.mxu0 0.0
    %1466 = vmatprep.subr.mxu0 0.0
    %1467 = vmatpush1.xpose.msra.mxu0 0.0
    %1468 = vmatprep.subr.mxu0 0.0
    %1469 = vmatpush1.xpose.msra.mxu0 0.0
    %1470 = vmatprep.subr.mxu0 0.0
    %1471 = vmatpush1.xpose.msra.mxu0 0.0
    %1472 = vmatprep.subr.mxu0 0.0
    %1473 = vmatpush1.xpose.msra.mxu0 0.0
    %1474 = vmatprep.subr.mxu0 0.0
    %1475 = vmatpush1.xpose.msra.mxu0 0.0
    %1476 = vmatprep.subr.mxu0 0.0
    %1477 = vmatpush1.xpose.msra.mxu0 0.0
    %1478 = vmatprep.subr.mxu0 0.0
    %1479 = vmatpush1.xpose.msra.mxu0 0.0
    %1480 = vmatprep.subr.mxu0 0.0
    %1481 = vmatpush1.xpose.msra.mxu0 0.0
    %1482 = vmatprep.subr.mxu0 0.0
    %1483 = vmatpush1.xpose.msra.mxu0 0.0
    %1484 = vmatprep.subr.mxu0 0.0
    %1485 = vmatpush1.xpose.msra.mxu0 0.0
    %1486 = vmatprep.subr.mxu0 0.0
    %1487 = vmatpush1.xpose.msra.mxu0 0.0
    %1488 = vmatprep.mubr.f32.mxu0 0.0
    %1489 = vmatmul.mubr.f32.gmra.mrb[0].mxu0 %v1416
    %v1490 = vpop.f32.mrb[0].mxu0
    %v1491 = vadd.f32 %v91, %v1490
    %v1492 = vpop.f32.mrb[0].mxu0
    %1493 = vmatprep.mubr.f32.mxu0 0.0
    %1494 = vmatmul.mubr.f32.gmra.mrb[0].mxu0 %v1418
    %v1495 = vpop.f32.mrb[0].mxu0
    %v1496 = vadd.f32 %v92, %v1495
    %v1497 = vpop.f32.mrb[0].mxu0
    %1498 = vdwg.mxu0
    %1499 = vrot.lane.b32.xlu0 %v1401, 96
    %v1500 = vpop.permute.xlu0 %1499
    %1501 = vrot.lane.b32.xlu0 %v1403, 96
    %v1502 = vpop.permute.xlu0 %1501
    %v1503 = vsel %vm193, %v1401, 0
    %v1505 = vsel %vm193, %v1403, 0
    %v1507 = vsel %vm193, %v1500, 0
    %v1509 = vsel %vm193, %v1502, 0
    %1511 = vmatprep.subr.mxu0 0.0
    %1512 = vmatpush1.xpose.msra.mxu0 %v1507
    %1513 = vmatprep.subr.mxu0 0.0
    %1514 = vmatpush1.xpose.msra.mxu0 %v1509
    %1515 = vmatprep.subr.mxu0 0.0
    %1516 = vmatpush1.xpose.msra.mxu0 0.0
    %1517 = vmatprep.subr.mxu0 0.0
    %1518 = vmatpush1.xpose.msra.mxu0 0.0
    %1519 = vmatprep.subr.mxu0 0.0
    %1520 = vmatpush1.xpose.msra.mxu0 0.0
    %1521 = vmatprep.subr.mxu0 0.0
    %1522 = vmatpush1.xpose.msra.mxu0 0.0
    %1523 = vmatprep.subr.mxu0 0.0
    %1524 = vmatpush1.xpose.msra.mxu0 0.0
    %1525 = vmatprep.subr.mxu0 0.0
    %1526 = vmatpush1.xpose.msra.mxu0 0.0
    %1527 = vmatprep.subr.mxu0 0.0
    %1528 = vmatpush1.xpose.msra.mxu0 0.0
    %1529 = vmatprep.subr.mxu0 0.0
    %1530 = vmatpush1.xpose.msra.mxu0 0.0
    %1531 = vmatprep.subr.mxu0 0.0
    %1532 = vmatpush1.xpose.msra.mxu0 0.0
    %1533 = vmatprep.subr.mxu0 0.0
    %1534 = vmatpush1.xpose.msra.mxu0 0.0
    %1535 = vmatprep.subr.mxu0 0.0
    %1536 = vmatpush1.xpose.msra.mxu0 0.0
    %1537 = vmatprep.subr.mxu0 0.0
    %1538 = vmatpush1.xpose.msra.mxu0 0.0
    %1539 = vmatprep.subr.mxu0 0.0
    %1540 = vmatpush1.xpose.msra.mxu0 0.0
    %1541 = vmatprep.subr.mxu0 0.0
    %1542 = vmatpush1.xpose.msra.mxu0 0.0
    %1543 = vmatprep.subr.mxu0 0.0
    %1544 = vmatpush1.xpose.msra.mxu0 0.0
    %1545 = vmatprep.subr.mxu0 0.0
    %1546 = vmatpush1.xpose.msra.mxu0 0.0
    %1547 = vmatprep.subr.mxu0 0.0
    %1548 = vmatpush1.xpose.msra.mxu0 0.0
    %1549 = vmatprep.subr.mxu0 0.0
    %1550 = vmatpush1.xpose.msra.mxu0 0.0
    %1551 = vmatprep.subr.mxu0 0.0
    %1552 = vmatpush1.xpose.msra.mxu0 0.0
    %1553 = vmatprep.subr.mxu0 0.0
    %1554 = vmatpush1.xpose.msra.mxu0 0.0
    %1555 = vmatprep.subr.mxu0 0.0
    %1556 = vmatpush1.xpose.msra.mxu0 0.0
    %1557 = vmatprep.subr.mxu0 0.0
    %1558 = vmatpush1.xpose.msra.mxu0 0.0
    %1559 = vmatprep.subr.mxu0 0.0
    %1560 = vmatpush1.xpose.msra.mxu0 0.0
    %1561 = vmatprep.subr.mxu0 0.0
    %1562 = vmatpush1.xpose.msra.mxu0 0.0
    %1563 = vmatprep.subr.mxu0 0.0
    %1564 = vmatpush1.xpose.msra.mxu0 0.0
    %1565 = vmatprep.subr.mxu0 0.0
    %1566 = vmatpush1.xpose.msra.mxu0 0.0
    %1567 = vmatprep.subr.mxu0 0.0
    %1568 = vmatpush1.xpose.msra.mxu0 0.0
    %1569 = vmatprep.subr.mxu0 0.0
    %1570 = vmatpush1.xpose.msra.mxu0 0.0
    %1571 = vmatprep.subr.mxu0 0.0
    %1572 = vmatpush1.xpose.msra.mxu0 0.0
    %1573 = vmatprep.subr.mxu0 0.0
    %1574 = vmatpush1.xpose.msra.mxu0 0.0
    %1575 = vmatprep.mubr.f32.mxu0 0.0
    %1576 = vmatmul.mubr.f32.gmra.mrb[0].mxu0 %v1503
    %v1577 = vpop.f32.mrb[0].mxu0
    %v1578 = vadd.f32 %v91, %v1577
    %v1579 = vpop.f32.mrb[0].mxu0
    %1580 = vmatprep.mubr.f32.mxu0 0.0
    %1581 = vmatmul.mubr.f32.gmra.mrb[0].mxu0 %v1505
    %v1582 = vpop.f32.mrb[0].mxu0
    %v1583 = vadd.f32 %v92, %v1582
    %v1584 = vpop.f32.mrb[0].mxu0
    %1585 = vdwg.mxu0
    %1586 = vrot.lane.b32.xlu0 %v1405, 96
    %v1587 = vpop.permute.xlu0 %1586
    %1588 = vrot.lane.b32.xlu0 %v1407, 96
    %v1589 = vpop.permute.xlu0 %1588
    %v1590 = vsel %vm193, %v1405, 0
    %v1592 = vsel %vm193, %v1407, 0
    %v1594 = vsel %vm193, %v1587, 0
    %v1596 = vsel %vm193, %v1589, 0
    %1598 = vmatprep.subr.mxu0 0.0
    %1599 = vmatpush1.xpose.msra.mxu0 %v1594
    %1600 = vmatprep.subr.mxu0 0.0
    %1601 = vmatpush1.xpose.msra.mxu0 %v1596
    %1602 = vmatprep.subr.mxu0 0.0
    %1603 = vmatpush1.xpose.msra.mxu0 0.0
    %1604 = vmatprep.subr.mxu0 0.0
    %1605 = vmatpush1.xpose.msra.mxu0 0.0
    %1606 = vmatprep.subr.mxu0 0.0
    %1607 = vmatpush1.xpose.msra.mxu0 0.0
    %1608 = vmatprep.subr.mxu0 0.0
    %1609 = vmatpush1.xpose.msra.mxu0 0.0
    %1610 = vmatprep.subr.mxu0 0.0
    %1611 = vmatpush1.xpose.msra.mxu0 0.0
    %1612 = vmatprep.subr.mxu0 0.0
    %1613 = vmatpush1.xpose.msra.mxu0 0.0
    %1614 = vmatprep.subr.mxu0 0.0
    %1615 = vmatpush1.xpose.msra.mxu0 0.0
    %1616 = vmatprep.subr.mxu0 0.0
    %1617 = vmatpush1.xpose.msra.mxu0 0.0
    %1618 = vmatprep.subr.mxu0 0.0
    %1619 = vmatpush1.xpose.msra.mxu0 0.0
    %1620 = vmatprep.subr.mxu0 0.0
    %1621 = vmatpush1.xpose.msra.mxu0 0.0
    %1622 = vmatprep.subr.mxu0 0.0
    %1623 = vmatpush1.xpose.msra.mxu0 0.0
    %1624 = vmatprep.subr.mxu0 0.0
    %1625 = vmatpush1.xpose.msra.mxu0 0.0
    %1626 = vmatprep.subr.mxu0 0.0
    %1627 = vmatpush1.xpose.msra.mxu0 0.0
    %1628 = vmatprep.subr.mxu0 0.0
    %1629 = vmatpush1.xpose.msra.mxu0 0.0
    %1630 = vmatprep.subr.mxu0 0.0
    %1631 = vmatpush1.xpose.msra.mxu0 0.0
    %1632 = vmatprep.subr.mxu0 0.0
    %1633 = vmatpush1.xpose.msra.mxu0 0.0
    %1634 = vmatprep.subr.mxu0 0.0
    %1635 = vmatpush1.xpose.msra.mxu0 0.0
    %1636 = vmatprep.subr.mxu0 0.0
    %1637 = vmatpush1.xpose.msra.mxu0 0.0
    %1638 = vmatprep.subr.mxu0 0.0
    %1639 = vmatpush1.xpose.msra.mxu0 0.0
    %1640 = vmatprep.subr.mxu0 0.0
    %1641 = vmatpush1.xpose.msra.mxu0 0.0
    %1642 = vmatprep.subr.mxu0 0.0
    %1643 = vmatpush1.xpose.msra.mxu0 0.0
    %1644 = vmatprep.subr.mxu0 0.0
    %1645 = vmatpush1.xpose.msra.mxu0 0.0
    %1646 = vmatprep.subr.mxu0 0.0
    %1647 = vmatpush1.xpose.msra.mxu0 0.0
    %1648 = vmatprep.subr.mxu0 0.0
    %1649 = vmatpush1.xpose.msra.mxu0 0.0
    %1650 = vmatprep.subr.mxu0 0.0
    %1651 = vmatpush1.xpose.msra.mxu0 0.0
    %1652 = vmatprep.subr.mxu0 0.0
    %1653 = vmatpush1.xpose.msra.mxu0 0.0
    %1654 = vmatprep.subr.mxu0 0.0
    %1655 = vmatpush1.xpose.msra.mxu0 0.0
    %1656 = vmatprep.subr.mxu0 0.0
    %1657 = vmatpush1.xpose.msra.mxu0 0.0
    %1658 = vmatprep.subr.mxu0 0.0
    %1659 = vmatpush1.xpose.msra.mxu0 0.0
    %1660 = vmatprep.subr.mxu0 0.0
    %1661 = vmatpush1.xpose.msra.mxu0 0.0
    %1662 = vmatprep.mubr.f32.mxu0 0.0
    %1663 = vmatmul.mubr.f32.gmra.mrb[0].mxu0 %v1590
    %v1664 = vpop.f32.mrb[0].mxu0
    %v1665 = vadd.f32 %v91, %v1664
    %v1666 = vpop.f32.mrb[0].mxu0
    %1667 = vmatprep.mubr.f32.mxu0 0.0
    %1668 = vmatmul.mubr.f32.gmra.mrb[0].mxu0 %v1592
    %v1669 = vpop.f32.mrb[0].mxu0
    %v1670 = vadd.f32 %v92, %v1669
    %v1671 = vpop.f32.mrb[0].mxu0
    %1672 = vdwg.mxu0
    %1673 = vrot.lane.b32.xlu0 %v1409, 96
    %v1674 = vpop.permute.xlu0 %1673
    %1675 = vrot.lane.b32.xlu0 %v1411, 96
    %v1676 = vpop.permute.xlu0 %1675
    %v1677 = vsel %vm193, %v1409, 0
    %v1679 = vsel %vm193, %v1411, 0
    %v1681 = vsel %vm193, %v1674, 0
    %v1683 = vsel %vm193, %v1676, 0
    %1685 = vmatprep.subr.mxu0 0.0
    %1686 = vmatpush1.xpose.msra.mxu0 %v1681
    %1687 = vmatprep.subr.mxu0 0.0
    %1688 = vmatpush1.xpose.msra.mxu0 %v1683
    %1689 = vmatprep.subr.mxu0 0.0
    %1690 = vmatpush1.xpose.msra.mxu0 0.0
    %1691 = vmatprep.subr.mxu0 0.0
    %1692 = vmatpush1.xpose.msra.mxu0 0.0
    %1693 = vmatprep.subr.mxu0 0.0
    %1694 = vmatpush1.xpose.msra.mxu0 0.0
    %1695 = vmatprep.subr.mxu0 0.0
    %1696 = vmatpush1.xpose.msra.mxu0 0.0
    %1697 = vmatprep.subr.mxu0 0.0
    %1698 = vmatpush1.xpose.msra.mxu0 0.0
    %1699 = vmatprep.subr.mxu0 0.0
    %1700 = vmatpush1.xpose.msra.mxu0 0.0
    %1701 = vmatprep.subr.mxu0 0.0
    %1702 = vmatpush1.xpose.msra.mxu0 0.0
    %1703 = vmatprep.subr.mxu0 0.0
    %1704 = vmatpush1.xpose.msra.mxu0 0.0
    %1705 = vmatprep.subr.mxu0 0.0
    %1706 = vmatpush1.xpose.msra.mxu0 0.0
    %1707 = vmatprep.subr.mxu0 0.0
    %1708 = vmatpush1.xpose.msra.mxu0 0.0
    %1709 = vmatprep.subr.mxu0 0.0
    %1710 = vmatpush1.xpose.msra.mxu0 0.0
    %1711 = vmatprep.subr.mxu0 0.0
    %1712 = vmatpush1.xpose.msra.mxu0 0.0
    %1713 = vmatprep.subr.mxu0 0.0
    %1714 = vmatpush1.xpose.msra.mxu0 0.0
    %1715 = vmatprep.subr.mxu0 0.0
    %1716 = vmatpush1.xpose.msra.mxu0 0.0
    %1717 = vmatprep.subr.mxu0 0.0
    %1718 = vmatpush1.xpose.msra.mxu0 0.0
    %1719 = vmatprep.subr.mxu0 0.0
    %1720 = vmatpush1.xpose.msra.mxu0 0.0
    %1721 = vmatprep.subr.mxu0 0.0
    %1722 = vmatpush1.xpose.msra.mxu0 0.0
    %1723 = vmatprep.subr.mxu0 0.0
    %1724 = vmatpush1.xpose.msra.mxu0 0.0
    %1725 = vmatprep.subr.mxu0 0.0
    %1726 = vmatpush1.xpose.msra.mxu0 0.0
    %1727 = vmatprep.subr.mxu0 0.0
    %1728 = vmatpush1.xpose.msra.mxu0 0.0
    %1729 = vmatprep.subr.mxu0 0.0
    %1730 = vmatpush1.xpose.msra.mxu0 0.0
    %1731 = vmatprep.subr.mxu0 0.0
    %1732 = vmatpush1.xpose.msra.mxu0 0.0
    %1733 = vmatprep.subr.mxu0 0.0
    %1734 = vmatpush1.xpose.msra.mxu0 0.0
    %1735 = vmatprep.subr.mxu0 0.0
    %1736 = vmatpush1.xpose.msra.mxu0 0.0
    %1737 = vmatprep.subr.mxu0 0.0
    %1738 = vmatpush1.xpose.msra.mxu0 0.0
    %1739 = vmatprep.subr.mxu0 0.0
    %1740 = vmatpush1.xpose.msra.mxu0 0.0
    %1741 = vmatprep.subr.mxu0 0.0
    %1742 = vmatpush1.xpose.msra.mxu0 0.0
    %1743 = vmatprep.subr.mxu0 0.0
    %1744 = vmatpush1.xpose.msra.mxu0 0.0
    %1745 = vmatprep.subr.mxu0 0.0
    %1746 = vmatpush1.xpose.msra.mxu0 0.0
    %1747 = vmatprep.subr.mxu0 0.0
    %1748 = vmatpush1.xpose.msra.mxu0 0.0
    %1749 = vmatprep.mubr.f32.mxu0 0.0
    %1750 = vmatmul.mubr.f32.gmra.mrb[0].mxu0 %v1677
    %v1751 = vpop.f32.mrb[0].mxu0
    %v1752 = vadd.f32 %v91, %v1751
    %v1753 = vpop.f32.mrb[0].mxu0
    %1754 = vmatprep.mubr.f32.mxu0 0.0
    %1755 = vmatmul.mubr.f32.gmra.mrb[0].mxu0 %v1679
    %v1756 = vpop.f32.mrb[0].mxu0
    %v1757 = vadd.f32 %v92, %v1756
    %v1758 = vpop.f32.mrb[0].mxu0
    %1759 = vdwg.mxu0
    %v1760 = vsel %vm538, %v1491, -inf
    %1761 = vmax.xlane.f32.xlu0 %v1760
    %v1762 = vpop.xlane.xlu0 %1761
    %v1763 = vsel %vm538, %v1496, -inf
    %1764 = vmax.xlane.f32.xlu0 %v1763
    %v1765 = vpop.xlane.xlu0 %1764
    %v1766 = vsel %vm538, %v1578, -inf
    %1767 = vmax.xlane.f32.xlu0 %v1766
    %v1768 = vpop.xlane.xlu0 %1767
    %v1769 = vsel %vm538, %v1583, -inf
    %1770 = vmax.xlane.f32.xlu0 %v1769
    %v1771 = vpop.xlane.xlu0 %1770
    %v1772 = vsel %vm538, %v1665, -inf
    %1773 = vmax.xlane.f32.xlu0 %v1772
    %v1774 = vpop.xlane.xlu0 %1773
    %v1775 = vsel %vm538, %v1670, -inf
    %1776 = vmax.xlane.f32.xlu0 %v1775
    %v1777 = vpop.xlane.xlu0 %1776
    %v1778 = vsel %vm538, %v1752, -inf
    %1779 = vmax.xlane.f32.xlu0 %v1778
    %v1780 = vpop.xlane.xlu0 %1779
    %v1781 = vsel %vm538, %v1757, -inf
    %1782 = vmax.xlane.f32.xlu0 %v1781
    %v1783 = vpop.xlane.xlu0 %1782
    %v1784 = vsub.f32 %v1491, %v1762
    %v1785 = vsub.f32 %v1496, %v1765
    %v1786 = vsub.f32 %v1578, %v1768
    %v1787 = vsub.f32 %v1583, %v1771
    %v1788 = vsub.f32 %v1665, %v1774
    %v1789 = vsub.f32 %v1670, %v1777
    %v1790 = vsub.f32 %v1752, %v1780
    %v1791 = vsub.f32 %v1757, %v1783
    %v1792 = vmul.f32 %v1784, 1.442695
    %v1793 = vpow.pop %v1792
    %v1794 = vmul.f32 %v1785, 1.442695
    %v1795 = vpow.pop %v1794
    %v1796 = vmul.f32 %v1786, 1.442695
    %v1797 = vpow.pop %v1796
    %v1798 = vmul.f32 %v1787, 1.442695
    %v1799 = vpow.pop %v1798
    %v1800 = vmul.f32 %v1788, 1.442695
    %v1801 = vpow.pop %v1800
    %v1802 = vmul.f32 %v1789, 1.442695
    %v1803 = vpow.pop %v1802
    %v1804 = vmul.f32 %v1790, 1.442695
    %v1805 = vpow.pop %v1804
    %v1806 = vmul.f32 %v1791, 1.442695
    %v1807 = vpow.pop %v1806
    %v1808 = vsel %vm538, %v1793, 0.0
    %1809 = vadd.xlane.f32.xlu0 %v1808
    %v1810 = vpop.xlane.xlu0 %1809
    %v1811 = vsel %vm538, %v1795, 0.0
    %1812 = vadd.xlane.f32.xlu0 %v1811
    %v1813 = vpop.xlane.xlu0 %1812
    %v1814 = vsel %vm538, %v1797, 0.0
    %1815 = vadd.xlane.f32.xlu0 %v1814
    %v1816 = vpop.xlane.xlu0 %1815
    %v1817 = vsel %vm538, %v1799, 0.0
    %1818 = vadd.xlane.f32.xlu0 %v1817
    %v1819 = vpop.xlane.xlu0 %1818
    %v1820 = vsel %vm538, %v1801, 0.0
    %1821 = vadd.xlane.f32.xlu0 %v1820
    %v1822 = vpop.xlane.xlu0 %1821
    %v1823 = vsel %vm538, %v1803, 0.0
    %1824 = vadd.xlane.f32.xlu0 %v1823
    %v1825 = vpop.xlane.xlu0 %1824
    %v1826 = vsel %vm538, %v1805, 0.0
    %1827 = vadd.xlane.f32.xlu0 %v1826
    %v1828 = vpop.xlane.xlu0 %1827
    %v1829 = vsel %vm538, %v1807, 0.0
    %1830 = vadd.xlane.f32.xlu0 %v1829
    %v1831 = vpop.xlane.xlu0 %1830
    %v1832 = vrcp.pop %v1810
    %v1833 = vrcp.pop %v1813
    %v1834 = vrcp.pop %v1816
    %v1835 = vrcp.pop %v1819
    %v1836 = vrcp.pop %v1822
    %v1837 = vrcp.pop %v1825
    %v1838 = vrcp.pop %v1828
    %v1839 = vrcp.pop %v1831
    %v1840 = vmul.f32 %v1793, %v1832
    %v1841 = vmul.f32 %v1795, %v1833
    %v1842 = vmul.f32 %v1797, %v1834
    %v1843 = vmul.f32 %v1799, %v1835
    %v1844 = vmul.f32 %v1801, %v1836
    %v1845 = vmul.f32 %v1803, %v1837
    %v1846 = vmul.f32 %v1805, %v1838
    %v1847 = vmul.f32 %v1807, %v1839
    %1848 = vrot.lane.b32.xlu0 %v1390, 64
    %v1849 = vpop.permute.xlu0 %1848
    %1850 = vrot.lane.b32.xlu0 %v1395, 64
    %v1851 = vpop.permute.xlu0 %1850
    %v1855 = vsel %vm538, %v1840, 0
    %v1858 = vsel %vm538, %v1841, 0
    %1860 = vmatprep.subr.mxu0 0.0
    %1861 = vmatpush1.msra.mxu0 %v1849
    %1862 = vmatprep.subr.mxu0 0.0
    %1863 = vmatpush1.msra.mxu0 %v1851
    %1864 = vmatprep.subr.mxu0 0.0
    %1865 = vmatpush1.msra.mxu0 0.0
    %1866 = vmatprep.subr.mxu0 0.0
    %1867 = vmatpush1.msra.mxu0 0.0
    %1868 = vmatprep.subr.mxu0 0.0
    %1869 = vmatpush1.msra.mxu0 0.0
    %1870 = vmatprep.subr.mxu0 0.0
    %1871 = vmatpush1.msra.mxu0 0.0
    %1872 = vmatprep.subr.mxu0 0.0
    %1873 = vmatpush1.msra.mxu0 0.0
    %1874 = vmatprep.subr.mxu0 0.0
    %1875 = vmatpush1.msra.mxu0 0.0
    %1876 = vmatprep.subr.mxu0 0.0
    %1877 = vmatpush1.msra.mxu0 0.0
    %1878 = vmatprep.subr.mxu0 0.0
    %1879 = vmatpush1.msra.mxu0 0.0
    %1880 = vmatprep.subr.mxu0 0.0
    %1881 = vmatpush1.msra.mxu0 0.0
    %1882 = vmatprep.subr.mxu0 0.0
    %1883 = vmatpush1.msra.mxu0 0.0
    %1884 = vmatprep.subr.mxu0 0.0
    %1885 = vmatpush1.msra.mxu0 0.0
    %1886 = vmatprep.subr.mxu0 0.0
    %1887 = vmatpush1.msra.mxu0 0.0
    %1888 = vmatprep.subr.mxu0 0.0
    %1889 = vmatpush1.msra.mxu0 0.0
    %1890 = vmatprep.subr.mxu0 0.0
    %1891 = vmatpush1.msra.mxu0 0.0
    %1892 = vmatprep.subr.mxu0 0.0
    %1893 = vmatpush1.msra.mxu0 0.0
    %1894 = vmatprep.subr.mxu0 0.0
    %1895 = vmatpush1.msra.mxu0 0.0
    %1896 = vmatprep.subr.mxu0 0.0
    %1897 = vmatpush1.msra.mxu0 0.0
    %1898 = vmatprep.subr.mxu0 0.0
    %1899 = vmatpush1.msra.mxu0 0.0
    %1900 = vmatprep.subr.mxu0 0.0
    %1901 = vmatpush1.msra.mxu0 0.0
    %1902 = vmatprep.subr.mxu0 0.0
    %1903 = vmatpush1.msra.mxu0 0.0
    %1904 = vmatprep.subr.mxu0 0.0
    %1905 = vmatpush1.msra.mxu0 0.0
    %1906 = vmatprep.subr.mxu0 0.0
    %1907 = vmatpush1.msra.mxu0 0.0
    %1908 = vmatprep.subr.mxu0 0.0
    %1909 = vmatpush1.msra.mxu0 0.0
    %1910 = vmatprep.subr.mxu0 0.0
    %1911 = vmatpush1.msra.mxu0 0.0
    %1912 = vmatprep.subr.mxu0 0.0
    %1913 = vmatpush1.msra.mxu0 0.0
    %1914 = vmatprep.subr.mxu0 0.0
    %1915 = vmatpush1.msra.mxu0 0.0
    %1916 = vmatprep.subr.mxu0 0.0
    %1917 = vmatpush1.msra.mxu0 0.0
    %1918 = vmatprep.subr.mxu0 0.0
    %1919 = vmatpush1.msra.mxu0 0.0
    %1920 = vmatprep.subr.mxu0 0.0
    %1921 = vmatpush1.msra.mxu0 0.0
    %1922 = vmatprep.subr.mxu0 0.0
    %1923 = vmatpush1.msra.mxu0 0.0
    %1924 = vmatprep.mubr.f32.mxu0 0.0
    %1925 = vmatmul.mubr.f32.gmra.mrb[0].mxu0 %v1855
    %v1926 = vpop.f32.mrb[0].mxu0
    %v1927 = vadd.f32 0.0, %v1926
    %v1928 = vpop.f32.mrb[0].mxu0
    %1929 = vmatprep.mubr.f32.mxu0 0.0
    %1930 = vmatmul.mubr.f32.gmra.mrb[0].mxu0 %v1858
    %v1931 = vpop.f32.mrb[0].mxu0
    %v1932 = vadd.f32 0.0, %v1931
    %v1933 = vpop.f32.mrb[0].mxu0
    %1934 = vdwg.mxu0
    %1935 = vrot.lane.b32.xlu0 %v1401, 64
    %v1936 = vpop.permute.xlu0 %1935
    %1937 = vrot.lane.b32.xlu0 %v1403, 64
    %v1938 = vpop.permute.xlu0 %1937
    %v1942 = vsel %vm538, %v1842, 0
    %v1945 = vsel %vm538, %v1843, 0
    %1947 = vmatprep.subr.mxu0 0.0
    %1948 = vmatpush1.msra.mxu0 %v1936
    %1949 = vmatprep.subr.mxu0 0.0
    %1950 = vmatpush1.msra.mxu0 %v1938
    %1951 = vmatprep.subr.mxu0 0.0
    %1952 = vmatpush1.msra.mxu0 0.0
    %1953 = vmatprep.subr.mxu0 0.0
    %1954 = vmatpush1.msra.mxu0 0.0
    %1955 = vmatprep.subr.mxu0 0.0
    %1956 = vmatpush1.msra.mxu0 0.0
    %1957 = vmatprep.subr.mxu0 0.0
    %1958 = vmatpush1.msra.mxu0 0.0
    %1959 = vmatprep.subr.mxu0 0.0
    %1960 = vmatpush1.msra.mxu0 0.0
    %1961 = vmatprep.subr.mxu0 0.0
    %1962 = vmatpush1.msra.mxu0 0.0
    %1963 = vmatprep.subr.mxu0 0.0
    %1964 = vmatpush1.msra.mxu0 0.0
    %1965 = vmatprep.subr.mxu0 0.0
    %1966 = vmatpush1.msra.mxu0 0.0
    %1967 = vmatprep.subr.mxu0 0.0
    %1968 = vmatpush1.msra.mxu0 0.0
    %1969 = vmatprep.subr.mxu0 0.0
    %1970 = vmatpush1.msra.mxu0 0.0
    %1971 = vmatprep.subr.mxu0 0.0
    %1972 = vmatpush1.msra.mxu0 0.0
    %1973 = vmatprep.subr.mxu0 0.0
    %1974 = vmatpush1.msra.mxu0 0.0
    %1975 = vmatprep.subr.mxu0 0.0
    %1976 = vmatpush1.msra.mxu0 0.0
    %1977 = vmatprep.subr.mxu0 0.0
    %1978 = vmatpush1.msra.mxu0 0.0
    %1979 = vmatprep.subr.mxu0 0.0
    %1980 = vmatpush1.msra.mxu0 0.0
    %1981 = vmatprep.subr.mxu0 0.0
    %1982 = vmatpush1.msra.mxu0 0.0
    %1983 = vmatprep.subr.mxu0 0.0
    %1984 = vmatpush1.msra.mxu0 0.0
    %1985 = vmatprep.subr.mxu0 0.0
    %1986 = vmatpush1.msra.mxu0 0.0
    %1987 = vmatprep.subr.mxu0 0.0
    %1988 = vmatpush1.msra.mxu0 0.0
    %1989 = vmatprep.subr.mxu0 0.0
    %1990 = vmatpush1.msra.mxu0 0.0
    %1991 = vmatprep.subr.mxu0 0.0
    %1992 = vmatpush1.msra.mxu0 0.0
    %1993 = vmatprep.subr.mxu0 0.0
    %1994 = vmatpush1.msra.mxu0 0.0
    %1995 = vmatprep.subr.mxu0 0.0
    %1996 = vmatpush1.msra.mxu0 0.0
    %1997 = vmatprep.subr.mxu0 0.0
    %1998 = vmatpush1.msra.mxu0 0.0
    %1999 = vmatprep.subr.mxu0 0.0
    %2000 = vmatpush1.msra.mxu0 0.0
    %2001 = vmatprep.subr.mxu0 0.0
    %2002 = vmatpush1.msra.mxu0 0.0
    %2003 = vmatprep.subr.mxu0 0.0
    %2004 = vmatpush1.msra.mxu0 0.0
    %2005 = vmatprep.subr.mxu0 0.0
    %2006 = vmatpush1.msra.mxu0 0.0
    %2007 = vmatprep.subr.mxu0 0.0
    %2008 = vmatpush1.msra.mxu0 0.0
    %2009 = vmatprep.subr.mxu0 0.0
    %2010 = vmatpush1.msra.mxu0 0.0
    %2011 = vmatprep.mubr.f32.mxu0 0.0
    %2012 = vmatmul.mubr.f32.gmra.mrb[0].mxu0 %v1942
    %v2013 = vpop.f32.mrb[0].mxu0
    %v2014 = vadd.f32 0.0, %v2013
    %v2015 = vpop.f32.mrb[0].mxu0
    %2016 = vmatprep.mubr.f32.mxu0 0.0
    %2017 = vmatmul.mubr.f32.gmra.mrb[0].mxu0 %v1945
    %v2018 = vpop.f32.mrb[0].mxu0
    %v2019 = vadd.f32 0.0, %v2018
    %v2020 = vpop.f32.mrb[0].mxu0
    %2021 = vdwg.mxu0
    %2022 = vrot.lane.b32.xlu0 %v1405, 64
    %v2023 = vpop.permute.xlu0 %2022
    %2024 = vrot.lane.b32.xlu0 %v1407, 64
    %v2025 = vpop.permute.xlu0 %2024
    %v2029 = vsel %vm538, %v1844, 0
    %v2032 = vsel %vm538, %v1845, 0
    %2034 = vmatprep.subr.mxu0 0.0
    %2035 = vmatpush1.msra.mxu0 %v2023
    %2036 = vmatprep.subr.mxu0 0.0
    %2037 = vmatpush1.msra.mxu0 %v2025
    %2038 = vmatprep.subr.mxu0 0.0
    %2039 = vmatpush1.msra.mxu0 0.0
    %2040 = vmatprep.subr.mxu0 0.0
    %2041 = vmatpush1.msra.mxu0 0.0
    %2042 = vmatprep.subr.mxu0 0.0
    %2043 = vmatpush1.msra.mxu0 0.0
    %2044 = vmatprep.subr.mxu0 0.0
    %2045 = vmatpush1.msra.mxu0 0.0
    %2046 = vmatprep.subr.mxu0 0.0
    %2047 = vmatpush1.msra.mxu0 0.0
    %2048 = vmatprep.subr.mxu0 0.0
    %2049 = vmatpush1.msra.mxu0 0.0
    %2050 = vmatprep.subr.mxu0 0.0
    %2051 = vmatpush1.msra.mxu0 0.0
    %2052 = vmatprep.subr.mxu0 0.0
    %2053 = vmatpush1.msra.mxu0 0.0
    %2054 = vmatprep.subr.mxu0 0.0
    %2055 = vmatpush1.msra.mxu0 0.0
    %2056 = vmatprep.subr.mxu0 0.0
    %2057 = vmatpush1.msra.mxu0 0.0
    %2058 = vmatprep.subr.mxu0 0.0
    %2059 = vmatpush1.msra.mxu0 0.0
    %2060 = vmatprep.subr.mxu0 0.0
    %2061 = vmatpush1.msra.mxu0 0.0
    %2062 = vmatprep.subr.mxu0 0.0
    %2063 = vmatpush1.msra.mxu0 0.0
    %2064 = vmatprep.subr.mxu0 0.0
    %2065 = vmatpush1.msra.mxu0 0.0
    %2066 = vmatprep.subr.mxu0 0.0
    %2067 = vmatpush1.msra.mxu0 0.0
    %2068 = vmatprep.subr.mxu0 0.0
    %2069 = vmatpush1.msra.mxu0 0.0
    %2070 = vmatprep.subr.mxu0 0.0
    %2071 = vmatpush1.msra.mxu0 0.0
    %2072 = vmatprep.subr.mxu0 0.0
    %2073 = vmatpush1.msra.mxu0 0.0
    %2074 = vmatprep.subr.mxu0 0.0
    %2075 = vmatpush1.msra.mxu0 0.0
    %2076 = vmatprep.subr.mxu0 0.0
    %2077 = vmatpush1.msra.mxu0 0.0
    %2078 = vmatprep.subr.mxu0 0.0
    %2079 = vmatpush1.msra.mxu0 0.0
    %2080 = vmatprep.subr.mxu0 0.0
    %2081 = vmatpush1.msra.mxu0 0.0
    %2082 = vmatprep.subr.mxu0 0.0
    %2083 = vmatpush1.msra.mxu0 0.0
    %2084 = vmatprep.subr.mxu0 0.0
    %2085 = vmatpush1.msra.mxu0 0.0
    %2086 = vmatprep.subr.mxu0 0.0
    %2087 = vmatpush1.msra.mxu0 0.0
    %2088 = vmatprep.subr.mxu0 0.0
    %2089 = vmatpush1.msra.mxu0 0.0
    %2090 = vmatprep.subr.mxu0 0.0
    %2091 = vmatpush1.msra.mxu0 0.0
    %2092 = vmatprep.subr.mxu0 0.0
    %2093 = vmatpush1.msra.mxu0 0.0
    %2094 = vmatprep.subr.mxu0 0.0
    %2095 = vmatpush1.msra.mxu0 0.0
    %2096 = vmatprep.subr.mxu0 0.0
    %2097 = vmatpush1.msra.mxu0 0.0
    %2098 = vmatprep.mubr.f32.mxu0 0.0
    %2099 = vmatmul.mubr.f32.gmra.mrb[0].mxu0 %v2029
    %v2100 = vpop.f32.mrb[0].mxu0
    %v2101 = vadd.f32 0.0, %v2100
    %v2102 = vpop.f32.mrb[0].mxu0
    %2103 = vmatprep.mubr.f32.mxu0 0.0
    %2104 = vmatmul.mubr.f32.gmra.mrb[0].mxu0 %v2032
    %v2105 = vpop.f32.mrb[0].mxu0
    %v2106 = vadd.f32 0.0, %v2105
    %v2107 = vpop.f32.mrb[0].mxu0
    %2108 = vdwg.mxu0
    %2109 = vrot.lane.b32.xlu0 %v1409, 64
    %v2110 = vpop.permute.xlu0 %2109
    %2111 = vrot.lane.b32.xlu0 %v1411, 64
    %v2112 = vpop.permute.xlu0 %2111
    %v2116 = vsel %vm538, %v1846, 0
    %v2119 = vsel %vm538, %v1847, 0
    %2121 = vmatprep.subr.mxu0 0.0
    %2122 = vmatpush1.msra.mxu0 %v2110
    %2123 = vmatprep.subr.mxu0 0.0
    %2124 = vmatpush1.msra.mxu0 %v2112
    %2125 = vmatprep.subr.mxu0 0.0
    %2126 = vmatpush1.msra.mxu0 0.0
    %2127 = vmatprep.subr.mxu0 0.0
    %2128 = vmatpush1.msra.mxu0 0.0
    %2129 = vmatprep.subr.mxu0 0.0
    %2130 = vmatpush1.msra.mxu0 0.0
    %2131 = vmatprep.subr.mxu0 0.0
    %2132 = vmatpush1.msra.mxu0 0.0
    %2133 = vmatprep.subr.mxu0 0.0
    %2134 = vmatpush1.msra.mxu0 0.0
    %2135 = vmatprep.subr.mxu0 0.0
    %2136 = vmatpush1.msra.mxu0 0.0
    %2137 = vmatprep.subr.mxu0 0.0
    %2138 = vmatpush1.msra.mxu0 0.0
    %2139 = vmatprep.subr.mxu0 0.0
    %2140 = vmatpush1.msra.mxu0 0.0
    %2141 = vmatprep.subr.mxu0 0.0
    %2142 = vmatpush1.msra.mxu0 0.0
    %2143 = vmatprep.subr.mxu0 0.0
    %2144 = vmatpush1.msra.mxu0 0.0
    %2145 = vmatprep.subr.mxu0 0.0
    %2146 = vmatpush1.msra.mxu0 0.0
    %2147 = vmatprep.subr.mxu0 0.0
    %2148 = vmatpush1.msra.mxu0 0.0
    %2149 = vmatprep.subr.mxu0 0.0
    %2150 = vmatpush1.msra.mxu0 0.0
    %2151 = vmatprep.subr.mxu0 0.0
    %2152 = vmatpush1.msra.mxu0 0.0
    %2153 = vmatprep.subr.mxu0 0.0
    %2154 = vmatpush1.msra.mxu0 0.0
    %2155 = vmatprep.subr.mxu0 0.0
    %2156 = vmatpush1.msra.mxu0 0.0
    %2157 = vmatprep.subr.mxu0 0.0
    %2158 = vmatpush1.msra.mxu0 0.0
    %2159 = vmatprep.subr.mxu0 0.0
    %2160 = vmatpush1.msra.mxu0 0.0
    %2161 = vmatprep.subr.mxu0 0.0
    %2162 = vmatpush1.msra.mxu0 0.0
    %2163 = vmatprep.subr.mxu0 0.0
    %2164 = vmatpush1.msra.mxu0 0.0
    %2165 = vmatprep.subr.mxu0 0.0
    %2166 = vmatpush1.msra.mxu0 0.0
    %2167 = vmatprep.subr.mxu0 0.0
    %2168 = vmatpush1.msra.mxu0 0.0
    %2169 = vmatprep.subr.mxu0 0.0
    %2170 = vmatpush1.msra.mxu0 0.0
    %2171 = vmatprep.subr.mxu0 0.0
    %2172 = vmatpush1.msra.mxu0 0.0
    %2173 = vmatprep.subr.mxu0 0.0
    %2174 = vmatpush1.msra.mxu0 0.0
    %2175 = vmatprep.subr.mxu0 0.0
    %2176 = vmatpush1.msra.mxu0 0.0
    %2177 = vmatprep.subr.mxu0 0.0
    %2178 = vmatpush1.msra.mxu0 0.0
    %2179 = vmatprep.subr.mxu0 0.0
    %2180 = vmatpush1.msra.mxu0 0.0
    %2181 = vmatprep.subr.mxu0 0.0
    %2182 = vmatpush1.msra.mxu0 0.0
    %2183 = vmatprep.subr.mxu0 0.0
    %2184 = vmatpush1.msra.mxu0 0.0
    %2185 = vmatprep.mubr.f32.mxu0 0.0
    %2186 = vmatmul.mubr.f32.gmra.mrb[0].mxu0 %v2116
    %v2187 = vpop.f32.mrb[0].mxu0
    %v2188 = vadd.f32 0.0, %v2187
    %v2189 = vpop.f32.mrb[0].mxu0
    %2190 = vmatprep.mubr.f32.mxu0 0.0
    %2191 = vmatmul.mubr.f32.gmra.mrb[0].mxu0 %v2119
    %v2192 = vpop.f32.mrb[0].mxu0
    %v2193 = vadd.f32 0.0, %v2192
    %v2194 = vpop.f32.mrb[0].mxu0
    %2195 = vdwg.mxu0
    %2198 = vrot.lane.b32.xlu0 %v2014, 8
    %v2199 = vpop.permute.xlu0 %2198
    %2200 = vrot.lane.b32.xlu0 %v2019, 8
    %v2201 = vpop.permute.xlu0 %2200
    %2206 = vrot.lane.b32.xlu0 %v2101, 16
    %v2207 = vpop.permute.xlu0 %2206
    %2208 = vrot.lane.b32.xlu0 %v2106, 16
    %v2209 = vpop.permute.xlu0 %2208
    %2214 = vrot.lane.b32.xlu0 %v2188, 24
    %v2215 = vpop.permute.xlu0 %2214
    %2216 = vrot.lane.b32.xlu0 %v2193, 24
    %v2217 = vpop.permute.xlu0 %2216
    %v2220 = vsel %vm193, %v1927, %v2199
    %v2221 = vsel %vm193, %v1932, %v2201
    %v2222 = vsel %vm538, %v2220, %v2207
    %v2223 = vsel %vm538, %v2221, %v2209
    %v2224 = vsel %vm1003, %v2222, %v2215
    %v2225 = vsel %vm1003, %v2223, %v2217
    %v2227 = vsel %vm93, %v2224, 0
    %v2230 = vsel %vm93, %v2225, 0
    %2232 = vmatprep.subr.mxu0 0.0
    %2233 = vmatpush1.msra.mxu0 %v18
    %2234 = vmatprep.subr.mxu0 0.0
    %2235 = vmatpush1.msra.mxu0 %v19
    %2236 = vmatprep.subr.mxu0 0.0
    %2237 = vmatpush1.msra.mxu0 %v20
    %2238 = vmatprep.subr.mxu0 0.0
    %2239 = vmatpush1.msra.mxu0 %v21
    %2240 = vmatprep.subr.mxu0 0.0
    %2241 = vmatpush1.msra.mxu0 0.0
    %2242 = vmatprep.subr.mxu0 0.0
    %2243 = vmatpush1.msra.mxu0 0.0
    %2244 = vmatprep.subr.mxu0 0.0
    %2245 = vmatpush1.msra.mxu0 0.0
    %2246 = vmatprep.subr.mxu0 0.0
    %2247 = vmatpush1.msra.mxu0 0.0
    %2248 = vmatprep.subr.mxu0 0.0
    %2249 = vmatpush1.msra.mxu0 0.0
    %2250 = vmatprep.subr.mxu0 0.0
    %2251 = vmatpush1.msra.mxu0 0.0
    %2252 = vmatprep.subr.mxu0 0.0
    %2253 = vmatpush1.msra.mxu0 0.0
    %2254 = vmatprep.subr.mxu0 0.0
    %2255 = vmatpush1.msra.mxu0 0.0
    %2256 = vmatprep.subr.mxu0 0.0
    %2257 = vmatpush1.msra.mxu0 0.0
    %2258 = vmatprep.subr.mxu0 0.0
    %2259 = vmatpush1.msra.mxu0 0.0
    %2260 = vmatprep.subr.mxu0 0.0
    %2261 = vmatpush1.msra.mxu0 0.0
    %2262 = vmatprep.subr.mxu0 0.0
    %2263 = vmatpush1.msra.mxu0 0.0
    %2264 = vmatprep.subr.mxu0 0.0
    %2265 = vmatpush1.msra.mxu0 0.0
    %2266 = vmatprep.subr.mxu0 0.0
    %2267 = vmatpush1.msra.mxu0 0.0
    %2268 = vmatprep.subr.mxu0 0.0
    %2269 = vmatpush1.msra.mxu0 0.0
    %2270 = vmatprep.subr.mxu0 0.0
    %2271 = vmatpush1.msra.mxu0 0.0
    %2272 = vmatprep.subr.mxu0 0.0
    %2273 = vmatpush1.msra.mxu0 0.0
    %2274 = vmatprep.subr.mxu0 0.0
    %2275 = vmatpush1.msra.mxu0 0.0
    %2276 = vmatprep.subr.mxu0 0.0
    %2277 = vmatpush1.msra.mxu0 0.0
    %2278 = vmatprep.subr.mxu0 0.0
    %2279 = vmatpush1.msra.mxu0 0.0
    %2280 = vmatprep.subr.mxu0 0.0
    %2281 = vmatpush1.msra.mxu0 0.0
    %2282 = vmatprep.subr.mxu0 0.0
    %2283 = vmatpush1.msra.mxu0 0.0
    %2284 = vmatprep.subr.mxu0 0.0
    %2285 = vmatpush1.msra.mxu0 0.0
    %2286 = vmatprep.subr.mxu0 0.0
    %2287 = vmatpush1.msra.mxu0 0.0
    %2288 = vmatprep.subr.mxu0 0.0
    %2289 = vmatpush1.msra.mxu0 0.0
    %2290 = vmatprep.subr.mxu0 0.0
    %2291 = vmatpush1.msra.mxu0 0.0
    %2292 = vmatprep.subr.mxu0 0.0
    %2293 = vmatpush1.msra.mxu0 0.0
    %2294 = vmatprep.subr.mxu0 0.0
    %2295 = vmatpush1.msra.mxu0 0.0
    %2296 = vmatprep.mubr.f32.mxu0 0.0
    %2297 = vmatmul.mubr.f32.gmra.mrb[0].mxu0 %v2227
    %v2298 = vpop.f32.mrb[0].mxu0
    %v2299 = vadd.f32 %v50, %v2298
    %v2300 = vpop.f32.mrb[0].mxu0
    %2301 = vmatprep.mubr.f32.mxu0 0.0
    %2302 = vmatmul.mubr.f32.gmra.mrb[0].mxu0 %v2230
    %v2303 = vpop.f32.mrb[0].mxu0
    %v2304 = vadd.f32 %v50, %v2303
    %v2305 = vpop.f32.mrb[0].mxu0
    %2306 = vdwg.mxu0
    %v2307 = vadd.f32 %v1315, %v2299
    %v2308 = vadd.f32 %v1316, %v2304
    %v2309 = vsel %vm93, %v2307, 0.0
    %2310 = vadd.xlane.f32.xlu0 %v2309
    %v2311 = vpop.xlane.xlu0 %2310
    %v2312 = vsel %vm93, %v2308, 0.0
    %2313 = vadd.xlane.f32.xlu0 %v2312
    %v2314 = vpop.xlane.xlu0 %2313
    %v2315 = vmul.f32 %v2311, %v1095
    %v2316 = vmul.f32 %v2314, %v1095
    %v2317 = vsub.f32 %v2307, %v2315
    %v2318 = vsub.f32 %v2308, %v2316
    %v2319 = vmul.f32 %v2317, %v2317
    %v2320 = vmul.f32 %v2318, %v2318
    %v2321 = vsel %vm93, %v2319, 0.0
    %2322 = vadd.xlane.f32.xlu0 %v2321
    %v2323 = vpop.xlane.xlu0 %2322
    %v2324 = vsel %vm93, %v2320, 0.0
    %2325 = vadd.xlane.f32.xlu0 %v2324
    %v2326 = vpop.xlane.xlu0 %2325
    %v2327 = vmul.f32 %v2323, %v1095
    %v2328 = vmul.f32 %v2326, %v1095
    %v2329 = vadd.f32 %v2327, 1e-05
    %v2330 = vadd.f32 %v2328, 1e-05
    %v2331 = vrsqrt.pop %v2329
    %v2332 = vrsqrt.pop %v2330
    %v2333 = vmul.f32 %v2317, %v2331
    %v2334 = vmul.f32 %v2318, %v2332
    %v2335 = vmul.f32 %v2333, %v62
    %v2336 = vmul.f32 %v2334, %v62
    %v2337 = vadd.f32 %v2335, %v66
    %v2338 = vadd.f32 %v2336, %v66
    %v2340 = vsel %vm93, %v2337, 0
    %v2343 = vsel %vm93, %v2338, 0
    %2345 = vmatprep.subr.mxu0 0.0
    %2346 = vmatpush1.msra.mxu0 %v22
    %2347 = vmatprep.subr.mxu0 0.0
    %2348 = vmatpush1.msra.mxu0 %v23
    %2349 = vmatprep.subr.mxu0 0.0
    %2350 = vmatpush1.msra.mxu0 %v24
    %2351 = vmatprep.subr.mxu0 0.0
    %2352 = vmatpush1.msra.mxu0 %v25
    %2353 = vmatprep.subr.mxu0 0.0
    %2354 = vmatpush1.msra.mxu0 0.0
    %2355 = vmatprep.subr.mxu0 0.0
    %2356 = vmatpush1.msra.mxu0 0.0
    %2357 = vmatprep.subr.mxu0 0.0
    %2358 = vmatpush1.msra.mxu0 0.0
    %2359 = vmatprep.subr.mxu0 0.0
    %2360 = vmatpush1.msra.mxu0 0.0
    %2361 = vmatprep.subr.mxu0 0.0
    %2362 = vmatpush1.msra.mxu0 0.0
    %2363 = vmatprep.subr.mxu0 0.0
    %2364 = vmatpush1.msra.mxu0 0.0
    %2365 = vmatprep.subr.mxu0 0.0
    %2366 = vmatpush1.msra.mxu0 0.0
    %2367 = vmatprep.subr.mxu0 0.0
    %2368 = vmatpush1.msra.mxu0 0.0
    %2369 = vmatprep.subr.mxu0 0.0
    %2370 = vmatpush1.msra.mxu0 0.0
    %2371 = vmatprep.subr.mxu0 0.0
    %2372 = vmatpush1.msra.mxu0 0.0
    %2373 = vmatprep.subr.mxu0 0.0
    %2374 = vmatpush1.msra.mxu0 0.0
    %2375 = vmatprep.subr.mxu0 0.0
    %2376 = vmatpush1.msra.mxu0 0.0
    %2377 = vmatprep.subr.mxu0 0.0
    %2378 = vmatpush1.msra.mxu0 0.0
    %2379 = vmatprep.subr.mxu0 0.0
    %2380 = vmatpush1.msra.mxu0 0.0
    %2381 = vmatprep.subr.mxu0 0.0
    %2382 = vmatpush1.msra.mxu0 0.0
    %2383 = vmatprep.subr.mxu0 0.0
    %2384 = vmatpush1.msra.mxu0 0.0
    %2385 = vmatprep.subr.mxu0 0.0
    %2386 = vmatpush1.msra.mxu0 0.0
    %2387 = vmatprep.subr.mxu0 0.0
    %2388 = vmatpush1.msra.mxu0 0.0
    %2389 = vmatprep.subr.mxu0 0.0
    %2390 = vmatpush1.msra.mxu0 0.0
    %2391 = vmatprep.subr.mxu0 0.0
    %2392 = vmatpush1.msra.mxu0 0.0
    %2393 = vmatprep.subr.mxu0 0.0
    %2394 = vmatpush1.msra.mxu0 0.0
    %2395 = vmatprep.subr.mxu0 0.0
    %2396 = vmatpush1.msra.mxu0 0.0
    %2397 = vmatprep.subr.mxu0 0.0
    %2398 = vmatpush1.msra.mxu0 0.0
    %2399 = vmatprep.subr.mxu0 0.0
    %2400 = vmatpush1.msra.mxu0 0.0
    %2401 = vmatprep.subr.mxu0 0.0
    %2402 = vmatpush1.msra.mxu0 0.0
    %2403 = vmatprep.subr.mxu0 0.0
    %2404 = vmatpush1.msra.mxu0 0.0
    %2405 = vmatprep.subr.mxu0 0.0
    %2406 = vmatpush1.msra.mxu0 0.0
    %2407 = vmatprep.subr.mxu0 0.0
    %2408 = vmatpush1.msra.mxu0 0.0
    %2409 = vmatprep.mubr.f32.mxu0 0.0
    %2410 = vmatmul.mubr.f32.gmra.mrb[0].mxu0 %v2340
    %v2411 = vpop.f32.mrb[0].mxu0
    %v2412 = vadd.f32 %v54, %v2411
    %v2413 = vpop.f32.mrb[0].mxu0
    %2414 = vmatprep.mubr.f32.mxu0 0.0
    %2415 = vmatmul.mubr.f32.gmra.mrb[0].mxu0 %v2343
    %v2416 = vpop.f32.mrb[0].mxu0
    %v2417 = vadd.f32 %v54, %v2416
    %v2418 = vpop.f32.mrb[0].mxu0
    %2419 = vdwg.mxu0
    %v2420 = vmax.f32 %v2412, 0.0
    %v2421 = vmax.f32 %v2417, 0.0
    %v2423 = vsel %vm1203, %v2420, 0
    %v2426 = vsel %vm1203, %v2421, 0
    %2428 = vmatprep.subr.mxu0 0.0
    %2429 = vmatpush1.msra.mxu0 %v26
    %2430 = vmatprep.subr.mxu0 0.0
    %2431 = vmatpush1.msra.mxu0 %v27
    %2432 = vmatprep.subr.mxu0 0.0
    %2433 = vmatpush1.msra.mxu0 %v28
    %2434 = vmatprep.subr.mxu0 0.0
    %2435 = vmatpush1.msra.mxu0 %v29
    %2436 = vmatprep.subr.mxu0 0.0
    %2437 = vmatpush1.msra.mxu0 %v30
    %2438 = vmatprep.subr.mxu0 0.0
    %2439 = vmatpush1.msra.mxu0 %v31
    %2440 = vmatprep.subr.mxu0 0.0
    %2441 = vmatpush1.msra.mxu0 %v32
    %2442 = vmatprep.subr.mxu0 0.0
    %2443 = vmatpush1.msra.mxu0 %v33
    %2444 = vmatprep.subr.mxu0 0.0
    %2445 = vmatpush1.msra.mxu0 0.0
    %2446 = vmatprep.subr.mxu0 0.0
    %2447 = vmatpush1.msra.mxu0 0.0
    %2448 = vmatprep.subr.mxu0 0.0
    %2449 = vmatpush1.msra.mxu0 0.0
    %2450 = vmatprep.subr.mxu0 0.0
    %2451 = vmatpush1.msra.mxu0 0.0
    %2452 = vmatprep.subr.mxu0 0.0
    %2453 = vmatpush1.msra.mxu0 0.0
    %2454 = vmatprep.subr.mxu0 0.0
    %2455 = vmatpush1.msra.mxu0 0.0
    %2456 = vmatprep.subr.mxu0 0.0
    %2457 = vmatpush1.msra.mxu0 0.0
    %2458 = vmatprep.subr.mxu0 0.0
    %2459 = vmatpush1.msra.mxu0 0.0
    %2460 = vmatprep.subr.mxu0 0.0
    %2461 = vmatpush1.msra.mxu0 0.0
    %2462 = vmatprep.subr.mxu0 0.0
    %2463 = vmatpush1.msra.mxu0 0.0
    %2464 = vmatprep.subr.mxu0 0.0
    %2465 = vmatpush1.msra.mxu0 0.0
    %2466 = vmatprep.subr.mxu0 0.0
    %2467 = vmatpush1.msra.mxu0 0.0
    %2468 = vmatprep.subr.mxu0 0.0
    %2469 = vmatpush1.msra.mxu0 0.0
    %2470 = vmatprep.subr.mxu0 0.0
    %2471 = vmatpush1.msra.mxu0 0.0
    %2472 = vmatprep.subr.mxu0 0.0
    %2473 = vmatpush1.msra.mxu0 0.0
    %2474 = vmatprep.subr.mxu0 0.0
    %2475 = vmatpush1.msra.mxu0 0.0
    %2476 = vmatprep.subr.mxu0 0.0
    %2477 = vmatpush1.msra.mxu0 0.0
    %2478 = vmatprep.subr.mxu0 0.0
    %2479 = vmatpush1.msra.mxu0 0.0
    %2480 = vmatprep.subr.mxu0 0.0
    %2481 = vmatpush1.msra.mxu0 0.0
    %2482 = vmatprep.subr.mxu0 0.0
    %2483 = vmatpush1.msra.mxu0 0.0
    %2484 = vmatprep.subr.mxu0 0.0
    %2485 = vmatpush1.msra.mxu0 0.0
    %2486 = vmatprep.subr.mxu0 0.0
    %2487 = vmatpush1.msra.mxu0 0.0
    %2488 = vmatprep.subr.mxu0 0.0
    %2489 = vmatpush1.msra.mxu0 0.0
    %2490 = vmatprep.subr.mxu0 0.0
    %2491 = vmatpush1.msra.mxu0 0.0
    %2492 = vmatprep.mubr.f32.mxu0 0.0
    %2493 = vmatmul.mubr.f32.gmra.mrb[0].mxu0 %v2423
    %v2494 = vpop.f32.mrb[0].mxu0
    %v2495 = vadd.f32 %v58, %v2494
    %v2496 = vpop.f32.mrb[0].mxu0
    %2497 = vmatprep.mubr.f32.mxu0 0.0
    %2498 = vmatmul.mubr.f32.gmra.mrb[0].mxu0 %v2426
    %v2499 = vpop.f32.mrb[0].mxu0
    %v2500 = vadd.f32 %v58, %v2499
    %v2501 = vpop.f32.mrb[0].mxu0
    %2502 = vdwg.mxu0
    %v2503 = vadd.f32 %v2337, %v2495
    %v2504 = vadd.f32 %v2338, %v2500
    %v2505 = vsel %vm93, %v2503, 0.0
    %2506 = vadd.xlane.f32.xlu0 %v2505
    %v2507 = vpop.xlane.xlu0 %2506
    %v2508 = vsel %vm93, %v2504, 0.0
    %2509 = vadd.xlane.f32.xlu0 %v2508
    %v2510 = vpop.xlane.xlu0 %2509
    %v2511 = vmul.f32 %v2507, %v1095
    %v2512 = vmul.f32 %v2510, %v1095
    %v2513 = vsub.f32 %v2503, %v2511
    %v2514 = vsub.f32 %v2504, %v2512
    %v2515 = vmul.f32 %v2513, %v2513
    %v2516 = vmul.f32 %v2514, %v2514
    %v2517 = vsel %vm93, %v2515, 0.0
    %2518 = vadd.xlane.f32.xlu0 %v2517
    %v2519 = vpop.xlane.xlu0 %2518
    %v2520 = vsel %vm93, %v2516, 0.0
    %2521 = vadd.xlane.f32.xlu0 %v2520
    %v2522 = vpop.xlane.xlu0 %2521
    %v2523 = vmul.f32 %v2519, %v1095
    %v2524 = vmul.f32 %v2522, %v1095
    %v2525 = vadd.f32 %v2523, 1e-05
    %v2526 = vadd.f32 %v2524, 1e-05
    %v2527 = vrsqrt.pop %v2525
    %v2528 = vrsqrt.pop %v2526
    %v2529 = vmul.f32 %v2513, %v2527
    %v2530 = vmul.f32 %v2514, %v2528
    %v2531 = vmul.f32 %v2529, %v70
    %v2532 = vmul.f32 %v2530, %v70
    %v2533 = vadd.f32 %v2531, %v74
    %v2534 = vadd.f32 %v2532, %v74
    %v2536 = vsel %vm93, %v2533, 0
    %v2539 = vsel %vm93, %v2534, 0
    %2541 = vmatprep.subr.mxu0 0.0
    %2542 = vmatpush1.msra.mxu0 %v14
    %2543 = vmatprep.subr.mxu0 0.0
    %2544 = vmatpush1.msra.mxu0 %v15
    %2545 = vmatprep.subr.mxu0 0.0
    %2546 = vmatpush1.msra.mxu0 %v16
    %2547 = vmatprep.subr.mxu0 0.0
    %2548 = vmatpush1.msra.mxu0 %v17
    %2549 = vmatprep.subr.mxu0 0.0
    %2550 = vmatpush1.msra.mxu0 0.0
    %2551 = vmatprep.subr.mxu0 0.0
    %2552 = vmatpush1.msra.mxu0 0.0
    %2553 = vmatprep.subr.mxu0 0.0
    %2554 = vmatpush1.msra.mxu0 0.0
    %2555 = vmatprep.subr.mxu0 0.0
    %2556 = vmatpush1.msra.mxu0 0.0
    %2557 = vmatprep.subr.mxu0 0.0
    %2558 = vmatpush1.msra.mxu0 0.0
    %2559 = vmatprep.subr.mxu0 0.0
    %2560 = vmatpush1.msra.mxu0 0.0
    %2561 = vmatprep.subr.mxu0 0.0
    %2562 = vmatpush1.msra.mxu0 0.0
    %2563 = vmatprep.subr.mxu0 0.0
    %2564 = vmatpush1.msra.mxu0 0.0
    %2565 = vmatprep.subr.mxu0 0.0
    %2566 = vmatpush1.msra.mxu0 0.0
    %2567 = vmatprep.subr.mxu0 0.0
    %2568 = vmatpush1.msra.mxu0 0.0
    %2569 = vmatprep.subr.mxu0 0.0
    %2570 = vmatpush1.msra.mxu0 0.0
    %2571 = vmatprep.subr.mxu0 0.0
    %2572 = vmatpush1.msra.mxu0 0.0
    %2573 = vmatprep.subr.mxu0 0.0
    %2574 = vmatpush1.msra.mxu0 0.0
    %2575 = vmatprep.subr.mxu0 0.0
    %2576 = vmatpush1.msra.mxu0 0.0
    %2577 = vmatprep.subr.mxu0 0.0
    %2578 = vmatpush1.msra.mxu0 0.0
    %2579 = vmatprep.subr.mxu0 0.0
    %2580 = vmatpush1.msra.mxu0 0.0
    %2581 = vmatprep.subr.mxu0 0.0
    %2582 = vmatpush1.msra.mxu0 0.0
    %2583 = vmatprep.subr.mxu0 0.0
    %2584 = vmatpush1.msra.mxu0 0.0
    %2585 = vmatprep.subr.mxu0 0.0
    %2586 = vmatpush1.msra.mxu0 0.0
    %2587 = vmatprep.subr.mxu0 0.0
    %2588 = vmatpush1.msra.mxu0 0.0
    %2589 = vmatprep.subr.mxu0 0.0
    %2590 = vmatpush1.msra.mxu0 0.0
    %2591 = vmatprep.subr.mxu0 0.0
    %2592 = vmatpush1.msra.mxu0 0.0
    %2593 = vmatprep.subr.mxu0 0.0
    %2594 = vmatpush1.msra.mxu0 0.0
    %2595 = vmatprep.subr.mxu0 0.0
    %2596 = vmatpush1.msra.mxu0 0.0
    %2597 = vmatprep.subr.mxu0 0.0
    %2598 = vmatpush1.msra.mxu0 0.0
    %2599 = vmatprep.subr.mxu0 0.0
    %2600 = vmatpush1.msra.mxu0 0.0
    %2601 = vmatprep.subr.mxu0 0.0
    %2602 = vmatpush1.msra.mxu0 0.0
    %2603 = vmatprep.subr.mxu0 0.0
    %2604 = vmatpush1.msra.mxu0 0.0
    %2605 = vmatprep.mubr.f32.mxu0 0.0
    %2606 = vmatmul.mubr.f32.gmra.mrb[0].mxu0 %v2536
    %v2607 = vpop.f32.mrb[0].mxu0
    %v2608 = vadd.f32 %v46, %v2607
    %v2609 = vpop.f32.mrb[0].mxu0
    %2610 = vmatprep.mubr.f32.mxu0 0.0
    %2611 = vmatmul.mubr.f32.gmra.mrb[0].mxu0 %v2539
    %v2612 = vpop.f32.mrb[0].mxu0
    %v2613 = vadd.f32 %v46, %v2612
    %v2614 = vpop.f32.mrb[0].mxu0
    %2615 = vdwg.mxu0
    %2618 = vrot.lane.b32.xlu0 %v2608, 120
    %v2619 = vpop.permute.xlu0 %2618
    %2620 = vrot.lane.b32.xlu0 %v2613, 120
    %v2621 = vpop.permute.xlu0 %2620
    %2622 = vrot.lane.b32.xlu0 %v2608, 112
    %v2623 = vpop.permute.xlu0 %2622
    %2624 = vrot.lane.b32.xlu0 %v2613, 112
    %v2625 = vpop.permute.xlu0 %2624
    %2626 = vrot.lane.b32.xlu0 %v2608, 104
    %v2627 = vpop.permute.xlu0 %2626
    %2628 = vrot.lane.b32.xlu0 %v2613, 104
    %v2629 = vpop.permute.xlu0 %2628
    %2630 = vrot.lane.b32.xlu0 %v2608, 96
    %v2631 = vpop.permute.xlu0 %2630
    %2632 = vrot.lane.b32.xlu0 %v2613, 96
    %v2633 = vpop.permute.xlu0 %2632
    %v2634 = vsel %vm193, %v2608, 0
    %v2636 = vsel %vm193, %v2613, 0
    %v2638 = vsel %vm193, %v2631, 0
    %v2640 = vsel %vm193, %v2633, 0
    %2642 = vmatprep.subr.mxu0 0.0
    %2643 = vmatpush1.xpose.msra.mxu0 %v2638
    %2644 = vmatprep.subr.mxu0 0.0
    %2645 = vmatpush1.xpose.msra.mxu0 %v2640
    %2646 = vmatprep.subr.mxu0 0.0
    %2647 = vmatpush1.xpose.msra.mxu0 0.0
    %2648 = vmatprep.subr.mxu0 0.0
    %2649 = vmatpush1.xpose.msra.mxu0 0.0
    %2650 = vmatprep.subr.mxu0 0.0
    %2651 = vmatpush1.xpose.msra.mxu0 0.0
    %2652 = vmatprep.subr.mxu0 0.0
    %2653 = vmatpush1.xpose.msra.mxu0 0.0
    %2654 = vmatprep.subr.mxu0 0.0
    %2655 = vmatpush1.xpose.msra.mxu0 0.0
    %2656 = vmatprep.subr.mxu0 0.0
    %2657 = vmatpush1.xpose.msra.mxu0 0.0
    %2658 = vmatprep.subr.mxu0 0.0
    %2659 = vmatpush1.xpose.msra.mxu0 0.0
    %2660 = vmatprep.subr.mxu0 0.0
    %2661 = vmatpush1.xpose.msra.mxu0 0.0
    %2662 = vmatprep.subr.mxu0 0.0
    %2663 = vmatpush1.xpose.msra.mxu0 0.0
    %2664 = vmatprep.subr.mxu0 0.0
    %2665 = vmatpush1.xpose.msra.mxu0 0.0
    %2666 = vmatprep.subr.mxu0 0.0
    %2667 = vmatpush1.xpose.msra.mxu0 0.0
    %2668 = vmatprep.subr.mxu0 0.0
    %2669 = vmatpush1.xpose.msra.mxu0 0.0
    %2670 = vmatprep.subr.mxu0 0.0
    %2671 = vmatpush1.xpose.msra.mxu0 0.0
    %2672 = vmatprep.subr.mxu0 0.0
    %2673 = vmatpush1.xpose.msra.mxu0 0.0
    %2674 = vmatprep.subr.mxu0 0.0
    %2675 = vmatpush1.xpose.msra.mxu0 0.0
    %2676 = vmatprep.subr.mxu0 0.0
    %2677 = vmatpush1.xpose.msra.mxu0 0.0
    %2678 = vmatprep.subr.mxu0 0.0
    %2679 = vmatpush1.xpose.msra.mxu0 0.0
    %2680 = vmatprep.subr.mxu0 0.0
    %2681 = vmatpush1.xpose.msra.mxu0 0.0
    %2682 = vmatprep.subr.mxu0 0.0
    %2683 = vmatpush1.xpose.msra.mxu0 0.0
    %2684 = vmatprep.subr.mxu0 0.0
    %2685 = vmatpush1.xpose.msra.mxu0 0.0
    %2686 = vmatprep.subr.mxu0 0.0
    %2687 = vmatpush1.xpose.msra.mxu0 0.0
    %2688 = vmatprep.subr.mxu0 0.0
    %2689 = vmatpush1.xpose.msra.mxu0 0.0
    %2690 = vmatprep.subr.mxu0 0.0
    %2691 = vmatpush1.xpose.msra.mxu0 0.0
    %2692 = vmatprep.subr.mxu0 0.0
    %2693 = vmatpush1.xpose.msra.mxu0 0.0
    %2694 = vmatprep.subr.mxu0 0.0
    %2695 = vmatpush1.xpose.msra.mxu0 0.0
    %2696 = vmatprep.subr.mxu0 0.0
    %2697 = vmatpush1.xpose.msra.mxu0 0.0
    %2698 = vmatprep.subr.mxu0 0.0
    %2699 = vmatpush1.xpose.msra.mxu0 0.0
    %2700 = vmatprep.subr.mxu0 0.0
    %2701 = vmatpush1.xpose.msra.mxu0 0.0
    %2702 = vmatprep.subr.mxu0 0.0
    %2703 = vmatpush1.xpose.msra.mxu0 0.0
    %2704 = vmatprep.subr.mxu0 0.0
    %2705 = vmatpush1.xpose.msra.mxu0 0.0
    %2706 = vmatprep.mubr.f32.mxu0 0.0
    %2707 = vmatmul.mubr.f32.gmra.mrb[0].mxu0 %v2634
    %v2708 = vpop.f32.mrb[0].mxu0
    %v2709 = vadd.f32 %v91, %v2708
    %v2710 = vpop.f32.mrb[0].mxu0
    %2711 = vmatprep.mubr.f32.mxu0 0.0
    %2712 = vmatmul.mubr.f32.gmra.mrb[0].mxu0 %v2636
    %v2713 = vpop.f32.mrb[0].mxu0
    %v2714 = vadd.f32 %v92, %v2713
    %v2715 = vpop.f32.mrb[0].mxu0
    %2716 = vdwg.mxu0
    %2717 = vrot.lane.b32.xlu0 %v2619, 96
    %v2718 = vpop.permute.xlu0 %2717
    %2719 = vrot.lane.b32.xlu0 %v2621, 96
    %v2720 = vpop.permute.xlu0 %2719
    %v2721 = vsel %vm193, %v2619, 0
    %v2723 = vsel %vm193, %v2621, 0
    %v2725 = vsel %vm193, %v2718, 0
    %v2727 = vsel %vm193, %v2720, 0
    %2729 = vmatprep.subr.mxu0 0.0
    %2730 = vmatpush1.xpose.msra.mxu0 %v2725
    %2731 = vmatprep.subr.mxu0 0.0
    %2732 = vmatpush1.xpose.msra.mxu0 %v2727
    %2733 = vmatprep.subr.mxu0 0.0
    %2734 = vmatpush1.xpose.msra.mxu0 0.0
    %2735 = vmatprep.subr.mxu0 0.0
    %2736 = vmatpush1.xpose.msra.mxu0 0.0
    %2737 = vmatprep.subr.mxu0 0.0
    %2738 = vmatpush1.xpose.msra.mxu0 0.0
    %2739 = vmatprep.subr.mxu0 0.0
    %2740 = vmatpush1.xpose.msra.mxu0 0.0
    %2741 = vmatprep.subr.mxu0 0.0
    %2742 = vmatpush1.xpose.msra.mxu0 0.0
    %2743 = vmatprep.subr.mxu0 0.0
    %2744 = vmatpush1.xpose.msra.mxu0 0.0
    %2745 = vmatprep.subr.mxu0 0.0
    %2746 = vmatpush1.xpose.msra.mxu0 0.0
    %2747 = vmatprep.subr.mxu0 0.0
    %2748 = vmatpush1.xpose.msra.mxu0 0.0
    %2749 = vmatprep.subr.mxu0 0.0
    %2750 = vmatpush1.xpose.msra.mxu0 0.0
    %2751 = vmatprep.subr.mxu0 0.0
    %2752 = vmatpush1.xpose.msra.mxu0 0.0
    %2753 = vmatprep.subr.mxu0 0.0
    %2754 = vmatpush1.xpose.msra.mxu0 0.0
    %2755 = vmatprep.subr.mxu0 0.0
    %2756 = vmatpush1.xpose.msra.mxu0 0.0
    %2757 = vmatprep.subr.mxu0 0.0
    %2758 = vmatpush1.xpose.msra.mxu0 0.0
    %2759 = vmatprep.subr.mxu0 0.0
    %2760 = vmatpush1.xpose.msra.mxu0 0.0
    %2761 = vmatprep.subr.mxu0 0.0
    %2762 = vmatpush1.xpose.msra.mxu0 0.0
    %2763 = vmatprep.subr.mxu0 0.0
    %2764 = vmatpush1.xpose.msra.mxu0 0.0
    %2765 = vmatprep.subr.mxu0 0.0
    %2766 = vmatpush1.xpose.msra.mxu0 0.0
    %2767 = vmatprep.subr.mxu0 0.0
    %2768 = vmatpush1.xpose.msra.mxu0 0.0
    %2769 = vmatprep.subr.mxu0 0.0
    %2770 = vmatpush1.xpose.msra.mxu0 0.0
    %2771 = vmatprep.subr.mxu0 0.0
    %2772 = vmatpush1.xpose.msra.mxu0 0.0
    %2773 = vmatprep.subr.mxu0 0.0
    %2774 = vmatpush1.xpose.msra.mxu0 0.0
    %2775 = vmatprep.subr.mxu0 0.0
    %2776 = vmatpush1.xpose.msra.mxu0 0.0
    %2777 = vmatprep.subr.mxu0 0.0
    %2778 = vmatpush1.xpose.msra.mxu0 0.0
    %2779 = vmatprep.subr.mxu0 0.0
    %2780 = vmatpush1.xpose.msra.mxu0 0.0
    %2781 = vmatprep.subr.mxu0 0.0
    %2782 = vmatpush1.xpose.msra.mxu0 0.0
    %2783 = vmatprep.subr.mxu0 0.0
    %2784 = vmatpush1.xpose.msra.mxu0 0.0
    %2785 = vmatprep.subr.mxu0 0.0
    %2786 = vmatpush1.xpose.msra.mxu0 0.0
    %2787 = vmatprep.subr.mxu0 0.0
    %2788 = vmatpush1.xpose.msra.mxu0 0.0
    %2789 = vmatprep.subr.mxu0 0.0
    %2790 = vmatpush1.xpose.msra.mxu0 0.0
    %2791 = vmatprep.subr.mxu0 0.0
    %2792 = vmatpush1.xpose.msra.mxu0 0.0
    %2793 = vmatprep.mubr.f32.mxu0 0.0
    %2794 = vmatmul.mubr.f32.gmra.mrb[0].mxu0 %v2721
    %v2795 = vpop.f32.mrb[0].mxu0
    %v2796 = vadd.f32 %v91, %v2795
    %v2797 = vpop.f32.mrb[0].mxu0
    %2798 = vmatprep.mubr.f32.mxu0 0.0
    %2799 = vmatmul.mubr.f32.gmra.mrb[0].mxu0 %v2723
    %v2800 = vpop.f32.mrb[0].mxu0
    %v2801 = vadd.f32 %v92, %v2800
    %v2802 = vpop.f32.mrb[0].mxu0
    %2803 = vdwg.mxu0
    %2804 = vrot.lane.b32.xlu0 %v2623, 96
    %v2805 = vpop.permute.xlu0 %2804
    %2806 = vrot.lane.b32.xlu0 %v2625, 96
    %v2807 = vpop.permute.xlu0 %2806
    %v2808 = vsel %vm193, %v2623, 0
    %v2810 = vsel %vm193, %v2625, 0
    %v2812 = vsel %vm193, %v2805, 0
    %v2814 = vsel %vm193, %v2807, 0
    %2816 = vmatprep.subr.mxu0 0.0
    %2817 = vmatpush1.xpose.msra.mxu0 %v2812
    %2818 = vmatprep.subr.mxu0 0.0
    %2819 = vmatpush1.xpose.msra.mxu0 %v2814
    %2820 = vmatprep.subr.mxu0 0.0
    %2821 = vmatpush1.xpose.msra.mxu0 0.0
    %2822 = vmatprep.subr.mxu0 0.0
    %2823 = vmatpush1.xpose.msra.mxu0 0.0
    %2824 = vmatprep.subr.mxu0 0.0
    %2825 = vmatpush1.xpose.msra.mxu0 0.0
    %2826 = vmatprep.subr.mxu0 0.0
    %2827 = vmatpush1.xpose.msra.mxu0 0.0
    %2828 = vmatprep.subr.mxu0 0.0
    %2829 = vmatpush1.xpose.msra.mxu0 0.0
    %2830 = vmatprep.subr.mxu0 0.0
    %2831 = vmatpush1.xpose.msra.mxu0 0.0
    %2832 = vmatprep.subr.mxu0 0.0
    %2833 = vmatpush1.xpose.msra.mxu0 0.0
    %2834 = vmatprep.subr.mxu0 0.0
    %2835 = vmatpush1.xpose.msra.mxu0 0.0
    %2836 = vmatprep.subr.mxu0 0.0
    %2837 = vmatpush1.xpose.msra.mxu0 0.0
    %2838 = vmatprep.subr.mxu0 0.0
    %2839 = vmatpush1.xpose.msra.mxu0 0.0
    %2840 = vmatprep.subr.mxu0 0.0
    %2841 = vmatpush1.xpose.msra.mxu0 0.0
    %2842 = vmatprep.subr.mxu0 0.0
    %2843 = vmatpush1.xpose.msra.mxu0 0.0
    %2844 = vmatprep.subr.mxu0 0.0
    %2845 = vmatpush1.xpose.msra.mxu0 0.0
    %2846 = vmatprep.subr.mxu0 0.0
    %2847 = vmatpush1.xpose.msra.mxu0 0.0
    %2848 = vmatprep.subr.mxu0 0.0
    %2849 = vmatpush1.xpose.msra.mxu0 0.0
    %2850 = vmatprep.subr.mxu0 0.0
    %2851 = vmatpush1.xpose.msra.mxu0 0.0
    %2852 = vmatprep.subr.mxu0 0.0
    %2853 = vmatpush1.xpose.msra.mxu0 0.0
    %2854 = vmatprep.subr.mxu0 0.0
    %2855 = vmatpush1.xpose.msra.mxu0 0.0
    %2856 = vmatprep.subr.mxu0 0.0
    %2857 = vmatpush1.xpose.msra.mxu0 0.0
    %2858 = vmatprep.subr.mxu0 0.0
    %2859 = vmatpush1.xpose.msra.mxu0 0.0
    %2860 = vmatprep.subr.mxu0 0.0
    %2861 = vmatpush1.xpose.msra.mxu0 0.0
    %2862 = vmatprep.subr.mxu0 0.0
    %2863 = vmatpush1.xpose.msra.mxu0 0.0
    %2864 = vmatprep.subr.mxu0 0.0
    %2865 = vmatpush1.xpose.msra.mxu0 0.0
    %2866 = vmatprep.subr.mxu0 0.0
    %2867 = vmatpush1.xpose.msra.mxu0 0.0
    %2868 = vmatprep.subr.mxu0 0.0
    %2869 = vmatpush1.xpose.msra.mxu0 0.0
    %2870 = vmatprep.subr.mxu0 0.0
    %2871 = vmatpush1.xpose.msra.mxu0 0.0
    %2872 = vmatprep.subr.mxu0 0.0
    %2873 = vmatpush1.xpose.msra.mxu0 0.0
    %2874 = vmatprep.subr.mxu0 0.0
    %2875 = vmatpush1.xpose.msra.mxu0 0.0
    %2876 = vmatprep.subr.mxu0 0.0
    %2877 = vmatpush1.xpose.msra.mxu0 0.0
    %2878 = vmatprep.subr.mxu0 0.0
    %2879 = vmatpush1.xpose.msra.mxu0 0.0
    %2880 = vmatprep.mubr.f32.mxu0 0.0
    %2881 = vmatmul.mubr.f32.gmra.mrb[0].mxu0 %v2808
    %v2882 = vpop.f32.mrb[0].mxu0
    %v2883 = vadd.f32 %v91, %v2882
    %v2884 = vpop.f32.mrb[0].mxu0
    %2885 = vmatprep.mubr.f32.mxu0 0.0
    %2886 = vmatmul.mubr.f32.gmra.mrb[0].mxu0 %v2810
    %v2887 = vpop.f32.mrb[0].mxu0
    %v2888 = vadd.f32 %v92, %v2887
    %v2889 = vpop.f32.mrb[0].mxu0
    %2890 = vdwg.mxu0
    %2891 = vrot.lane.b32.xlu0 %v2627, 96
    %v2892 = vpop.permute.xlu0 %2891
    %2893 = vrot.lane.b32.xlu0 %v2629, 96
    %v2894 = vpop.permute.xlu0 %2893
    %v2895 = vsel %vm193, %v2627, 0
    %v2897 = vsel %vm193, %v2629, 0
    %v2899 = vsel %vm193, %v2892, 0
    %v2901 = vsel %vm193, %v2894, 0
    %2903 = vmatprep.subr.mxu0 0.0
    %2904 = vmatpush1.xpose.msra.mxu0 %v2899
    %2905 = vmatprep.subr.mxu0 0.0
    %2906 = vmatpush1.xpose.msra.mxu0 %v2901
    %2907 = vmatprep.subr.mxu0 0.0
    %2908 = vmatpush1.xpose.msra.mxu0 0.0
    %2909 = vmatprep.subr.mxu0 0.0
    %2910 = vmatpush1.xpose.msra.mxu0 0.0
    %2911 = vmatprep.subr.mxu0 0.0
    %2912 = vmatpush1.xpose.msra.mxu0 0.0
    %2913 = vmatprep.subr.mxu0 0.0
    %2914 = vmatpush1.xpose.msra.mxu0 0.0
    %2915 = vmatprep.subr.mxu0 0.0
    %2916 = vmatpush1.xpose.msra.mxu0 0.0
    %2917 = vmatprep.subr.mxu0 0.0
    %2918 = vmatpush1.xpose.msra.mxu0 0.0
    %2919 = vmatprep.subr.mxu0 0.0
    %2920 = vmatpush1.xpose.msra.mxu0 0.0
    %2921 = vmatprep.subr.mxu0 0.0
    %2922 = vmatpush1.xpose.msra.mxu0 0.0
    %2923 = vmatprep.subr.mxu0 0.0
    %2924 = vmatpush1.xpose.msra.mxu0 0.0
    %2925 = vmatprep.subr.mxu0 0.0
    %2926 = vmatpush1.xpose.msra.mxu0 0.0
    %2927 = vmatprep.subr.mxu0 0.0
    %2928 = vmatpush1.xpose.msra.mxu0 0.0
    %2929 = vmatprep.subr.mxu0 0.0
    %2930 = vmatpush1.xpose.msra.mxu0 0.0
    %2931 = vmatprep.subr.mxu0 0.0
    %2932 = vmatpush1.xpose.msra.mxu0 0.0
    %2933 = vmatprep.subr.mxu0 0.0
    %2934 = vmatpush1.xpose.msra.mxu0 0.0
    %2935 = vmatprep.subr.mxu0 0.0
    %2936 = vmatpush1.xpose.msra.mxu0 0.0
    %2937 = vmatprep.subr.mxu0 0.0
    %2938 = vmatpush1.xpose.msra.mxu0 0.0
    %2939 = vmatprep.subr.mxu0 0.0
    %2940 = vmatpush1.xpose.msra.mxu0 0.0
    %2941 = vmatprep.subr.mxu0 0.0
    %2942 = vmatpush1.xpose.msra.mxu0 0.0
    %2943 = vmatprep.subr.mxu0 0.0
    %2944 = vmatpush1.xpose.msra.mxu0 0.0
    %2945 = vmatprep.subr.mxu0 0.0
    %2946 = vmatpush1.xpose.msra.mxu0 0.0
    %2947 = vmatprep.subr.mxu0 0.0
    %2948 = vmatpush1.xpose.msra.mxu0 0.0
    %2949 = vmatprep.subr.mxu0 0.0
    %2950 = vmatpush1.xpose.msra.mxu0 0.0
    %2951 = vmatprep.subr.mxu0 0.0
    %2952 = vmatpush1.xpose.msra.mxu0 0.0
    %2953 = vmatprep.subr.mxu0 0.0
    %2954 = vmatpush1.xpose.msra.mxu0 0.0
    %2955 = vmatprep.subr.mxu0 0.0
    %2956 = vmatpush1.xpose.msra.mxu0 0.0
    %2957 = vmatprep.subr.mxu0 0.0
    %2958 = vmatpush1.xpose.msra.mxu0 0.0
    %2959 = vmatprep.subr.mxu0 0.0
    %2960 = vmatpush1.xpose.msra.mxu0 0.0
    %2961 = vmatprep.subr.mxu0 0.0
    %2962 = vmatpush1.xpose.msra.mxu0 0.0
    %2963 = vmatprep.subr.mxu0 0.0
    %2964 = vmatpush1.xpose.msra.mxu0 0.0
    %2965 = vmatprep.subr.mxu0 0.0
    %2966 = vmatpush1.xpose.msra.mxu0 0.0
    %2967 = vmatprep.mubr.f32.mxu0 0.0
    %2968 = vmatmul.mubr.f32.gmra.mrb[0].mxu0 %v2895
    %v2969 = vpop.f32.mrb[0].mxu0
    %v2970 = vadd.f32 %v91, %v2969
    %v2971 = vpop.f32.mrb[0].mxu0
    %2972 = vmatprep.mubr.f32.mxu0 0.0
    %2973 = vmatmul.mubr.f32.gmra.mrb[0].mxu0 %v2897
    %v2974 = vpop.f32.mrb[0].mxu0
    %v2975 = vadd.f32 %v92, %v2974
    %v2976 = vpop.f32.mrb[0].mxu0
    %2977 = vdwg.mxu0
    %v2978 = vsel %vm538, %v2709, -inf
    %2979 = vmax.xlane.f32.xlu0 %v2978
    %v2980 = vpop.xlane.xlu0 %2979
    %v2981 = vsel %vm538, %v2714, -inf
    %2982 = vmax.xlane.f32.xlu0 %v2981
    %v2983 = vpop.xlane.xlu0 %2982
    %v2984 = vsel %vm538, %v2796, -inf
    %2985 = vmax.xlane.f32.xlu0 %v2984
    %v2986 = vpop.xlane.xlu0 %2985
    %v2987 = vsel %vm538, %v2801, -inf
    %2988 = vmax.xlane.f32.xlu0 %v2987
    %v2989 = vpop.xlane.xlu0 %2988
    %v2990 = vsel %vm538, %v2883, -inf
    %2991 = vmax.xlane.f32.xlu0 %v2990
    %v2992 = vpop.xlane.xlu0 %2991
    %v2993 = vsel %vm538, %v2888, -inf
    %2994 = vmax.xlane.f32.xlu0 %v2993
    %v2995 = vpop.xlane.xlu0 %2994
    %v2996 = vsel %vm538, %v2970, -inf
    %2997 = vmax.xlane.f32.xlu0 %v2996
    %v2998 = vpop.xlane.xlu0 %2997
    %v2999 = vsel %vm538, %v2975, -inf
    %3000 = vmax.xlane.f32.xlu0 %v2999
    %v3001 = vpop.xlane.xlu0 %3000
    %v3002 = vsub.f32 %v2709, %v2980
    %v3003 = vsub.f32 %v2714, %v2983
    %v3004 = vsub.f32 %v2796, %v2986
    %v3005 = vsub.f32 %v2801, %v2989
    %v3006 = vsub.f32 %v2883, %v2992
    %v3007 = vsub.f32 %v2888, %v2995
    %v3008 = vsub.f32 %v2970, %v2998
    %v3009 = vsub.f32 %v2975, %v3001
    %v3010 = vmul.f32 %v3002, 1.442695
    %v3011 = vpow.pop %v3010
    %v3012 = vmul.f32 %v3003, 1.442695
    %v3013 = vpow.pop %v3012
    %v3014 = vmul.f32 %v3004, 1.442695
    %v3015 = vpow.pop %v3014
    %v3016 = vmul.f32 %v3005, 1.442695
    %v3017 = vpow.pop %v3016
    %v3018 = vmul.f32 %v3006, 1.442695
    %v3019 = vpow.pop %v3018
    %v3020 = vmul.f32 %v3007, 1.442695
    %v3021 = vpow.pop %v3020
    %v3022 = vmul.f32 %v3008, 1.442695
    %v3023 = vpow.pop %v3022
    %v3024 = vmul.f32 %v3009, 1.442695
    %v3025 = vpow.pop %v3024
    %v3026 = vsel %vm538, %v3011, 0.0
    %3027 = vadd.xlane.f32.xlu0 %v3026
    %v3028 = vpop.xlane.xlu0 %3027
    %v3029 = vsel %vm538, %v3013, 0.0
    %3030 = vadd.xlane.f32.xlu0 %v3029
    %v3031 = vpop.xlane.xlu0 %3030
    %v3032 = vsel %vm538, %v3015, 0.0
    %3033 = vadd.xlane.f32.xlu0 %v3032
    %v3034 = vpop.xlane.xlu0 %3033
    %v3035 = vsel %vm538, %v3017, 0.0
    %3036 = vadd.xlane.f32.xlu0 %v3035
    %v3037 = vpop.xlane.xlu0 %3036
    %v3038 = vsel %vm538, %v3019, 0.0
    %3039 = vadd.xlane.f32.xlu0 %v3038
    %v3040 = vpop.xlane.xlu0 %3039
    %v3041 = vsel %vm538, %v3021, 0.0
    %3042 = vadd.xlane.f32.xlu0 %v3041
    %v3043 = vpop.xlane.xlu0 %3042
    %v3044 = vsel %vm538, %v3023, 0.0
    %3045 = vadd.xlane.f32.xlu0 %v3044
    %v3046 = vpop.xlane.xlu0 %3045
    %v3047 = vsel %vm538, %v3025, 0.0
    %3048 = vadd.xlane.f32.xlu0 %v3047
    %v3049 = vpop.xlane.xlu0 %3048
    %v3050 = vrcp.pop %v3028
    %v3051 = vrcp.pop %v3031
    %v3052 = vrcp.pop %v3034
    %v3053 = vrcp.pop %v3037
    %v3054 = vrcp.pop %v3040
    %v3055 = vrcp.pop %v3043
    %v3056 = vrcp.pop %v3046
    %v3057 = vrcp.pop %v3049
    %v3058 = vmul.f32 %v3011, %v3050
    %v3059 = vmul.f32 %v3013, %v3051
    %v3060 = vmul.f32 %v3015, %v3052
    %v3061 = vmul.f32 %v3017, %v3053
    %v3062 = vmul.f32 %v3019, %v3054
    %v3063 = vmul.f32 %v3021, %v3055
    %v3064 = vmul.f32 %v3023, %v3056
    %v3065 = vmul.f32 %v3025, %v3057
    %3066 = vrot.lane.b32.xlu0 %v2608, 64
    %v3067 = vpop.permute.xlu0 %3066
    %3068 = vrot.lane.b32.xlu0 %v2613, 64
    %v3069 = vpop.permute.xlu0 %3068
    %v3073 = vsel %vm538, %v3058, 0
    %v3076 = vsel %vm538, %v3059, 0
    %3078 = vmatprep.subr.mxu0 0.0
    %3079 = vmatpush1.msra.mxu0 %v3067
    %3080 = vmatprep.subr.mxu0 0.0
    %3081 = vmatpush1.msra.mxu0 %v3069
    %3082 = vmatprep.subr.mxu0 0.0
    %3083 = vmatpush1.msra.mxu0 0.0
    %3084 = vmatprep.subr.mxu0 0.0
    %3085 = vmatpush1.msra.mxu0 0.0
    %3086 = vmatprep.subr.mxu0 0.0
    %3087 = vmatpush1.msra.mxu0 0.0
    %3088 = vmatprep.subr.mxu0 0.0
    %3089 = vmatpush1.msra.mxu0 0.0
    %3090 = vmatprep.subr.mxu0 0.0
    %3091 = vmatpush1.msra.mxu0 0.0
    %3092 = vmatprep.subr.mxu0 0.0
    %3093 = vmatpush1.msra.mxu0 0.0
    %3094 = vmatprep.subr.mxu0 0.0
    %3095 = vmatpush1.msra.mxu0 0.0
    %3096 = vmatprep.subr.mxu0 0.0
    %3097 = vmatpush1.msra.mxu0 0.0
    %3098 = vmatprep.subr.mxu0 0.0
    %3099 = vmatpush1.msra.mxu0 0.0
    %3100 = vmatprep.subr.mxu0 0.0
    %3101 = vmatpush1.msra.mxu0 0.0
    %3102 = vmatprep.subr.mxu0 0.0
    %3103 = vmatpush1.msra.mxu0 0.0
    %3104 = vmatprep.subr.mxu0 0.0
    %3105 = vmatpush1.msra.mxu0 0.0
    %3106 = vmatprep.subr.mxu0 0.0
    %3107 = vmatpush1.msra.mxu0 0.0
    %3108 = vmatprep.subr.mxu0 0.0
    %3109 = vmatpush1.msra.mxu0 0.0
    %3110 = vmatprep.subr.mxu0 0.0
    %3111 = vmatpush1.msra.mxu0 0.0
    %3112 = vmatprep.subr.mxu0 0.0
    %3113 = vmatpush1.msra.mxu0 0.0
    %3114 = vmatprep.subr.mxu0 0.0
    %3115 = vmatpush1.msra.mxu0 0.0
    %3116 = vmatprep.subr.mxu0 0.0
    %3117 = vmatpush1.msra.mxu0 0.0
    %3118 = vmatprep.subr.mxu0 0.0
    %3119 = vmatpush1.msra.mxu0 0.0
    %3120 = vmatprep.subr.mxu0 0.0
    %3121 = vmatpush1.msra.mxu0 0.0
    %3122 = vmatprep.subr.mxu0 0.0
    %3123 = vmatpush1.msra.mxu0 0.0
    %3124 = vmatprep.subr.mxu0 0.0
    %3125 = vmatpush1.msra.mxu0 0.0
    %3126 = vmatprep.subr.mxu0 0.0
    %3127 = vmatpush1.msra.mxu0 0.0
    %3128 = vmatprep.subr.mxu0 0.0
    %3129 = vmatpush1.msra.mxu0 0.0
    %3130 = vmatprep.subr.mxu0 0.0
    %3131 = vmatpush1.msra.mxu0 0.0
    %3132 = vmatprep.subr.mxu0 0.0
    %3133 = vmatpush1.msra.mxu0 0.0
    %3134 = vmatprep.subr.mxu0 0.0
    %3135 = vmatpush1.msra.mxu0 0.0
    %3136 = vmatprep.subr.mxu0 0.0
    %3137 = vmatpush1.msra.mxu0 0.0
    %3138 = vmatprep.subr.mxu0 0.0
    %3139 = vmatpush1.msra.mxu0 0.0
    %3140 = vmatprep.subr.mxu0 0.0
    %3141 = vmatpush1.msra.mxu0 0.0
    %3142 = vmatprep.mubr.f32.mxu0 0.0
    %3143 = vmatmul.mubr.f32.gmra.mrb[0].mxu0 %v3073
    %v3144 = vpop.f32.mrb[0].mxu0
    %v3145 = vadd.f32 0.0, %v3144
    %v3146 = vpop.f32.mrb[0].mxu0
    %3147 = vmatprep.mubr.f32.mxu0 0.0
    %3148 = vmatmul.mubr.f32.gmra.mrb[0].mxu0 %v3076
    %v3149 = vpop.f32.mrb[0].mxu0
    %v3150 = vadd.f32 0.0, %v3149
    %v3151 = vpop.f32.mrb[0].mxu0
    %3152 = vdwg.mxu0
    %3153 = vrot.lane.b32.xlu0 %v2619, 64
    %v3154 = vpop.permute.xlu0 %3153
    %3155 = vrot.lane.b32.xlu0 %v2621, 64
    %v3156 = vpop.permute.xlu0 %3155
    %v3160 = vsel %vm538, %v3060, 0
    %v3163 = vsel %vm538, %v3061, 0
    %3165 = vmatprep.subr.mxu0 0.0
    %3166 = vmatpush1.msra.mxu0 %v3154
    %3167 = vmatprep.subr.mxu0 0.0
    %3168 = vmatpush1.msra.mxu0 %v3156
    %3169 = vmatprep.subr.mxu0 0.0
    %3170 = vmatpush1.msra.mxu0 0.0
    %3171 = vmatprep.subr.mxu0 0.0
    %3172 = vmatpush1.msra.mxu0 0.0
    %3173 = vmatprep.subr.mxu0 0.0
    %3174 = vmatpush1.msra.mxu0 0.0
    %3175 = vmatprep.subr.mxu0 0.0
    %3176 = vmatpush1.msra.mxu0 0.0
    %3177 = vmatprep.subr.mxu0 0.0
    %3178 = vmatpush1.msra.mxu0 0.0
    %3179 = vmatprep.subr.mxu0 0.0
    %3180 = vmatpush1.msra.mxu0 0.0
    %3181 = vmatprep.subr.mxu0 0.0
    %3182 = vmatpush1.msra.mxu0 0.0
    %3183 = vmatprep.subr.mxu0 0.0
    %3184 = vmatpush1.msra.mxu0 0.0
    %3185 = vmatprep.subr.mxu0 0.0
    %3186 = vmatpush1.msra.mxu0 0.0
    %3187 = vmatprep.subr.mxu0 0.0
    %3188 = vmatpush1.msra.mxu0 0.0
    %3189 = vmatprep.subr.mxu0 0.0
    %3190 = vmatpush1.msra.mxu0 0.0
    %3191 = vmatprep.subr.mxu0 0.0
    %3192 = vmatpush1.msra.mxu0 0.0
    %3193 = vmatprep.subr.mxu0 0.0
    %3194 = vmatpush1.msra.mxu0 0.0
    %3195 = vmatprep.subr.mxu0 0.0
    %3196 = vmatpush1.msra.mxu0 0.0
    %3197 = vmatprep.subr.mxu0 0.0
    %3198 = vmatpush1.msra.mxu0 0.0
    %3199 = vmatprep.subr.mxu0 0.0
    %3200 = vmatpush1.msra.mxu0 0.0
    %3201 = vmatprep.subr.mxu0 0.0
    %3202 = vmatpush1.msra.mxu0 0.0
    %3203 = vmatprep.subr.mxu0 0.0
    %3204 = vmatpush1.msra.mxu0 0.0
    %3205 = vmatprep.subr.mxu0 0.0
    %3206 = vmatpush1.msra.mxu0 0.0
    %3207 = vmatprep.subr.mxu0 0.0
    %3208 = vmatpush1.msra.mxu0 0.0
    %3209 = vmatprep.subr.mxu0 0.0
    %3210 = vmatpush1.msra.mxu0 0.0
    %3211 = vmatprep.subr.mxu0 0.0
    %3212 = vmatpush1.msra.mxu0 0.0
    %3213 = vmatprep.subr.mxu0 0.0
    %3214 = vmatpush1.msra.mxu0 0.0
    %3215 = vmatprep.subr.mxu0 0.0
    %3216 = vmatpush1.msra.mxu0 0.0
    %3217 = vmatprep.subr.mxu0 0.0
    %3218 = vmatpush1.msra.mxu0 0.0
    %3219 = vmatprep.subr.mxu0 0.0
    %3220 = vmatpush1.msra.mxu0 0.0
    %3221 = vmatprep.subr.mxu0 0.0
    %3222 = vmatpush1.msra.mxu0 0.0
    %3223 = vmatprep.subr.mxu0 0.0
    %3224 = vmatpush1.msra.mxu0 0.0
    %3225 = vmatprep.subr.mxu0 0.0
    %3226 = vmatpush1.msra.mxu0 0.0
    %3227 = vmatprep.subr.mxu0 0.0
    %3228 = vmatpush1.msra.mxu0 0.0
    %3229 = vmatprep.mubr.f32.mxu0 0.0
    %3230 = vmatmul.mubr.f32.gmra.mrb[0].mxu0 %v3160
    %v3231 = vpop.f32.mrb[0].mxu0
    %v3232 = vadd.f32 0.0, %v3231
    %v3233 = vpop.f32.mrb[0].mxu0
    %3234 = vmatprep.mubr.f32.mxu0 0.0
    %3235 = vmatmul.mubr.f32.gmra.mrb[0].mxu0 %v3163
    %v3236 = vpop.f32.mrb[0].mxu0
    %v3237 = vadd.f32 0.0, %v3236
    %v3238 = vpop.f32.mrb[0].mxu0
    %3239 = vdwg.mxu0
    %3240 = vrot.lane.b32.xlu0 %v2623, 64
    %v3241 = vpop.permute.xlu0 %3240
    %3242 = vrot.lane.b32.xlu0 %v2625, 64
    %v3243 = vpop.permute.xlu0 %3242
    %v3247 = vsel %vm538, %v3062, 0
    %v3250 = vsel %vm538, %v3063, 0
    %3252 = vmatprep.subr.mxu0 0.0
    %3253 = vmatpush1.msra.mxu0 %v3241
    %3254 = vmatprep.subr.mxu0 0.0
    %3255 = vmatpush1.msra.mxu0 %v3243
    %3256 = vmatprep.subr.mxu0 0.0
    %3257 = vmatpush1.msra.mxu0 0.0
    %3258 = vmatprep.subr.mxu0 0.0
    %3259 = vmatpush1.msra.mxu0 0.0
    %3260 = vmatprep.subr.mxu0 0.0
    %3261 = vmatpush1.msra.mxu0 0.0
    %3262 = vmatprep.subr.mxu0 0.0
    %3263 = vmatpush1.msra.mxu0 0.0
    %3264 = vmatprep.subr.mxu0 0.0
    %3265 = vmatpush1.msra.mxu0 0.0
    %3266 = vmatprep.subr.mxu0 0.0
    %3267 = vmatpush1.msra.mxu0 0.0
    %3268 = vmatprep.subr.mxu0 0.0
    %3269 = vmatpush1.msra.mxu0 0.0
    %3270 = vmatprep.subr.mxu0 0.0
    %3271 = vmatpush1.msra.mxu0 0.0
    %3272 = vmatprep.subr.mxu0 0.0
    %3273 = vmatpush1.msra.mxu0 0.0
    %3274 = vmatprep.subr.mxu0 0.0
    %3275 = vmatpush1.msra.mxu0 0.0
    %3276 = vmatprep.subr.mxu0 0.0
    %3277 = vmatpush1.msra.mxu0 0.0
    %3278 = vmatprep.subr.mxu0 0.0
    %3279 = vmatpush1.msra.mxu0 0.0
    %3280 = vmatprep.subr.mxu0 0.0
    %3281 = vmatpush1.msra.mxu0 0.0
    %3282 = vmatprep.subr.mxu0 0.0
    %3283 = vmatpush1.msra.mxu0 0.0
    %3284 = vmatprep.subr.mxu0 0.0
    %3285 = vmatpush1.msra.mxu0 0.0
    %3286 = vmatprep.subr.mxu0 0.0
    %3287 = vmatpush1.msra.mxu0 0.0
    %3288 = vmatprep.subr.mxu0 0.0
    %3289 = vmatpush1.msra.mxu0 0.0
    %3290 = vmatprep.subr.mxu0 0.0
    %3291 = vmatpush1.msra.mxu0 0.0
    %3292 = vmatprep.subr.mxu0 0.0
    %3293 = vmatpush1.msra.mxu0 0.0
    %3294 = vmatprep.subr.mxu0 0.0
    %3295 = vmatpush1.msra.mxu0 0.0
    %3296 = vmatprep.subr.mxu0 0.0
    %3297 = vmatpush1.msra.mxu0 0.0
    %3298 = vmatprep.subr.mxu0 0.0
    %3299 = vmatpush1.msra.mxu0 0.0
    %3300 = vmatprep.subr.mxu0 0.0
    %3301 = vmatpush1.msra.mxu0 0.0
    %3302 = vmatprep.subr.mxu0 0.0
    %3303 = vmatpush1.msra.mxu0 0.0
    %3304 = vmatprep.subr.mxu0 0.0
    %3305 = vmatpush1.msra.mxu0 0.0
    %3306 = vmatprep.subr.mxu0 0.0
    %3307 = vmatpush1.msra.mxu0 0.0
    %3308 = vmatprep.subr.mxu0 0.0
    %3309 = vmatpush1.msra.mxu0 0.0
    %3310 = vmatprep.subr.mxu0 0.0
    %3311 = vmatpush1.msra.mxu0 0.0
    %3312 = vmatprep.subr.mxu0 0.0
    %3313 = vmatpush1.msra.mxu0 0.0
    %3314 = vmatprep.subr.mxu0 0.0
    %3315 = vmatpush1.msra.mxu0 0.0
    %3316 = vmatprep.mubr.f32.mxu0 0.0
    %3317 = vmatmul.mubr.f32.gmra.mrb[0].mxu0 %v3247
    %v3318 = vpop.f32.mrb[0].mxu0
    %v3319 = vadd.f32 0.0, %v3318
    %v3320 = vpop.f32.mrb[0].mxu0
    %3321 = vmatprep.mubr.f32.mxu0 0.0
    %3322 = vmatmul.mubr.f32.gmra.mrb[0].mxu0 %v3250
    %v3323 = vpop.f32.mrb[0].mxu0
    %v3324 = vadd.f32 0.0, %v3323
    %v3325 = vpop.f32.mrb[0].mxu0
    %3326 = vdwg.mxu0
    %3327 = vrot.lane.b32.xlu0 %v2627, 64
    %v3328 = vpop.permute.xlu0 %3327
    %3329 = vrot.lane.b32.xlu0 %v2629, 64
    %v3330 = vpop.permute.xlu0 %3329
    %v3334 = vsel %vm538, %v3064, 0
    %v3337 = vsel %vm538, %v3065, 0
    %3339 = vmatprep.subr.mxu0 0.0
    %3340 = vmatpush1.msra.mxu0 %v3328
    %3341 = vmatprep.subr.mxu0 0.0
    %3342 = vmatpush1.msra.mxu0 %v3330
    %3343 = vmatprep.subr.mxu0 0.0
    %3344 = vmatpush1.msra.mxu0 0.0
    %3345 = vmatprep.subr.mxu0 0.0
    %3346 = vmatpush1.msra.mxu0 0.0
    %3347 = vmatprep.subr.mxu0 0.0
    %3348 = vmatpush1.msra.mxu0 0.0
    %3349 = vmatprep.subr.mxu0 0.0
    %3350 = vmatpush1.msra.mxu0 0.0
    %3351 = vmatprep.subr.mxu0 0.0
    %3352 = vmatpush1.msra.mxu0 0.0
    %3353 = vmatprep.subr.mxu0 0.0
    %3354 = vmatpush1.msra.mxu0 0.0
    %3355 = vmatprep.subr.mxu0 0.0
    %3356 = vmatpush1.msra.mxu0 0.0
    %3357 = vmatprep.subr.mxu0 0.0
    %3358 = vmatpush1.msra.mxu0 0.0
    %3359 = vmatprep.subr.mxu0 0.0
    %3360 = vmatpush1.msra.mxu0 0.0
    %3361 = vmatprep.subr.mxu0 0.0
    %3362 = vmatpush1.msra.mxu0 0.0
    %3363 = vmatprep.subr.mxu0 0.0
    %3364 = vmatpush1.msra.mxu0 0.0
    %3365 = vmatprep.subr.mxu0 0.0
    %3366 = vmatpush1.msra.mxu0 0.0
    %3367 = vmatprep.subr.mxu0 0.0
    %3368 = vmatpush1.msra.mxu0 0.0
    %3369 = vmatprep.subr.mxu0 0.0
    %3370 = vmatpush1.msra.mxu0 0.0
    %3371 = vmatprep.subr.mxu0 0.0
    %3372 = vmatpush1.msra.mxu0 0.0
    %3373 = vmatprep.subr.mxu0 0.0
    %3374 = vmatpush1.msra.mxu0 0.0
    %3375 = vmatprep.subr.mxu0 0.0
    %3376 = vmatpush1.msra.mxu0 0.0
    %3377 = vmatprep.subr.mxu0 0.0
    %3378 = vmatpush1.msra.mxu0 0.0
    %3379 = vmatprep.subr.mxu0 0.0
    %3380 = vmatpush1.msra.mxu0 0.0
    %3381 = vmatprep.subr.mxu0 0.0
    %3382 = vmatpush1.msra.mxu0 0.0
    %3383 = vmatprep.subr.mxu0 0.0
    %3384 = vmatpush1.msra.mxu0 0.0
    %3385 = vmatprep.subr.mxu0 0.0
    %3386 = vmatpush1.msra.mxu0 0.0
    %3387 = vmatprep.subr.mxu0 0.0
    %3388 = vmatpush1.msra.mxu0 0.0
    %3389 = vmatprep.subr.mxu0 0.0
    %3390 = vmatpush1.msra.mxu0 0.0
    %3391 = vmatprep.subr.mxu0 0.0
    %3392 = vmatpush1.msra.mxu0 0.0
    %3393 = vmatprep.subr.mxu0 0.0
    %3394 = vmatpush1.msra.mxu0 0.0
    %3395 = vmatprep.subr.mxu0 0.0
    %3396 = vmatpush1.msra.mxu0 0.0
    %3397 = vmatprep.subr.mxu0 0.0
    %3398 = vmatpush1.msra.mxu0 0.0
    %3399 = vmatprep.subr.mxu0 0.0
    %3400 = vmatpush1.msra.mxu0 0.0
    %3401 = vmatprep.subr.mxu0 0.0
    %3402 = vmatpush1.msra.mxu0 0.0
    %3403 = vmatprep.mubr.f32.mxu0 0.0
    %3404 = vmatmul.mubr.f32.gmra.mrb[0].mxu0 %v3334
    %v3405 = vpop.f32.mrb[0].mxu0
    %v3406 = vadd.f32 0.0, %v3405
    %v3407 = vpop.f32.mrb[0].mxu0
    %3408 = vmatprep.mubr.f32.mxu0 0.0
    %3409 = vmatmul.mubr.f32.gmra.mrb[0].mxu0 %v3337
    %v3410 = vpop.f32.mrb[0].mxu0
    %v3411 = vadd.f32 0.0, %v3410
    %v3412 = vpop.f32.mrb[0].mxu0
    %3413 = vdwg.mxu0
    %3416 = vrot.lane.b32.xlu0 %v3232, 8
    %v3417 = vpop.permute.xlu0 %3416
    %3418 = vrot.lane.b32.xlu0 %v3237, 8
    %v3419 = vpop.permute.xlu0 %3418
    %3424 = vrot.lane.b32.xlu0 %v3319, 16
    %v3425 = vpop.permute.xlu0 %3424
    %3426 = vrot.lane.b32.xlu0 %v3324, 16
    %v3427 = vpop.permute.xlu0 %3426
    %3432 = vrot.lane.b32.xlu0 %v3406, 24
    %v3433 = vpop.permute.xlu0 %3432
    %3434 = vrot.lane.b32.xlu0 %v3411, 24
    %v3435 = vpop.permute.xlu0 %3434
    %v3438 = vsel %vm193, %v3145, %v3417
    %v3439 = vsel %vm193, %v3150, %v3419
    %v3440 = vsel %vm538, %v3438, %v3425
    %v3441 = vsel %vm538, %v3439, %v3427
    %v3442 = vsel %vm1003, %v3440, %v3433
    %v3443 = vsel %vm1003, %v3441, %v3435
    %v3445 = vsel %vm93, %v3442, 0
    %v3448 = vsel %vm93, %v3443, 0
    %3450 = vmatprep.subr.mxu0 0.0
    %3451 = vmatpush1.msra.mxu0 %v18
    %3452 = vmatprep.subr.mxu0 0.0
    %3453 = vmatpush1.msra.mxu0 %v19
    %3454 = vmatprep.subr.mxu0 0.0
    %3455 = vmatpush1.msra.mxu0 %v20
    %3456 = vmatprep.subr.mxu0 0.0
    %3457 = vmatpush1.msra.mxu0 %v21
    %3458 = vmatprep.subr.mxu0 0.0
    %3459 = vmatpush1.msra.mxu0 0.0
    %3460 = vmatprep.subr.mxu0 0.0
    %3461 = vmatpush1.msra.mxu0 0.0
    %3462 = vmatprep.subr.mxu0 0.0
    %3463 = vmatpush1.msra.mxu0 0.0
    %3464 = vmatprep.subr.mxu0 0.0
    %3465 = vmatpush1.msra.mxu0 0.0
    %3466 = vmatprep.subr.mxu0 0.0
    %3467 = vmatpush1.msra.mxu0 0.0
    %3468 = vmatprep.subr.mxu0 0.0
    %3469 = vmatpush1.msra.mxu0 0.0
    %3470 = vmatprep.subr.mxu0 0.0
    %3471 = vmatpush1.msra.mxu0 0.0
    %3472 = vmatprep.subr.mxu0 0.0
    %3473 = vmatpush1.msra.mxu0 0.0
    %3474 = vmatprep.subr.mxu0 0.0
    %3475 = vmatpush1.msra.mxu0 0.0
    %3476 = vmatprep.subr.mxu0 0.0
    %3477 = vmatpush1.msra.mxu0 0.0
    %3478 = vmatprep.subr.mxu0 0.0
    %3479 = vmatpush1.msra.mxu0 0.0
    %3480 = vmatprep.subr.mxu0 0.0
    %3481 = vmatpush1.msra.mxu0 0.0
    %3482 = vmatprep.subr.mxu0 0.0
    %3483 = vmatpush1.msra.mxu0 0.0
    %3484 = vmatprep.subr.mxu0 0.0
    %3485 = vmatpush1.msra.mxu0 0.0
    %3486 = vmatprep.subr.mxu0 0.0
    %3487 = vmatpush1.msra.mxu0 0.0
    %3488 = vmatprep.subr.mxu0 0.0
    %3489 = vmatpush1.msra.mxu0 0.0
    %3490 = vmatprep.subr.mxu0 0.0
    %3491 = vmatpush1.msra.mxu0 0.0
    %3492 = vmatprep.subr.mxu0 0.0
    %3493 = vmatpush1.msra.mxu0 0.0
    %3494 = vmatprep.subr.mxu0 0.0
    %3495 = vmatpush1.msra.mxu0 0.0
    %3496 = vmatprep.subr.mxu0 0.0
    %3497 = vmatpush1.msra.mxu0 0.0
    %3498 = vmatprep.subr.mxu0 0.0
    %3499 = vmatpush1.msra.mxu0 0.0
    %3500 = vmatprep.subr.mxu0 0.0
    %3501 = vmatpush1.msra.mxu0 0.0
    %3502 = vmatprep.subr.mxu0 0.0
    %3503 = vmatpush1.msra.mxu0 0.0
    %3504 = vmatprep.subr.mxu0 0.0
    %3505 = vmatpush1.msra.mxu0 0.0
    %3506 = vmatprep.subr.mxu0 0.0
    %3507 = vmatpush1.msra.mxu0 0.0
    %3508 = vmatprep.subr.mxu0 0.0
    %3509 = vmatpush1.msra.mxu0 0.0
    %3510 = vmatprep.subr.mxu0 0.0
    %3511 = vmatpush1.msra.mxu0 0.0
    %3512 = vmatprep.subr.mxu0 0.0
    %3513 = vmatpush1.msra.mxu0 0.0
    %3514 = vmatprep.mubr.f32.mxu0 0.0
    %3515 = vmatmul.mubr.f32.gmra.mrb[0].mxu0 %v3445
    %v3516 = vpop.f32.mrb[0].mxu0
    %v3517 = vadd.f32 %v50, %v3516
    %v3518 = vpop.f32.mrb[0].mxu0
    %3519 = vmatprep.mubr.f32.mxu0 0.0
    %3520 = vmatmul.mubr.f32.gmra.mrb[0].mxu0 %v3448
    %v3521 = vpop.f32.mrb[0].mxu0
    %v3522 = vadd.f32 %v50, %v3521
    %v3523 = vpop.f32.mrb[0].mxu0
    %3524 = vdwg.mxu0
    %v3525 = vadd.f32 %v2533, %v3517
    %v3526 = vadd.f32 %v2534, %v3522
    %v3527 = vsel %vm93, %v3525, 0.0
    %3528 = vadd.xlane.f32.xlu0 %v3527
    %v3529 = vpop.xlane.xlu0 %3528
    %v3530 = vsel %vm93, %v3526, 0.0
    %3531 = vadd.xlane.f32.xlu0 %v3530
    %v3532 = vpop.xlane.xlu0 %3531
    %v3533 = vmul.f32 %v3529, %v1095
    %v3534 = vmul.f32 %v3532, %v1095
    %v3535 = vsub.f32 %v3525, %v3533
    %v3536 = vsub.f32 %v3526, %v3534
    %v3537 = vmul.f32 %v3535, %v3535
    %v3538 = vmul.f32 %v3536, %v3536
    %v3539 = vsel %vm93, %v3537, 0.0
    %3540 = vadd.xlane.f32.xlu0 %v3539
    %v3541 = vpop.xlane.xlu0 %3540
    %v3542 = vsel %vm93, %v3538, 0.0
    %3543 = vadd.xlane.f32.xlu0 %v3542
    %v3544 = vpop.xlane.xlu0 %3543
    %v3545 = vmul.f32 %v3541, %v1095
    %v3546 = vmul.f32 %v3544, %v1095
    %v3547 = vadd.f32 %v3545, 1e-05
    %v3548 = vadd.f32 %v3546, 1e-05
    %v3549 = vrsqrt.pop %v3547
    %v3550 = vrsqrt.pop %v3548
    %v3551 = vmul.f32 %v3535, %v3549
    %v3552 = vmul.f32 %v3536, %v3550
    %v3553 = vmul.f32 %v3551, %v62
    %v3554 = vmul.f32 %v3552, %v62
    %v3555 = vadd.f32 %v3553, %v66
    %v3556 = vadd.f32 %v3554, %v66
    %v3558 = vsel %vm93, %v3555, 0
    %v3561 = vsel %vm93, %v3556, 0
    %3563 = vmatprep.subr.mxu0 0.0
    %3564 = vmatpush1.msra.mxu0 %v22
    %3565 = vmatprep.subr.mxu0 0.0
    %3566 = vmatpush1.msra.mxu0 %v23
    %3567 = vmatprep.subr.mxu0 0.0
    %3568 = vmatpush1.msra.mxu0 %v24
    %3569 = vmatprep.subr.mxu0 0.0
    %3570 = vmatpush1.msra.mxu0 %v25
    %3571 = vmatprep.subr.mxu0 0.0
    %3572 = vmatpush1.msra.mxu0 0.0
    %3573 = vmatprep.subr.mxu0 0.0
    %3574 = vmatpush1.msra.mxu0 0.0
    %3575 = vmatprep.subr.mxu0 0.0
    %3576 = vmatpush1.msra.mxu0 0.0
    %3577 = vmatprep.subr.mxu0 0.0
    %3578 = vmatpush1.msra.mxu0 0.0
    %3579 = vmatprep.subr.mxu0 0.0
    %3580 = vmatpush1.msra.mxu0 0.0
    %3581 = vmatprep.subr.mxu0 0.0
    %3582 = vmatpush1.msra.mxu0 0.0
    %3583 = vmatprep.subr.mxu0 0.0
    %3584 = vmatpush1.msra.mxu0 0.0
    %3585 = vmatprep.subr.mxu0 0.0
    %3586 = vmatpush1.msra.mxu0 0.0
    %3587 = vmatprep.subr.mxu0 0.0
    %3588 = vmatpush1.msra.mxu0 0.0
    %3589 = vmatprep.subr.mxu0 0.0
    %3590 = vmatpush1.msra.mxu0 0.0
    %3591 = vmatprep.subr.mxu0 0.0
    %3592 = vmatpush1.msra.mxu0 0.0
    %3593 = vmatprep.subr.mxu0 0.0
    %3594 = vmatpush1.msra.mxu0 0.0
    %3595 = vmatprep.subr.mxu0 0.0
    %3596 = vmatpush1.msra.mxu0 0.0
    %3597 = vmatprep.subr.mxu0 0.0
    %3598 = vmatpush1.msra.mxu0 0.0
    %3599 = vmatprep.subr.mxu0 0.0
    %3600 = vmatpush1.msra.mxu0 0.0
    %3601 = vmatprep.subr.mxu0 0.0
    %3602 = vmatpush1.msra.mxu0 0.0
    %3603 = vmatprep.subr.mxu0 0.0
    %3604 = vmatpush1.msra.mxu0 0.0
    %3605 = vmatprep.subr.mxu0 0.0
    %3606 = vmatpush1.msra.mxu0 0.0
    %3607 = vmatprep.subr.mxu0 0.0
    %3608 = vmatpush1.msra.mxu0 0.0
    %3609 = vmatprep.subr.mxu0 0.0
    %3610 = vmatpush1.msra.mxu0 0.0
    %3611 = vmatprep.subr.mxu0 0.0
    %3612 = vmatpush1.msra.mxu0 0.0
    %3613 = vmatprep.subr.mxu0 0.0
    %3614 = vmatpush1.msra.mxu0 0.0
    %3615 = vmatprep.subr.mxu0 0.0
    %3616 = vmatpush1.msra.mxu0 0.0
    %3617 = vmatprep.subr.mxu0 0.0
    %3618 = vmatpush1.msra.mxu0 0.0
    %3619 = vmatprep.subr.mxu0 0.0
    %3620 = vmatpush1.msra.mxu0 0.0
    %3621 = vmatprep.subr.mxu0 0.0
    %3622 = vmatpush1.msra.mxu0 0.0
    %3623 = vmatprep.subr.mxu0 0.0
    %3624 = vmatpush1.msra.mxu0 0.0
    %3625 = vmatprep.subr.mxu0 0.0
    %3626 = vmatpush1.msra.mxu0 0.0
    %3627 = vmatprep.mubr.f32.mxu0 0.0
    %3628 = vmatmul.mubr.f32.gmra.mrb[0].mxu0 %v3558
    %v3629 = vpop.f32.mrb[0].mxu0
    %v3630 = vadd.f32 %v54, %v3629
    %v3631 = vpop.f32.mrb[0].mxu0
    %3632 = vmatprep.mubr.f32.mxu0 0.0
    %3633 = vmatmul.mubr.f32.gmra.mrb[0].mxu0 %v3561
    %v3634 = vpop.f32.mrb[0].mxu0
    %v3635 = vadd.f32 %v54, %v3634
    %v3636 = vpop.f32.mrb[0].mxu0
    %3637 = vdwg.mxu0
    %v3638 = vmax.f32 %v3630, 0.0
    %v3639 = vmax.f32 %v3635, 0.0
    %v3641 = vsel %vm1203, %v3638, 0
    %v3644 = vsel %vm1203, %v3639, 0
    %3646 = vmatprep.subr.mxu0 0.0
    %3647 = vmatpush1.msra.mxu0 %v26
    %3648 = vmatprep.subr.mxu0 0.0
    %3649 = vmatpush1.msra.mxu0 %v27
    %3650 = vmatprep.subr.mxu0 0.0
    %3651 = vmatpush1.msra.mxu0 %v28
    %3652 = vmatprep.subr.mxu0 0.0
    %3653 = vmatpush1.msra.mxu0 %v29
    %3654 = vmatprep.subr.mxu0 0.0
    %3655 = vmatpush1.msra.mxu0 %v30
    %3656 = vmatprep.subr.mxu0 0.0
    %3657 = vmatpush1.msra.mxu0 %v31
    %3658 = vmatprep.subr.mxu0 0.0
    %3659 = vmatpush1.msra.mxu0 %v32
    %3660 = vmatprep.subr.mxu0 0.0
    %3661 = vmatpush1.msra.mxu0 %v33
    %3662 = vmatprep.subr.mxu0 0.0
    %3663 = vmatpush1.msra.mxu0 0.0
    %3664 = vmatprep.subr.mxu0 0.0
    %3665 = vmatpush1.msra.mxu0 0.0
    %3666 = vmatprep.subr.mxu0 0.0
    %3667 = vmatpush1.msra.mxu0 0.0
    %3668 = vmatprep.subr.mxu0 0.0
    %3669 = vmatpush1.msra.mxu0 0.0
    %3670 = vmatprep.subr.mxu0 0.0
    %3671 = vmatpush1.msra.mxu0 0.0
    %3672 = vmatprep.subr.mxu0 0.0
    %3673 = vmatpush1.msra.mxu0 0.0
    %3674 = vmatprep.subr.mxu0 0.0
    %3675 = vmatpush1.msra.mxu0 0.0
    %3676 = vmatprep.subr.mxu0 0.0
    %3677 = vmatpush1.msra.mxu0 0.0
    %3678 = vmatprep.subr.mxu0 0.0
    %3679 = vmatpush1.msra.mxu0 0.0
    %3680 = vmatprep.subr.mxu0 0.0
    %3681 = vmatpush1.msra.mxu0 0.0
    %3682 = vmatprep.subr.mxu0 0.0
    %3683 = vmatpush1.msra.mxu0 0.0
    %3684 = vmatprep.subr.mxu0 0.0
    %3685 = vmatpush1.msra.mxu0 0.0
    %3686 = vmatprep.subr.mxu0 0.0
    %3687 = vmatpush1.msra.mxu0 0.0
    %3688 = vmatprep.subr.mxu0 0.0
    %3689 = vmatpush1.msra.mxu0 0.0
    %3690 = vmatprep.subr.mxu0 0.0
    %3691 = vmatpush1.msra.mxu0 0.0
    %3692 = vmatprep.subr.mxu0 0.0
    %3693 = vmatpush1.msra.mxu0 0.0
    %3694 = vmatprep.subr.mxu0 0.0
    %3695 = vmatpush1.msra.mxu0 0.0
    %3696 = vmatprep.subr.mxu0 0.0
    %3697 = vmatpush1.msra.mxu0 0.0
    %3698 = vmatprep.subr.mxu0 0.0
    %3699 = vmatpush1.msra.mxu0 0.0
    %3700 = vmatprep.subr.mxu0 0.0
    %3701 = vmatpush1.msra.mxu0 0.0
    %3702 = vmatprep.subr.mxu0 0.0
    %3703 = vmatpush1.msra.mxu0 0.0
    %3704 = vmatprep.subr.mxu0 0.0
    %3705 = vmatpush1.msra.mxu0 0.0
    %3706 = vmatprep.subr.mxu0 0.0
    %3707 = vmatpush1.msra.mxu0 0.0
    %3708 = vmatprep.subr.mxu0 0.0
    %3709 = vmatpush1.msra.mxu0 0.0
    %3710 = vmatprep.mubr.f32.mxu0 0.0
    %3711 = vmatmul.mubr.f32.gmra.mrb[0].mxu0 %v3641
    %v3712 = vpop.f32.mrb[0].mxu0
    %v3713 = vadd.f32 %v58, %v3712
    %v3714 = vpop.f32.mrb[0].mxu0
    %3715 = vmatprep.mubr.f32.mxu0 0.0
    %3716 = vmatmul.mubr.f32.gmra.mrb[0].mxu0 %v3644
    %v3717 = vpop.f32.mrb[0].mxu0
    %v3718 = vadd.f32 %v58, %v3717
    %v3719 = vpop.f32.mrb[0].mxu0
    %3720 = vdwg.mxu0
    %v3721 = vadd.f32 %v3555, %v3713
    %v3722 = vadd.f32 %v3556, %v3718
    %v3723 = vsel %vm93, %v3721, 0.0
    %3724 = vadd.xlane.f32.xlu0 %v3723
    %v3725 = vpop.xlane.xlu0 %3724
    %v3726 = vsel %vm93, %v3722, 0.0
    %3727 = vadd.xlane.f32.xlu0 %v3726
    %v3728 = vpop.xlane.xlu0 %3727
    %v3729 = vmul.f32 %v3725, %v1095
    %v3730 = vmul.f32 %v3728, %v1095
    %v3731 = vsub.f32 %v3721, %v3729
    %v3732 = vsub.f32 %v3722, %v3730
    %v3733 = vmul.f32 %v3731, %v3731
    %v3734 = vmul.f32 %v3732, %v3732
    %v3735 = vsel %vm93, %v3733, 0.0
    %3736 = vadd.xlane.f32.xlu0 %v3735
    %v3737 = vpop.xlane.xlu0 %3736
    %v3738 = vsel %vm93, %v3734, 0.0
    %3739 = vadd.xlane.f32.xlu0 %v3738
    %v3740 = vpop.xlane.xlu0 %3739
    %v3741 = vmul.f32 %v3737, %v1095
    %v3742 = vmul.f32 %v3740, %v1095
    %v3743 = vadd.f32 %v3741, 1e-05
    %v3744 = vadd.f32 %v3742, 1e-05
    %v3745 = vrsqrt.pop %v3743
    %v3746 = vrsqrt.pop %v3744
    %v3747 = vmul.f32 %v3731, %v3745
    %v3748 = vmul.f32 %v3732, %v3746
    %v3749 = vmul.f32 %v3747, %v70
    %v3750 = vmul.f32 %v3748, %v70
    %v3751 = vadd.f32 %v3749, %v74
    %v3752 = vadd.f32 %v3750, %v74
    %3753 = vst.msk [vmem:[#allocation2] sm:$0xff] %vm93, %v3751
    %3754 = vst.msk [vmem:[#allocation2 + $0x8] sm:$0xff] %vm93, %v3752
    // Predicated region
    $region10: #{transformer_encoder.1} parent=1 // pred_check
      _
    $region11: #{transformer_encoder.1} parent=1 // pred_check_branch
      %3756 = sbr.rel (0) target = $region13
    $region12: #{transformer_encoder.1} parent=1 // pred_region
      %s3758 = ssub.s32 256, 256
      %3759 = vsyncadd [#allocation3], %s3758
      %s3760 = sshll.u32 [#allocation2], 4
      %s3761 = int_to_ptr.vmem [resolvable:$true] %s3760
      %3766 = dma.vmem_to_hbm [thread:$0]  %s3761, 256, %s2, [#allocation3], 128, 128, 8
    $region13: #{transformer_encoder.1} parent=1 // pred_fallthru
      _
    // Predicated region
    $region14: #{transformer_encoder.1} parent=1 // pred_check
      _
    $region15: #{transformer_encoder.1} parent=1 // pred_check_branch
      %3768 = sbr.rel (0) target = $region17
    $region16: #{transformer_encoder.1} parent=1 // pred_region
      %3769 = dma.done [#allocation3], 256
    $region17: #{transformer_encoder.1} parent=1 // pred_fallthru
      _
    %3770 = vsyncpa [#allocation3], 1

</llo_original>
